<compile_context>
chip_gen: v7x
topology: tpu7x:2x2x1
jax: 0.10.0
libtpu: 0.0.40
codegen_flags: <defaults>
</compile_context>

<pallas_src>
import jax
import jax.numpy as jnp
from jax.experimental import pallas as pl
from jax.experimental.pallas import tpu as pltpu


def linear_kernel(x_ref, wt_ref, b_ref, o_ref):
    # Single-shot GEMM tile: full (M, K) bf16 x against a (K, tn) bf16 slab of
    # W^T on the MXU, f32 accumulation, f32 bias add, then cast to output dtype.
    acc = jnp.dot(x_ref[...], wt_ref[...], preferred_element_type=jnp.float32)
    o_ref[...] = (acc + b_ref[...]).astype(o_ref.dtype)


def pallas_linear(x2d, w_t, bias, *, tn=384):
    M, K = x2d.shape
    K2, N = w_t.shape
    assert K == K2, f"K mismatch: {K} vs {K2}"
    # Explicit divisibility checks (no silent row/col dropping).
    assert N % tn == 0, f"N={N} must be divisible by tn={tn}"
    assert M % 8 == 0 and K % 128 == 0 and tn % 128 == 0, "tiles must satisfy (8,128)"

    b2d = bias.astype(jnp.float32).reshape(1, N)
    out_dtype = jnp.float32
    grid = (N // tn,)  # 2 balanced steps: 1/1 split on v7x's 2 TCs, low overhead on 1-TC parts

    cost = pl.CostEstimate(
        flops=2 * M * K * N,
        transcendentals=0,
        bytes_accessed=(
            M * K * x2d.dtype.itemsize          # x (bf16)
            + K * N * w_t.dtype.itemsize        # W^T (bf16)
            + N * b2d.dtype.itemsize            # bias (f32)
            + M * N * jnp.dtype(out_dtype).itemsize  # output (f32)
        ),
    )

    return pl.pallas_call(
        linear_kernel,
        out_shape=jax.ShapeDtypeStruct((M, N), out_dtype),
        grid_spec=pltpu.PrefetchScalarGridSpec(
            num_scalar_prefetch=0,
            grid=grid,
            in_specs=[
                # x: full (M, K) block, index_map independent of j -> resident,
                # DMA'd from HBM only once.
                pl.BlockSpec((M, K), lambda j: (0, 0)),
                # W^T: (K, tn) N-slab per step.
                pl.BlockSpec((K, tn), lambda j: (0, j)),
                # bias: (1, tn) slab per step (broadcast over rows in-kernel).
                pl.BlockSpec((1, tn), lambda j: (0, j)),
            ],
            out_specs=pl.BlockSpec((M, tn), lambda j: (0, j)),
        ),
        compiler_params=pltpu.CompilerParams(
            dimension_semantics=("parallel",),
        ),
        cost_estimate=cost,
    )(x2d, w_t, b2d)


def module_forward(x, w_t, bias):
    """x: (B, S, H_in) f32; w_t: (H_in, H_out) = weight.T, stored bf16; bias: (H_out,) f32."""
    B, S, H_in = x.shape
    H_out = w_t.shape[1]
    # Feed bf16 activations to the MXU (in a real model the surrounding layers
    # would already produce bf16; accumulation inside the kernel stays f32).
    x2d = x.reshape(B * S, H_in).astype(jnp.bfloat16)
    y2d = pallas_linear(x2d, w_t, bias)
    return y2d.reshape(B, S, H_out)


if __name__ == "__main__":
    key = jax.random.PRNGKey(0)
    kx, kw, kb = jax.random.split(key, 3)

    B, S, H = 1, 384, 768  # shapes implied by the module (qa+roberta-base linear37)
    x = jax.random.normal(kx, (B, S, H), dtype=jnp.float32)

    # Deterministic parameter init mimicking nn.Linear default: U(-1/sqrt(H), 1/sqrt(H))
    bound = 1.0 / jnp.sqrt(jnp.float32(H))
    weight = jax.random.uniform(kw, (H, H), dtype=jnp.float32, minval=-bound, maxval=bound)
    bias = jax.random.uniform(kb, (H,), dtype=jnp.float32, minval=-bound, maxval=bound)

    # Pre-transpose AND pre-cast to bf16 once at setup time (not per forward call).
    w_t = jnp.asarray(weight.T, dtype=jnp.bfloat16)
    w_t = jax.block_until_ready(w_t)

    y = module_forward(x, w_t, bias)
    y = jax.block_until_ready(y)

    # correctness check vs plain-JAX f32 reference (tolerance loosened for bf16 inputs, K=768)
    y_ref = x @ weight.T + bias
    assert y.shape == (B, S, H)
    assert y.dtype == jnp.float32
    assert jnp.allclose(y, y_ref, atol=2e-2, rtol=2e-2)

    print("KERNEL_OK")
</pallas_src>

<mosaic_0001>
module attributes {stable_mosaic.version = 11 : i64} {
  func.func @linear_kernel(%arg0: i32, %arg1: memref<384x768xbf16, #tpu.memory_space<vmem>>, %arg2: memref<768x384xbf16, #tpu.memory_space<vmem>>, %arg3: memref<1x384xf32, #tpu.memory_space<vmem>>, %arg4: memref<384x384xf32, #tpu.memory_space<vmem>>) attributes {dimension_semantics = [#tpu.dimension_semantics<parallel>], iteration_bounds = array<i64: 2>, scalar_prefetch = 0 : i64, scratch_operands = 0 : i64, tpu.core_type = #tpu.core_type<tc>, window_params = [{pipeline_mode = #tpu.pipeline_mode<synchronous>, transform_indices = @transform_0, window_bounds = array<i64: 384, 768>}, {transform_indices = @transform_1, window_bounds = array<i64: 768, 384>}, {transform_indices = @transform_2, window_bounds = array<i64: 1, 384>}, {transform_indices = @transform_3, window_bounds = array<i64: 384, 384>}]} {
    %c0 = arith.constant 0 : index
    %c0_0 = arith.constant 0 : index
    %0 = vector.load %arg1[%c0, %c0_0] : memref<384x768xbf16, #tpu.memory_space<vmem>>, vector<384x768xbf16>
    %c0_1 = arith.constant 0 : index
    %c0_2 = arith.constant 0 : index
    %1 = vector.load %arg2[%c0_1, %c0_2] : memref<768x384xbf16, #tpu.memory_space<vmem>>, vector<768x384xbf16>
    %cst = arith.constant dense<0.000000e+00> : vector<384x384xf32>
    %2 = tpu.matmul %0, %1, %cst {dimension_numbers = #tpu.dot_dimension_numbers<[1], [0], [0], [1], [0, 0, 1, 1], [], []>} : vector<384x768xbf16>, vector<768x384xbf16>, vector<384x384xf32> -> vector<384x384xf32>
    %c0_3 = arith.constant 0 : index
    %c0_4 = arith.constant 0 : index
    %3 = vector.load %arg3[%c0_3, %c0_4] : memref<1x384xf32, #tpu.memory_space<vmem>>, vector<1x384xf32>
    %4 = vector.broadcast %3 : vector<1x384xf32> to vector<384x384xf32>
    %5 = arith.addf %2, %4 : vector<384x384xf32>
    %c0_5 = arith.constant 0 : index
    %c0_6 = arith.constant 0 : index
    %6 = vector.load %arg4[%c0_5, %c0_6] : memref<384x384xf32, #tpu.memory_space<vmem>>, vector<384x384xf32>
    tpu.vector_store %arg4[%c0_5, %c0_6], %5 {strides = array<i32>} : memref<384x384xf32, #tpu.memory_space<vmem>>, vector<384x384xf32>,
    return
  }
  func.func @transform_0(%arg0: i32) -> (i32, i32) {
    %c0_i32 = arith.constant 0 : i32
    %c0_i32_0 = arith.constant 0 : i32
    %c0_i32_1 = arith.constant 0 : i32
    return %c0_i32, %c0_i32_0 : i32, i32
  }
  func.func @transform_1(%arg0: i32) -> (i32, i32) {
    %c0_i32 = arith.constant 0 : i32
    %c0_i32_0 = arith.constant 0 : i32
    return %c0_i32, %arg0 : i32, i32
  }
  func.func @transform_2(%arg0: i32) -> (i32, i32) {
    %c0_i32 = arith.constant 0 : i32
    %c0_i32_0 = arith.constant 0 : i32
    return %c0_i32, %arg0 : i32, i32
  }
  func.func @transform_3(%arg0: i32) -> (i32, i32) {
    %c0_i32 = arith.constant 0 : i32
    %c0_i32_0 = arith.constant 0 : i32
    return %c0_i32, %arg0 : i32, i32
  }
}

</mosaic_0001>

<llo_original>
// kernel: tpu_custom_call.1
$region0: #{tpu_custom_call.1}
  #allocation0 [shape = 'u32[]', space=smem, size = 0x4, offset = 0x4, fixed_abs, tag = 'smem constant byte address 0x4 - core index']
  #allocation1 [shape = 'u32[144,128]{1,0:T(1,128)}', space=vmem, size = 0x12000, scoped, tag = 'internal scratch']
  %s0 = inlined_call_operand.hbm [shape: bf16[384,768], index: 0, kind: input, shape index: {}]
  %s1 = inlined_call_operand.hbm [shape: bf16[768,768], index: 1, kind: input, shape index: {}]
  %s2 = inlined_call_operand.hbm [shape: f32[1,768], index: 2, kind: input, shape index: {}]
  %s3 = inlined_call_operand.hbm [shape: f32[384,768], index: 3, kind: output, shape index: {}]
  %s4 = sld [smem:[#allocation0]]
  $region57: #{tpu_custom_call.1} parent=0
    _
  %s6 = ssub.s32 1, %s4
  %s7 = scalar_select 0, %s6, %s4
  $region1: #{tpu_custom_call.1} parent=0
    #allocation2 [shape = 'u8[589824]{0}', space=vmem, size = 0x90000, scoped, tag = 'input window, operand 0, single buffered']
    #allocation3 [shape = 's32[2]{0}', space=sflag, size = 0x8, scoped, tag = 'scoped memory for tpu_custom_call.1']
    #allocation4 [shape = 's32[2]{0}', space=sflag, size = 0x8, scoped, tag = 'scoped memory for tpu_custom_call.1']
    #allocation5 [shape = 'u8[1179648]{0}', space=vmem, size = 0x120000, scoped, tag = 'input window, operand 1']
    #allocation6 [shape = 's32[2]{0}', space=sflag, size = 0x8, scoped, tag = 'scoped memory for tpu_custom_call.1']
    #allocation7 [shape = 'u8[3072]{0}', space=vmem, size = 0xc00, scoped, tag = 'input window, operand 2']
    #allocation8 [shape = 'u8[1179648]{0}', space=vmem, size = 0x120000, scoped, tag = 'output window, operand 0']
    %8 = vsyncpa [#allocation3], 0
    %9 = vsyncpa [#allocation6], 0
    %s10 = scalar_lea.sflag [#allocation6], 1
    %11 = vsyncpa %s10, 0
    %12 = vsyncpa [#allocation4], 0
    %s13 = scalar_lea.sflag [#allocation4], 1
    %14 = vsyncpa %s13, 0
    loop: start=0, step=1, limit=4
    $region2: #{tpu_custom_call.1} parent=1 // loop_pre_header
      _
    $region3: #{tpu_custom_call.1} parent=1 // loop_header
      %s16 = sphi 0, %s20
      %p17 = scmp.ge.s32.totalorder %s16, 4
      %s24 = sphi 0, %s24
      %s26 = sphi 0, %s24
      %s27 = sphi 0, %s26
      %s41 = sphi 0, %s27
      %s47 = sphi 0, %s49
      %s50 = sphi 0, %s47
      %s51 = sphi 0, %s50
      %s67 = sphi 0, %s51
      %s73 = sphi 0, %s75
      %s76 = sphi 0, %s73
      %s77 = sphi 0, %s76
      %s93 = sphi 0, %s77
      %s99 = sphi 0, %s101
      %s102 = sphi 0, %s99
      %s103 = sphi 0, %s102
      %s119 = sphi 0, %s103
    $region4: #{tpu_custom_call.1} parent=1 // loop_header_branch
      %19 = sbr.rel (%p17) target = $region8
    $region5: #{tpu_custom_call.1} parent=1 // loop_body
      %s21 = ssub.s32 %s16, 1
      %s22 = ssub.s32 %s16, 2
      %s23 = sadd.s32 %s16, 1
      %s25 = sadd.s32 %s24, 1
      %p28 = scmp.eq.s32.totalorder %s16, 1
      %p29 = scmp.ne.s32.totalorder %s24, %s26
      %p30 = scmp.eq.s32.totalorder %s16, 0
      %p31 = por %p29, %p30
      %p32 = scmp.ne.s32.totalorder %s24, %s26
      %p33 = scmp.eq.s32.totalorder %s21, 1
      %p34 = por %p32, %p33
      %p35 = scmp.ne.s32.totalorder %s26, %s27
      %p36 = scmp.eq.s32.totalorder %s21, 0
      %p37 = por %p35, %p36
      %p38 = scmp.ne.s32.totalorder %s26, %s27
      %p39 = scmp.eq.s32.totalorder %s22, 1
      %p40 = por %p38, %p39
      %p42 = scmp.ne.s32.totalorder %s27, %s41
      %p43 = scmp.eq.s32.totalorder %s22, 0
      %p44 = por %p42, %p43
      %s45 = ssub.s32 %s16, %s23
      %p46 = scmp.eq.s32.totalorder %s45, 0
      %s48 = sadd.s32 %s47, 1
      %s49 = scalar_select %p46, %s47, %s48
      %p52 = pneg %p46
      %p53 = scmp.eq.s32.totalorder %s16, 1
      %p54 = por %p52, %p53
      %p55 = scmp.ne.s32.totalorder %s47, %s50
      %p56 = scmp.eq.s32.totalorder %s16, 0
      %p57 = por %p55, %p56
      %p58 = scmp.ne.s32.totalorder %s47, %s50
      %p59 = scmp.eq.s32.totalorder %s21, 1
      %p60 = por %p58, %p59
      %p61 = scmp.ne.s32.totalorder %s50, %s51
      %p62 = scmp.eq.s32.totalorder %s21, 0
      %p63 = por %p61, %p62
      %p64 = scmp.ne.s32.totalorder %s50, %s51
      %p65 = scmp.eq.s32.totalorder %s22, 1
      %p66 = por %p64, %p65
      %p68 = scmp.ne.s32.totalorder %s51, %s67
      %p69 = scmp.eq.s32.totalorder %s22, 0
      %p70 = por %p68, %p69
      %s71 = ssub.s32 %s16, %s23
      %p72 = scmp.eq.s32.totalorder %s71, 0
      %s74 = sadd.s32 %s73, 1
      %s75 = scalar_select %p72, %s73, %s74
      %p78 = pneg %p72
      %p79 = scmp.eq.s32.totalorder %s16, 1
      %p80 = por %p78, %p79
      %p81 = scmp.ne.s32.totalorder %s73, %s76
      %p82 = scmp.eq.s32.totalorder %s16, 0
      %p83 = por %p81, %p82
      %p84 = scmp.ne.s32.totalorder %s73, %s76
      %p85 = scmp.eq.s32.totalorder %s21, 1
      %p86 = por %p84, %p85
      %p87 = scmp.ne.s32.totalorder %s76, %s77
      %p88 = scmp.eq.s32.totalorder %s21, 0
      %p89 = por %p87, %p88
      %p90 = scmp.ne.s32.totalorder %s76, %s77
      %p91 = scmp.eq.s32.totalorder %s22, 1
      %p92 = por %p90, %p91
      %p94 = scmp.ne.s32.totalorder %s77, %s93
      %p95 = scmp.eq.s32.totalorder %s22, 0
      %p96 = por %p94, %p95
      %s97 = ssub.s32 %s16, %s23
      %p98 = scmp.eq.s32.totalorder %s97, 0
      %s100 = sadd.s32 %s99, 1
      %s101 = scalar_select %p98, %s99, %s100
      %p104 = pneg %p98
      %p105 = scmp.eq.s32.totalorder %s16, 1
      %p106 = por %p104, %p105
      %p107 = scmp.ne.s32.totalorder %s99, %s102
      %p108 = scmp.eq.s32.totalorder %s16, 0
      %p109 = por %p107, %p108
      %p110 = scmp.ne.s32.totalorder %s99, %s102
      %p111 = scmp.eq.s32.totalorder %s21, 1
      %p112 = por %p110, %p111
      %p113 = scmp.ne.s32.totalorder %s102, %s103
      %p114 = scmp.eq.s32.totalorder %s21, 0
      %p115 = por %p113, %p114
      %p116 = scmp.ne.s32.totalorder %s102, %s103
      %p117 = scmp.eq.s32.totalorder %s22, 1
      %p118 = por %p116, %p117
      %p120 = scmp.ne.s32.totalorder %s103, %s119
      %p121 = scmp.eq.s32.totalorder %s22, 0
      %p122 = por %p120, %p121
      %p123 = scmp.le.s32.totalorder 1, %s16
      %p124 = scmp.lt.s32.totalorder %s16, 3
      %p125 = pnand %p123, %p124
      %p126 = pneg %p125
      // Predicated region
      $region9: #{tpu_custom_call.1} parent=5 // pred_check
        _
      $region10: #{tpu_custom_call.1} parent=5 // pred_check_branch
        %128 = sbr.rel (%p125) target = $region12
      $region11: #{tpu_custom_call.1} parent=5 // pred_region
        %s129 = ssub.s32 %s16, 1
        // Predicated region
        $region13: #{tpu_custom_call.1} parent=11 // pred_check
          %p130 = pneg %p37
        $region14: #{tpu_custom_call.1} parent=11 // pred_check_branch
          %132 = sbr.rel (%p130) target = $region16
        $region15: #{tpu_custom_call.1} parent=11 // pred_region
          %s134 = ssub.s32 18432, 18432
          %135 = vsyncadd [#allocation3], %s134
          %s136 = sshll.u32 [#allocation2], 4
          %s137 = int_to_ptr.vmem [resolvable:$true] %s136
          %142 = dma.hbm_to_vmem [thread:$0]  %s0, 18432, %s137, [#allocation3], 384, 384, 24
        $region16: #{tpu_custom_call.1} parent=11 // pred_fallthru
          _
      $region12: #{tpu_custom_call.1} parent=5 // pred_fallthru
        _
      %p143 = scmp.lt.s32.totalorder %s16, 2
      // Predicated region
      $region17: #{tpu_custom_call.1} parent=5 // pred_check
        %p144 = pneg %p143
      $region18: #{tpu_custom_call.1} parent=5 // pred_check_branch
        %146 = sbr.rel (%p144) target = $region20
      $region19: #{tpu_custom_call.1} parent=5 // pred_region
        // Predicated region
        $region21: #{tpu_custom_call.1} parent=19 // pred_check
          %p147 = pneg %p57
        $region22: #{tpu_custom_call.1} parent=19 // pred_check_branch
          %149 = sbr.rel (%p147) target = $region24
        $region23: #{tpu_custom_call.1} parent=19 // pred_region
          %s150 = sand.u32 %s16, 1
          %s151 = scalar_lea.sflag [#allocation6], %s150
          %s152 = sand.u32 %s47, 1
          %s153 = smul.addr %s152, 1152
          %s154 = scalar_lea.vmem [#allocation5], %s153
          %s155 = smul.u32 3, %s16
          %s157 = ssub.s32 18432, 18432
          %158 = vsyncadd %s151, %s157
          %s159 = smul.addr %s155, 64
          %s160 = scalar_lea.hbm %s1, %s159
          %s161 = sshll.u32 %s154, 4
          %s162 = int_to_ptr.vmem [resolvable:$true] %s161
          %167 = dma.hbm_to_vmem [thread:$0]  %s160, 18432, %s162, %s151, 384, 192, 12
        $region24: #{tpu_custom_call.1} parent=19 // pred_fallthru
          _
        // Predicated region
        $region25: #{tpu_custom_call.1} parent=19 // pred_check
          %p168 = pneg %p83
        $region26: #{tpu_custom_call.1} parent=19 // pred_check_branch
          %170 = sbr.rel (%p168) target = $region28
        $region27: #{tpu_custom_call.1} parent=19 // pred_region
          %s171 = sand.u32 %s16, 1
          %s172 = scalar_lea.sflag [#allocation6], %s171
          %s173 = sand.u32 %s73, 1
          %s174 = smul.addr %s173, 3
          %s175 = scalar_lea.vmem [#allocation7], %s174
          %s176 = smul.u32 3, %s16
          %s178 = ssub.s32 48, 48
          %179 = vsyncadd %s172, %s178
          %s180 = smul.addr %s176, 16
          %s181 = scalar_lea.hbm %s2, %s180
          %s183 = sshll.u32 %s175, 4
          %s184 = int_to_ptr.vmem [resolvable:$true] %s183
          %186 = dma.hbm_to_vmem [thread:$0]  %s181, 48, %s184, %s172
        $region28: #{tpu_custom_call.1} parent=19 // pred_fallthru
          _
      $region20: #{tpu_custom_call.1} parent=5 // pred_fallthru
        _
      %p187 = scmp.le.s32.totalorder 1, %s16
      %p188 = scmp.lt.s32.totalorder %s16, 3
      %p189 = pnand %p187, %p188
      %p190 = pneg %p189
      // Predicated region
      $region29: #{tpu_custom_call.1} parent=5 // pred_check
        _
      $region30: #{tpu_custom_call.1} parent=5 // pred_check_branch
        %192 = sbr.rel (%p189) target = $region32
      $region31: #{tpu_custom_call.1} parent=5 // pred_region
        %s193 = ssub.s32 %s16, 1
        // Predicated region
        $region33: #{tpu_custom_call.1} parent=31 // pred_check
          %p194 = pneg %p37
        $region34: #{tpu_custom_call.1} parent=31 // pred_check_branch
          %196 = sbr.rel (%p194) target = $region36
        $region35: #{tpu_custom_call.1} parent=31 // pred_region
          %197 = dma.done [#allocation3], 18432
        $region36: #{tpu_custom_call.1} parent=31 // pred_fallthru
          _
        %s198 = sand.u32 %s21, 1
        %s199 = scalar_lea.sflag [#allocation6], %s198
        %s200 = sand.u32 %s50, 1
        %s201 = smul.addr %s200, 1152
        %s202 = scalar_lea.vmem [#allocation5], %s201
        // Predicated region
        $region37: #{tpu_custom_call.1} parent=31 // pred_check
          %p203 = pneg %p63
        $region38: #{tpu_custom_call.1} parent=31 // pred_check_branch
          %205 = sbr.rel (%p203) target = $region40
        $region39: #{tpu_custom_call.1} parent=31 // pred_region
          %206 = dma.done %s199, 18432
        $region40: #{tpu_custom_call.1} parent=31 // pred_fallthru
          _
        %s207 = sand.u32 %s21, 1
        %s208 = scalar_lea.sflag [#allocation6], %s207
        %s209 = sand.u32 %s76, 1
        %s210 = smul.addr %s209, 3
        %s211 = scalar_lea.vmem [#allocation7], %s210
        // Predicated region
        $region41: #{tpu_custom_call.1} parent=31 // pred_check
          %p212 = pneg %p89
        $region42: #{tpu_custom_call.1} parent=31 // pred_check_branch
          %214 = sbr.rel (%p212) target = $region44
        $region43: #{tpu_custom_call.1} parent=31 // pred_region
          %215 = dma.done %s208, 48
        $region44: #{tpu_custom_call.1} parent=31 // pred_fallthru
          _
        %p216 = pneg %p37
        %p217 = pneg %p34
        %s218 = sand.u32 %s21, 1
        %s219 = scalar_lea.sflag [#allocation6], %s218
        %s220 = sand.u32 %s50, 1
        %s221 = smul.addr %s220, 1152
        %s222 = scalar_lea.vmem [#allocation5], %s221
        %p223 = pneg %p63
        %p224 = pneg %p60
        %s225 = sand.u32 %s21, 1
        %s226 = scalar_lea.sflag [#allocation6], %s225
        %s227 = sand.u32 %s76, 1
        %s228 = smul.addr %s227, 3
        %s229 = scalar_lea.vmem [#allocation7], %s228
        %p230 = pneg %p89
        %p231 = pneg %p86
        %p232 = pneg %p115
        %p233 = pneg %p112
        %s234 = sand.u32 %s102, 1
        %s235 = scalar_lea.sflag [#allocation4], %s234
        %s236 = sand.u32 %s102, 1
        %s237 = smul.addr %s236, 1152
        %s238 = scalar_lea.vmem [#allocation8], %s237
        %s239 = smul.u32 3, %s21
        %s240 = smul.u32 3, %s21
        %s241 = smul.u32 3, %s21
        %v243 = vld [vmem:[#allocation2] sm:$0xff]
        %v244 = vld [vmem:[#allocation2 + $0x8] sm:$0xff]
        %v245 = vld [vmem:[#allocation2 + $0x10] sm:$0xff]
        %v246 = vld [vmem:[#allocation2 + $0x18] sm:$0xff]
        %v247 = vld [vmem:[#allocation2 + $0x20] sm:$0xff]
        %v248 = vld [vmem:[#allocation2 + $0x28] sm:$0xff]
        %v249 = vld [vmem:[#allocation2 + $0x30] sm:$0xff]
        %v250 = vld [vmem:[#allocation2 + $0x38] sm:$0xff]
        %v251 = vld [vmem:[#allocation2 + $0x40] sm:$0xff]
        %v252 = vld [vmem:[#allocation2 + $0x48] sm:$0xff]
        %v253 = vld [vmem:[#allocation2 + $0x50] sm:$0xff]
        %v254 = vld [vmem:[#allocation2 + $0x58] sm:$0xff]
        %v255 = vld [vmem:[#allocation2 + $0x60] sm:$0xff]
        %v256 = vld [vmem:[#allocation2 + $0x68] sm:$0xff]
        %v257 = vld [vmem:[#allocation2 + $0x70] sm:$0xff]
        %v258 = vld [vmem:[#allocation2 + $0x78] sm:$0xff]
        %v259 = vld [vmem:[#allocation2 + $0x80] sm:$0xff]
        %v260 = vld [vmem:[#allocation2 + $0x88] sm:$0xff]
        %v261 = vld [vmem:[#allocation2 + $0x90] sm:$0xff]
        %v262 = vld [vmem:[#allocation2 + $0x98] sm:$0xff]
        %v263 = vld [vmem:[#allocation2 + $0xa0] sm:$0xff]
        %v264 = vld [vmem:[#allocation2 + $0xa8] sm:$0xff]
        %v265 = vld [vmem:[#allocation2 + $0xb0] sm:$0xff]
        %v266 = vld [vmem:[#allocation2 + $0xb8] sm:$0xff]
        %v267 = vld [vmem:[#allocation2 + $0xc0] sm:$0xff]
        %v268 = vld [vmem:[#allocation2 + $0xc8] sm:$0xff]
        %v269 = vld [vmem:[#allocation2 + $0xd0] sm:$0xff]
        %v270 = vld [vmem:[#allocation2 + $0xd8] sm:$0xff]
        %v271 = vld [vmem:[#allocation2 + $0xe0] sm:$0xff]
        %v272 = vld [vmem:[#allocation2 + $0xe8] sm:$0xff]
        %v273 = vld [vmem:[#allocation2 + $0xf0] sm:$0xff]
        %v274 = vld [vmem:[#allocation2 + $0xf8] sm:$0xff]
        %v275 = vld [vmem:[#allocation2 + $0x100] sm:$0xff]
        %v276 = vld [vmem:[#allocation2 + $0x108] sm:$0xff]
        %v277 = vld [vmem:[#allocation2 + $0x110] sm:$0xff]
        %v278 = vld [vmem:[#allocation2 + $0x118] sm:$0xff]
        %v279 = vld [vmem:[#allocation2 + $0x120] sm:$0xff]
        %v280 = vld [vmem:[#allocation2 + $0x128] sm:$0xff]
        %v281 = vld [vmem:[#allocation2 + $0x130] sm:$0xff]
        %v282 = vld [vmem:[#allocation2 + $0x138] sm:$0xff]
        %v283 = vld [vmem:[#allocation2 + $0x140] sm:$0xff]
        %v284 = vld [vmem:[#allocation2 + $0x148] sm:$0xff]
        %v285 = vld [vmem:[#allocation2 + $0x150] sm:$0xff]
        %v286 = vld [vmem:[#allocation2 + $0x158] sm:$0xff]
        %v287 = vld [vmem:[#allocation2 + $0x160] sm:$0xff]
        %v288 = vld [vmem:[#allocation2 + $0x168] sm:$0xff]
        %v289 = vld [vmem:[#allocation2 + $0x170] sm:$0xff]
        %v290 = vld [vmem:[#allocation2 + $0x178] sm:$0xff]
        %v291 = vld [vmem:[#allocation2 + $0x180] sm:$0xff]
        %v292 = vld [vmem:[#allocation2 + $0x188] sm:$0xff]
        %v293 = vld [vmem:[#allocation2 + $0x190] sm:$0xff]
        %v294 = vld [vmem:[#allocation2 + $0x198] sm:$0xff]
        %v295 = vld [vmem:[#allocation2 + $0x1a0] sm:$0xff]
        %v296 = vld [vmem:[#allocation2 + $0x1a8] sm:$0xff]
        %v297 = vld [vmem:[#allocation2 + $0x1b0] sm:$0xff]
        %v298 = vld [vmem:[#allocation2 + $0x1b8] sm:$0xff]
        %v299 = vld [vmem:[#allocation2 + $0x1c0] sm:$0xff]
        %v300 = vld [vmem:[#allocation2 + $0x1c8] sm:$0xff]
        %v301 = vld [vmem:[#allocation2 + $0x1d0] sm:$0xff]
        %v302 = vld [vmem:[#allocation2 + $0x1d8] sm:$0xff]
        %v303 = vld [vmem:[#allocation2 + $0x1e0] sm:$0xff]
        %v304 = vld [vmem:[#allocation2 + $0x1e8] sm:$0xff]
        %v305 = vld [vmem:[#allocation2 + $0x1f0] sm:$0xff]
        %v306 = vld [vmem:[#allocation2 + $0x1f8] sm:$0xff]
        %v307 = vld [vmem:[#allocation2 + $0x200] sm:$0xff]
        %v308 = vld [vmem:[#allocation2 + $0x208] sm:$0xff]
        %v309 = vld [vmem:[#allocation2 + $0x210] sm:$0xff]
        %v310 = vld [vmem:[#allocation2 + $0x218] sm:$0xff]
        %v311 = vld [vmem:[#allocation2 + $0x220] sm:$0xff]
        %v312 = vld [vmem:[#allocation2 + $0x228] sm:$0xff]
        %v313 = vld [vmem:[#allocation2 + $0x230] sm:$0xff]
        %v314 = vld [vmem:[#allocation2 + $0x238] sm:$0xff]
        %v315 = vld [vmem:[#allocation2 + $0x240] sm:$0xff]
        %v316 = vld [vmem:[#allocation2 + $0x248] sm:$0xff]
        %v317 = vld [vmem:[#allocation2 + $0x250] sm:$0xff]
        %v318 = vld [vmem:[#allocation2 + $0x258] sm:$0xff]
        %v319 = vld [vmem:[#allocation2 + $0x260] sm:$0xff]
        %v320 = vld [vmem:[#allocation2 + $0x268] sm:$0xff]
        %v321 = vld [vmem:[#allocation2 + $0x270] sm:$0xff]
        %v322 = vld [vmem:[#allocation2 + $0x278] sm:$0xff]
        %v323 = vld [vmem:[#allocation2 + $0x280] sm:$0xff]
        %v324 = vld [vmem:[#allocation2 + $0x288] sm:$0xff]
        %v325 = vld [vmem:[#allocation2 + $0x290] sm:$0xff]
        %v326 = vld [vmem:[#allocation2 + $0x298] sm:$0xff]
        %v327 = vld [vmem:[#allocation2 + $0x2a0] sm:$0xff]
        %v328 = vld [vmem:[#allocation2 + $0x2a8] sm:$0xff]
        %v329 = vld [vmem:[#allocation2 + $0x2b0] sm:$0xff]
        %v330 = vld [vmem:[#allocation2 + $0x2b8] sm:$0xff]
        %v331 = vld [vmem:[#allocation2 + $0x2c0] sm:$0xff]
        %v332 = vld [vmem:[#allocation2 + $0x2c8] sm:$0xff]
        %v333 = vld [vmem:[#allocation2 + $0x2d0] sm:$0xff]
        %v334 = vld [vmem:[#allocation2 + $0x2d8] sm:$0xff]
        %v335 = vld [vmem:[#allocation2 + $0x2e0] sm:$0xff]
        %v336 = vld [vmem:[#allocation2 + $0x2e8] sm:$0xff]
        %v337 = vld [vmem:[#allocation2 + $0x2f0] sm:$0xff]
        %v338 = vld [vmem:[#allocation2 + $0x2f8] sm:$0xff]
        %v339 = vld [vmem:[#allocation2 + $0x300] sm:$0xff]
        %v340 = vld [vmem:[#allocation2 + $0x308] sm:$0xff]
        %v341 = vld [vmem:[#allocation2 + $0x310] sm:$0xff]
        %v342 = vld [vmem:[#allocation2 + $0x318] sm:$0xff]
        %v343 = vld [vmem:[#allocation2 + $0x320] sm:$0xff]
        %v344 = vld [vmem:[#allocation2 + $0x328] sm:$0xff]
        %v345 = vld [vmem:[#allocation2 + $0x330] sm:$0xff]
        %v346 = vld [vmem:[#allocation2 + $0x338] sm:$0xff]
        %v347 = vld [vmem:[#allocation2 + $0x340] sm:$0xff]
        %v348 = vld [vmem:[#allocation2 + $0x348] sm:$0xff]
        %v349 = vld [vmem:[#allocation2 + $0x350] sm:$0xff]
        %v350 = vld [vmem:[#allocation2 + $0x358] sm:$0xff]
        %v351 = vld [vmem:[#allocation2 + $0x360] sm:$0xff]
        %v352 = vld [vmem:[#allocation2 + $0x368] sm:$0xff]
        %v353 = vld [vmem:[#allocation2 + $0x370] sm:$0xff]
        %v354 = vld [vmem:[#allocation2 + $0x378] sm:$0xff]
        %v355 = vld [vmem:[#allocation2 + $0x380] sm:$0xff]
        %v356 = vld [vmem:[#allocation2 + $0x388] sm:$0xff]
        %v357 = vld [vmem:[#allocation2 + $0x390] sm:$0xff]
        %v358 = vld [vmem:[#allocation2 + $0x398] sm:$0xff]
        %v359 = vld [vmem:[#allocation2 + $0x3a0] sm:$0xff]
        %v360 = vld [vmem:[#allocation2 + $0x3a8] sm:$0xff]
        %v361 = vld [vmem:[#allocation2 + $0x3b0] sm:$0xff]
        %v362 = vld [vmem:[#allocation2 + $0x3b8] sm:$0xff]
        %v363 = vld [vmem:[#allocation2 + $0x3c0] sm:$0xff]
        %v364 = vld [vmem:[#allocation2 + $0x3c8] sm:$0xff]
        %v365 = vld [vmem:[#allocation2 + $0x3d0] sm:$0xff]
        %v366 = vld [vmem:[#allocation2 + $0x3d8] sm:$0xff]
        %v367 = vld [vmem:[#allocation2 + $0x3e0] sm:$0xff]
        %v368 = vld [vmem:[#allocation2 + $0x3e8] sm:$0xff]
        %v369 = vld [vmem:[#allocation2 + $0x3f0] sm:$0xff]
        %v370 = vld [vmem:[#allocation2 + $0x3f8] sm:$0xff]
        %v371 = vld [vmem:[#allocation2 + $0x400] sm:$0xff]
        %v372 = vld [vmem:[#allocation2 + $0x408] sm:$0xff]
        %v373 = vld [vmem:[#allocation2 + $0x410] sm:$0xff]
        %v374 = vld [vmem:[#allocation2 + $0x418] sm:$0xff]
        %v375 = vld [vmem:[#allocation2 + $0x420] sm:$0xff]
        %v376 = vld [vmem:[#allocation2 + $0x428] sm:$0xff]
        %v377 = vld [vmem:[#allocation2 + $0x430] sm:$0xff]
        %v378 = vld [vmem:[#allocation2 + $0x438] sm:$0xff]
        %v379 = vld [vmem:[#allocation2 + $0x440] sm:$0xff]
        %v380 = vld [vmem:[#allocation2 + $0x448] sm:$0xff]
        %v381 = vld [vmem:[#allocation2 + $0x450] sm:$0xff]
        %v382 = vld [vmem:[#allocation2 + $0x458] sm:$0xff]
        %v383 = vld [vmem:[#allocation2 + $0x460] sm:$0xff]
        %v384 = vld [vmem:[#allocation2 + $0x468] sm:$0xff]
        %v385 = vld [vmem:[#allocation2 + $0x470] sm:$0xff]
        %v386 = vld [vmem:[#allocation2 + $0x478] sm:$0xff]
        %v387 = vld [vmem:[%s202] sm:$0xff]
        %v388 = vld [vmem:[%s202 + $0x8] sm:$0xf]
        %v389 = vld [vmem:[%s202 + $0xc] sm:$0xff]
        %v390 = vld [vmem:[%s202 + $0x14] sm:$0xf]
        %v391 = vld [vmem:[%s202 + $0x18] sm:$0xff]
        %v392 = vld [vmem:[%s202 + $0x20] sm:$0xf]
        %v393 = vld [vmem:[%s202 + $0x24] sm:$0xff]
        %v394 = vld [vmem:[%s202 + $0x2c] sm:$0xf]
        %v395 = vld [vmem:[%s202 + $0x30] sm:$0xff]
        %v396 = vld [vmem:[%s202 + $0x38] sm:$0xf]
        %v397 = vld [vmem:[%s202 + $0x3c] sm:$0xff]
        %v398 = vld [vmem:[%s202 + $0x44] sm:$0xf]
        %v399 = vld [vmem:[%s202 + $0x48] sm:$0xff]
        %v400 = vld [vmem:[%s202 + $0x50] sm:$0xf]
        %v401 = vld [vmem:[%s202 + $0x54] sm:$0xff]
        %v402 = vld [vmem:[%s202 + $0x5c] sm:$0xf]
        %v403 = vld [vmem:[%s202 + $0x60] sm:$0xff]
        %v404 = vld [vmem:[%s202 + $0x68] sm:$0xf]
        %v405 = vld [vmem:[%s202 + $0x6c] sm:$0xff]
        %v406 = vld [vmem:[%s202 + $0x74] sm:$0xf]
        %v407 = vld [vmem:[%s202 + $0x78] sm:$0xff]
        %v408 = vld [vmem:[%s202 + $0x80] sm:$0xf]
        %v409 = vld [vmem:[%s202 + $0x84] sm:$0xff]
        %v410 = vld [vmem:[%s202 + $0x8c] sm:$0xf]
        %v411 = vld [vmem:[%s202 + $0x90] sm:$0xff]
        %v412 = vld [vmem:[%s202 + $0x98] sm:$0xf]
        %v413 = vld [vmem:[%s202 + $0x9c] sm:$0xff]
        %v414 = vld [vmem:[%s202 + $0xa4] sm:$0xf]
        %v415 = vld [vmem:[%s202 + $0xa8] sm:$0xff]
        %v416 = vld [vmem:[%s202 + $0xb0] sm:$0xf]
        %v417 = vld [vmem:[%s202 + $0xb4] sm:$0xff]
        %v418 = vld [vmem:[%s202 + $0xbc] sm:$0xf]
        %v419 = vld [vmem:[%s202 + $0xc0] sm:$0xff]
        %v420 = vld [vmem:[%s202 + $0xc8] sm:$0xf]
        %v421 = vld [vmem:[%s202 + $0xcc] sm:$0xff]
        %v422 = vld [vmem:[%s202 + $0xd4] sm:$0xf]
        %v423 = vld [vmem:[%s202 + $0xd8] sm:$0xff]
        %v424 = vld [vmem:[%s202 + $0xe0] sm:$0xf]
        %v425 = vld [vmem:[%s202 + $0xe4] sm:$0xff]
        %v426 = vld [vmem:[%s202 + $0xec] sm:$0xf]
        %v427 = vld [vmem:[%s202 + $0xf0] sm:$0xff]
        %v428 = vld [vmem:[%s202 + $0xf8] sm:$0xf]
        %v429 = vld [vmem:[%s202 + $0xfc] sm:$0xff]
        %v430 = vld [vmem:[%s202 + $0x104] sm:$0xf]
        %v431 = vld [vmem:[%s202 + $0x108] sm:$0xff]
        %v432 = vld [vmem:[%s202 + $0x110] sm:$0xf]
        %v433 = vld [vmem:[%s202 + $0x114] sm:$0xff]
        %v434 = vld [vmem:[%s202 + $0x11c] sm:$0xf]
        %v435 = vld [vmem:[%s202 + $0x120] sm:$0xff]
        %v436 = vld [vmem:[%s202 + $0x128] sm:$0xf]
        %v437 = vld [vmem:[%s202 + $0x12c] sm:$0xff]
        %v438 = vld [vmem:[%s202 + $0x134] sm:$0xf]
        %v439 = vld [vmem:[%s202 + $0x138] sm:$0xff]
        %v440 = vld [vmem:[%s202 + $0x140] sm:$0xf]
        %v441 = vld [vmem:[%s202 + $0x144] sm:$0xff]
        %v442 = vld [vmem:[%s202 + $0x14c] sm:$0xf]
        %v443 = vld [vmem:[%s202 + $0x150] sm:$0xff]
        %v444 = vld [vmem:[%s202 + $0x158] sm:$0xf]
        %v445 = vld [vmem:[%s202 + $0x15c] sm:$0xff]
        %v446 = vld [vmem:[%s202 + $0x164] sm:$0xf]
        %v447 = vld [vmem:[%s202 + $0x168] sm:$0xff]
        %v448 = vld [vmem:[%s202 + $0x170] sm:$0xf]
        %v449 = vld [vmem:[%s202 + $0x174] sm:$0xff]
        %v450 = vld [vmem:[%s202 + $0x17c] sm:$0xf]
        %v451 = vld [vmem:[%s202 + $0x180] sm:$0xff]
        %v452 = vld [vmem:[%s202 + $0x188] sm:$0xf]
        %v453 = vld [vmem:[%s202 + $0x18c] sm:$0xff]
        %v454 = vld [vmem:[%s202 + $0x194] sm:$0xf]
        %v455 = vld [vmem:[%s202 + $0x198] sm:$0xff]
        %v456 = vld [vmem:[%s202 + $0x1a0] sm:$0xf]
        %v457 = vld [vmem:[%s202 + $0x1a4] sm:$0xff]
        %v458 = vld [vmem:[%s202 + $0x1ac] sm:$0xf]
        %v459 = vld [vmem:[%s202 + $0x1b0] sm:$0xff]
        %v460 = vld [vmem:[%s202 + $0x1b8] sm:$0xf]
        %v461 = vld [vmem:[%s202 + $0x1bc] sm:$0xff]
        %v462 = vld [vmem:[%s202 + $0x1c4] sm:$0xf]
        %v463 = vld [vmem:[%s202 + $0x1c8] sm:$0xff]
        %v464 = vld [vmem:[%s202 + $0x1d0] sm:$0xf]
        %v465 = vld [vmem:[%s202 + $0x1d4] sm:$0xff]
        %v466 = vld [vmem:[%s202 + $0x1dc] sm:$0xf]
        %v467 = vld [vmem:[%s202 + $0x1e0] sm:$0xff]
        %v468 = vld [vmem:[%s202 + $0x1e8] sm:$0xf]
        %v469 = vld [vmem:[%s202 + $0x1ec] sm:$0xff]
        %v470 = vld [vmem:[%s202 + $0x1f4] sm:$0xf]
        %v471 = vld [vmem:[%s202 + $0x1f8] sm:$0xff]
        %v472 = vld [vmem:[%s202 + $0x200] sm:$0xf]
        %v473 = vld [vmem:[%s202 + $0x204] sm:$0xff]
        %v474 = vld [vmem:[%s202 + $0x20c] sm:$0xf]
        %v475 = vld [vmem:[%s202 + $0x210] sm:$0xff]
        %v476 = vld [vmem:[%s202 + $0x218] sm:$0xf]
        %v477 = vld [vmem:[%s202 + $0x21c] sm:$0xff]
        %v478 = vld [vmem:[%s202 + $0x224] sm:$0xf]
        %v479 = vld [vmem:[%s202 + $0x228] sm:$0xff]
        %v480 = vld [vmem:[%s202 + $0x230] sm:$0xf]
        %v481 = vld [vmem:[%s202 + $0x234] sm:$0xff]
        %v482 = vld [vmem:[%s202 + $0x23c] sm:$0xf]
        %v483 = vld [vmem:[%s202 + $0x240] sm:$0xff]
        %v484 = vld [vmem:[%s202 + $0x248] sm:$0xf]
        %v485 = vld [vmem:[%s202 + $0x24c] sm:$0xff]
        %v486 = vld [vmem:[%s202 + $0x254] sm:$0xf]
        %v487 = vld [vmem:[%s202 + $0x258] sm:$0xff]
        %v488 = vld [vmem:[%s202 + $0x260] sm:$0xf]
        %v489 = vld [vmem:[%s202 + $0x264] sm:$0xff]
        %v490 = vld [vmem:[%s202 + $0x26c] sm:$0xf]
        %v491 = vld [vmem:[%s202 + $0x270] sm:$0xff]
        %v492 = vld [vmem:[%s202 + $0x278] sm:$0xf]
        %v493 = vld [vmem:[%s202 + $0x27c] sm:$0xff]
        %v494 = vld [vmem:[%s202 + $0x284] sm:$0xf]
        %v495 = vld [vmem:[%s202 + $0x288] sm:$0xff]
        %v496 = vld [vmem:[%s202 + $0x290] sm:$0xf]
        %v497 = vld [vmem:[%s202 + $0x294] sm:$0xff]
        %v498 = vld [vmem:[%s202 + $0x29c] sm:$0xf]
        %v499 = vld [vmem:[%s202 + $0x2a0] sm:$0xff]
        %v500 = vld [vmem:[%s202 + $0x2a8] sm:$0xf]
        %v501 = vld [vmem:[%s202 + $0x2ac] sm:$0xff]
        %v502 = vld [vmem:[%s202 + $0x2b4] sm:$0xf]
        %v503 = vld [vmem:[%s202 + $0x2b8] sm:$0xff]
        %v504 = vld [vmem:[%s202 + $0x2c0] sm:$0xf]
        %v505 = vld [vmem:[%s202 + $0x2c4] sm:$0xff]
        %v506 = vld [vmem:[%s202 + $0x2cc] sm:$0xf]
        %v507 = vld [vmem:[%s202 + $0x2d0] sm:$0xff]
        %v508 = vld [vmem:[%s202 + $0x2d8] sm:$0xf]
        %v509 = vld [vmem:[%s202 + $0x2dc] sm:$0xff]
        %v510 = vld [vmem:[%s202 + $0x2e4] sm:$0xf]
        %v511 = vld [vmem:[%s202 + $0x2e8] sm:$0xff]
        %v512 = vld [vmem:[%s202 + $0x2f0] sm:$0xf]
        %v513 = vld [vmem:[%s202 + $0x2f4] sm:$0xff]
        %v514 = vld [vmem:[%s202 + $0x2fc] sm:$0xf]
        %v515 = vld [vmem:[%s202 + $0x300] sm:$0xff]
        %v516 = vld [vmem:[%s202 + $0x308] sm:$0xf]
        %v517 = vld [vmem:[%s202 + $0x30c] sm:$0xff]
        %v518 = vld [vmem:[%s202 + $0x314] sm:$0xf]
        %v519 = vld [vmem:[%s202 + $0x318] sm:$0xff]
        %v520 = vld [vmem:[%s202 + $0x320] sm:$0xf]
        %v521 = vld [vmem:[%s202 + $0x324] sm:$0xff]
        %v522 = vld [vmem:[%s202 + $0x32c] sm:$0xf]
        %v523 = vld [vmem:[%s202 + $0x330] sm:$0xff]
        %v524 = vld [vmem:[%s202 + $0x338] sm:$0xf]
        %v525 = vld [vmem:[%s202 + $0x33c] sm:$0xff]
        %v526 = vld [vmem:[%s202 + $0x344] sm:$0xf]
        %v527 = vld [vmem:[%s202 + $0x348] sm:$0xff]
        %v528 = vld [vmem:[%s202 + $0x350] sm:$0xf]
        %v529 = vld [vmem:[%s202 + $0x354] sm:$0xff]
        %v530 = vld [vmem:[%s202 + $0x35c] sm:$0xf]
        %v531 = vld [vmem:[%s202 + $0x360] sm:$0xff]
        %v532 = vld [vmem:[%s202 + $0x368] sm:$0xf]
        %v533 = vld [vmem:[%s202 + $0x36c] sm:$0xff]
        %v534 = vld [vmem:[%s202 + $0x374] sm:$0xf]
        %v535 = vld [vmem:[%s202 + $0x378] sm:$0xff]
        %v536 = vld [vmem:[%s202 + $0x380] sm:$0xf]
        %v537 = vld [vmem:[%s202 + $0x384] sm:$0xff]
        %v538 = vld [vmem:[%s202 + $0x38c] sm:$0xf]
        %v539 = vld [vmem:[%s202 + $0x390] sm:$0xff]
        %v540 = vld [vmem:[%s202 + $0x398] sm:$0xf]
        %v541 = vld [vmem:[%s202 + $0x39c] sm:$0xff]
        %v542 = vld [vmem:[%s202 + $0x3a4] sm:$0xf]
        %v543 = vld [vmem:[%s202 + $0x3a8] sm:$0xff]
        %v544 = vld [vmem:[%s202 + $0x3b0] sm:$0xf]
        %v545 = vld [vmem:[%s202 + $0x3b4] sm:$0xff]
        %v546 = vld [vmem:[%s202 + $0x3bc] sm:$0xf]
        %v547 = vld [vmem:[%s202 + $0x3c0] sm:$0xff]
        %v548 = vld [vmem:[%s202 + $0x3c8] sm:$0xf]
        %v549 = vld [vmem:[%s202 + $0x3cc] sm:$0xff]
        %v550 = vld [vmem:[%s202 + $0x3d4] sm:$0xf]
        %v551 = vld [vmem:[%s202 + $0x3d8] sm:$0xff]
        %v552 = vld [vmem:[%s202 + $0x3e0] sm:$0xf]
        %v553 = vld [vmem:[%s202 + $0x3e4] sm:$0xff]
        %v554 = vld [vmem:[%s202 + $0x3ec] sm:$0xf]
        %v555 = vld [vmem:[%s202 + $0x3f0] sm:$0xff]
        %v556 = vld [vmem:[%s202 + $0x3f8] sm:$0xf]
        %v557 = vld [vmem:[%s202 + $0x3fc] sm:$0xff]
        %v558 = vld [vmem:[%s202 + $0x404] sm:$0xf]
        %v559 = vld [vmem:[%s202 + $0x408] sm:$0xff]
        %v560 = vld [vmem:[%s202 + $0x410] sm:$0xf]
        %v561 = vld [vmem:[%s202 + $0x414] sm:$0xff]
        %v562 = vld [vmem:[%s202 + $0x41c] sm:$0xf]
        %v563 = vld [vmem:[%s202 + $0x420] sm:$0xff]
        %v564 = vld [vmem:[%s202 + $0x428] sm:$0xf]
        %v565 = vld [vmem:[%s202 + $0x42c] sm:$0xff]
        %v566 = vld [vmem:[%s202 + $0x434] sm:$0xf]
        %v567 = vld [vmem:[%s202 + $0x438] sm:$0xff]
        %v568 = vld [vmem:[%s202 + $0x440] sm:$0xf]
        %v569 = vld [vmem:[%s202 + $0x444] sm:$0xff]
        %v570 = vld [vmem:[%s202 + $0x44c] sm:$0xf]
        %v571 = vld [vmem:[%s202 + $0x450] sm:$0xff]
        %v572 = vld [vmem:[%s202 + $0x458] sm:$0xf]
        %v573 = vld [vmem:[%s202 + $0x45c] sm:$0xff]
        %v574 = vld [vmem:[%s202 + $0x464] sm:$0xf]
        %v575 = vld [vmem:[%s202 + $0x468] sm:$0xff]
        %v576 = vld [vmem:[%s202 + $0x470] sm:$0xf]
        %v577 = vld [vmem:[%s202 + $0x474] sm:$0xff]
        %v578 = vld [vmem:[%s202 + $0x47c] sm:$0xf]
        %v579 = vld [vmem:[%s211] sm:$0x7]
        %v581 = vlaneseq
        %v582 = vshrl.u32 %v581, 7
        %v583 = vsub.s32 0, %v582
        %v584 = vrot.slane %v579, %v583
        %v585 = vlaneseq
        %v586 = vshrl.u32 %v585, 7
        %v587 = vsub.s32 1, %v586
        %v588 = vrot.slane %v579, %v587
        %v589 = vlaneseq
        %v590 = vshrl.u32 %v589, 7
        %v591 = vsub.s32 2, %v590
        %v592 = vrot.slane %v579, %v591
        %v740 = vunpack.c.l.b16 %v243
        %v741 = vunpack.c.h.b16 %v243
        %v742 = vunpack.c.l.b16 %v244
        %v743 = vunpack.c.h.b16 %v244
        %v744 = vunpack.c.l.b16 %v245
        %v745 = vunpack.c.h.b16 %v245
        %v746 = vunpack.c.l.b16 %v246
        %v747 = vunpack.c.h.b16 %v246
        %v748 = vunpack.c.l.b16 %v247
        %v749 = vunpack.c.h.b16 %v247
        %v750 = vunpack.c.l.b16 %v248
        %v751 = vunpack.c.h.b16 %v248
        %v752 = vunpack.c.l.b16 %v249
        %v753 = vunpack.c.h.b16 %v249
        %v754 = vunpack.c.l.b16 %v250
        %v755 = vunpack.c.h.b16 %v250
        %v756 = vunpack.c.l.b16 %v251
        %v757 = vunpack.c.h.b16 %v251
        %v758 = vunpack.c.l.b16 %v252
        %v759 = vunpack.c.h.b16 %v252
        %v760 = vunpack.c.l.b16 %v253
        %v761 = vunpack.c.h.b16 %v253
        %v762 = vunpack.c.l.b16 %v254
        %v763 = vunpack.c.h.b16 %v254
        %v764 = vunpack.c.l.b16 %v255
        %v765 = vunpack.c.h.b16 %v255
        %v766 = vunpack.c.l.b16 %v256
        %v767 = vunpack.c.h.b16 %v256
        %v768 = vunpack.c.l.b16 %v257
        %v769 = vunpack.c.h.b16 %v257
        %v770 = vunpack.c.l.b16 %v258
        %v771 = vunpack.c.h.b16 %v258
        %v772 = vunpack.c.l.b16 %v259
        %v773 = vunpack.c.h.b16 %v259
        %v774 = vunpack.c.l.b16 %v260
        %v775 = vunpack.c.h.b16 %v260
        %v776 = vunpack.c.l.b16 %v261
        %v777 = vunpack.c.h.b16 %v261
        %v778 = vunpack.c.l.b16 %v262
        %v779 = vunpack.c.h.b16 %v262
        %v780 = vunpack.c.l.b16 %v263
        %v781 = vunpack.c.h.b16 %v263
        %v782 = vunpack.c.l.b16 %v264
        %v783 = vunpack.c.h.b16 %v264
        %v784 = vunpack.c.l.b16 %v265
        %v785 = vunpack.c.h.b16 %v265
        %v786 = vunpack.c.l.b16 %v266
        %v787 = vunpack.c.h.b16 %v266
        %v788 = vunpack.c.l.b16 %v267
        %v789 = vunpack.c.h.b16 %v267
        %v790 = vunpack.c.l.b16 %v268
        %v791 = vunpack.c.h.b16 %v268
        %v792 = vunpack.c.l.b16 %v269
        %v793 = vunpack.c.h.b16 %v269
        %v794 = vunpack.c.l.b16 %v270
        %v795 = vunpack.c.h.b16 %v270
        %v796 = vunpack.c.l.b16 %v271
        %v797 = vunpack.c.h.b16 %v271
        %v798 = vunpack.c.l.b16 %v272
        %v799 = vunpack.c.h.b16 %v272
        %v800 = vunpack.c.l.b16 %v273
        %v801 = vunpack.c.h.b16 %v273
        %v802 = vunpack.c.l.b16 %v274
        %v803 = vunpack.c.h.b16 %v274
        %v804 = vunpack.c.l.b16 %v275
        %v805 = vunpack.c.h.b16 %v275
        %v806 = vunpack.c.l.b16 %v276
        %v807 = vunpack.c.h.b16 %v276
        %v808 = vunpack.c.l.b16 %v277
        %v809 = vunpack.c.h.b16 %v277
        %v810 = vunpack.c.l.b16 %v278
        %v811 = vunpack.c.h.b16 %v278
        %v812 = vunpack.c.l.b16 %v279
        %v813 = vunpack.c.h.b16 %v279
        %v814 = vunpack.c.l.b16 %v280
        %v815 = vunpack.c.h.b16 %v280
        %v816 = vunpack.c.l.b16 %v281
        %v817 = vunpack.c.h.b16 %v281
        %v818 = vunpack.c.l.b16 %v282
        %v819 = vunpack.c.h.b16 %v282
        %v820 = vunpack.c.l.b16 %v283
        %v821 = vunpack.c.h.b16 %v283
        %v822 = vunpack.c.l.b16 %v284
        %v823 = vunpack.c.h.b16 %v284
        %v824 = vunpack.c.l.b16 %v285
        %v825 = vunpack.c.h.b16 %v285
        %v826 = vunpack.c.l.b16 %v286
        %v827 = vunpack.c.h.b16 %v286
        %v828 = vunpack.c.l.b16 %v287
        %v829 = vunpack.c.h.b16 %v287
        %v830 = vunpack.c.l.b16 %v288
        %v831 = vunpack.c.h.b16 %v288
        %v832 = vunpack.c.l.b16 %v289
        %v833 = vunpack.c.h.b16 %v289
        %v834 = vunpack.c.l.b16 %v290
        %v835 = vunpack.c.h.b16 %v290
        %v836 = vunpack.c.l.b16 %v291
        %v837 = vunpack.c.h.b16 %v291
        %v838 = vunpack.c.l.b16 %v292
        %v839 = vunpack.c.h.b16 %v292
        %v840 = vunpack.c.l.b16 %v293
        %v841 = vunpack.c.h.b16 %v293
        %v842 = vunpack.c.l.b16 %v294
        %v843 = vunpack.c.h.b16 %v294
        %v844 = vunpack.c.l.b16 %v295
        %v845 = vunpack.c.h.b16 %v295
        %v846 = vunpack.c.l.b16 %v296
        %v847 = vunpack.c.h.b16 %v296
        %v848 = vunpack.c.l.b16 %v297
        %v849 = vunpack.c.h.b16 %v297
        %v850 = vunpack.c.l.b16 %v298
        %v851 = vunpack.c.h.b16 %v298
        %v852 = vunpack.c.l.b16 %v299
        %v853 = vunpack.c.h.b16 %v299
        %v854 = vunpack.c.l.b16 %v300
        %v855 = vunpack.c.h.b16 %v300
        %v856 = vunpack.c.l.b16 %v301
        %v857 = vunpack.c.h.b16 %v301
        %v858 = vunpack.c.l.b16 %v302
        %v859 = vunpack.c.h.b16 %v302
        %v860 = vunpack.c.l.b16 %v303
        %v861 = vunpack.c.h.b16 %v303
        %v862 = vunpack.c.l.b16 %v304
        %v863 = vunpack.c.h.b16 %v304
        %v864 = vunpack.c.l.b16 %v305
        %v865 = vunpack.c.h.b16 %v305
        %v866 = vunpack.c.l.b16 %v306
        %v867 = vunpack.c.h.b16 %v306
        %v868 = vunpack.c.l.b16 %v307
        %v869 = vunpack.c.h.b16 %v307
        %v870 = vunpack.c.l.b16 %v308
        %v871 = vunpack.c.h.b16 %v308
        %v872 = vunpack.c.l.b16 %v309
        %v873 = vunpack.c.h.b16 %v309
        %v874 = vunpack.c.l.b16 %v310
        %v875 = vunpack.c.h.b16 %v310
        %v876 = vunpack.c.l.b16 %v311
        %v877 = vunpack.c.h.b16 %v311
        %v878 = vunpack.c.l.b16 %v312
        %v879 = vunpack.c.h.b16 %v312
        %v880 = vunpack.c.l.b16 %v313
        %v881 = vunpack.c.h.b16 %v313
        %v882 = vunpack.c.l.b16 %v314
        %v883 = vunpack.c.h.b16 %v314
        %v884 = vunpack.c.l.b16 %v315
        %v885 = vunpack.c.h.b16 %v315
        %v886 = vunpack.c.l.b16 %v316
        %v887 = vunpack.c.h.b16 %v316
        %v888 = vunpack.c.l.b16 %v317
        %v889 = vunpack.c.h.b16 %v317
        %v890 = vunpack.c.l.b16 %v318
        %v891 = vunpack.c.h.b16 %v318
        %v892 = vunpack.c.l.b16 %v319
        %v893 = vunpack.c.h.b16 %v319
        %v894 = vunpack.c.l.b16 %v320
        %v895 = vunpack.c.h.b16 %v320
        %v896 = vunpack.c.l.b16 %v321
        %v897 = vunpack.c.h.b16 %v321
        %v898 = vunpack.c.l.b16 %v322
        %v899 = vunpack.c.h.b16 %v322
        %v900 = vunpack.c.l.b16 %v323
        %v901 = vunpack.c.h.b16 %v323
        %v902 = vunpack.c.l.b16 %v324
        %v903 = vunpack.c.h.b16 %v324
        %v904 = vunpack.c.l.b16 %v325
        %v905 = vunpack.c.h.b16 %v325
        %v906 = vunpack.c.l.b16 %v326
        %v907 = vunpack.c.h.b16 %v326
        %v908 = vunpack.c.l.b16 %v327
        %v909 = vunpack.c.h.b16 %v327
        %v910 = vunpack.c.l.b16 %v328
        %v911 = vunpack.c.h.b16 %v328
        %v912 = vunpack.c.l.b16 %v329
        %v913 = vunpack.c.h.b16 %v329
        %v914 = vunpack.c.l.b16 %v330
        %v915 = vunpack.c.h.b16 %v330
        %v916 = vunpack.c.l.b16 %v331
        %v917 = vunpack.c.h.b16 %v331
        %v918 = vunpack.c.l.b16 %v332
        %v919 = vunpack.c.h.b16 %v332
        %v920 = vunpack.c.l.b16 %v333
        %v921 = vunpack.c.h.b16 %v333
        %v922 = vunpack.c.l.b16 %v334
        %v923 = vunpack.c.h.b16 %v334
        %v924 = vunpack.c.l.b16 %v335
        %v925 = vunpack.c.h.b16 %v335
        %v926 = vunpack.c.l.b16 %v336
        %v927 = vunpack.c.h.b16 %v336
        %v928 = vunpack.c.l.b16 %v337
        %v929 = vunpack.c.h.b16 %v337
        %v930 = vunpack.c.l.b16 %v338
        %v931 = vunpack.c.h.b16 %v338
        %v932 = vunpack.c.l.b16 %v339
        %v933 = vunpack.c.h.b16 %v339
        %v934 = vunpack.c.l.b16 %v340
        %v935 = vunpack.c.h.b16 %v340
        %v936 = vunpack.c.l.b16 %v341
        %v937 = vunpack.c.h.b16 %v341
        %v938 = vunpack.c.l.b16 %v342
        %v939 = vunpack.c.h.b16 %v342
        %v940 = vunpack.c.l.b16 %v343
        %v941 = vunpack.c.h.b16 %v343
        %v942 = vunpack.c.l.b16 %v344
        %v943 = vunpack.c.h.b16 %v344
        %v944 = vunpack.c.l.b16 %v345
        %v945 = vunpack.c.h.b16 %v345
        %v946 = vunpack.c.l.b16 %v346
        %v947 = vunpack.c.h.b16 %v346
        %v948 = vunpack.c.l.b16 %v347
        %v949 = vunpack.c.h.b16 %v347
        %v950 = vunpack.c.l.b16 %v348
        %v951 = vunpack.c.h.b16 %v348
        %v952 = vunpack.c.l.b16 %v349
        %v953 = vunpack.c.h.b16 %v349
        %v954 = vunpack.c.l.b16 %v350
        %v955 = vunpack.c.h.b16 %v350
        %v956 = vunpack.c.l.b16 %v351
        %v957 = vunpack.c.h.b16 %v351
        %v958 = vunpack.c.l.b16 %v352
        %v959 = vunpack.c.h.b16 %v352
        %v960 = vunpack.c.l.b16 %v353
        %v961 = vunpack.c.h.b16 %v353
        %v962 = vunpack.c.l.b16 %v354
        %v963 = vunpack.c.h.b16 %v354
        %v964 = vunpack.c.l.b16 %v355
        %v965 = vunpack.c.h.b16 %v355
        %v966 = vunpack.c.l.b16 %v356
        %v967 = vunpack.c.h.b16 %v356
        %v968 = vunpack.c.l.b16 %v357
        %v969 = vunpack.c.h.b16 %v357
        %v970 = vunpack.c.l.b16 %v358
        %v971 = vunpack.c.h.b16 %v358
        %v972 = vunpack.c.l.b16 %v359
        %v973 = vunpack.c.h.b16 %v359
        %v974 = vunpack.c.l.b16 %v360
        %v975 = vunpack.c.h.b16 %v360
        %v976 = vunpack.c.l.b16 %v361
        %v977 = vunpack.c.h.b16 %v361
        %v978 = vunpack.c.l.b16 %v362
        %v979 = vunpack.c.h.b16 %v362
        %v980 = vunpack.c.l.b16 %v363
        %v981 = vunpack.c.h.b16 %v363
        %v982 = vunpack.c.l.b16 %v364
        %v983 = vunpack.c.h.b16 %v364
        %v984 = vunpack.c.l.b16 %v365
        %v985 = vunpack.c.h.b16 %v365
        %v986 = vunpack.c.l.b16 %v366
        %v987 = vunpack.c.h.b16 %v366
        %v988 = vunpack.c.l.b16 %v367
        %v989 = vunpack.c.h.b16 %v367
        %v990 = vunpack.c.l.b16 %v368
        %v991 = vunpack.c.h.b16 %v368
        %v992 = vunpack.c.l.b16 %v369
        %v993 = vunpack.c.h.b16 %v369
        %v994 = vunpack.c.l.b16 %v370
        %v995 = vunpack.c.h.b16 %v370
        %v996 = vunpack.c.l.b16 %v371
        %v997 = vunpack.c.h.b16 %v371
        %v998 = vunpack.c.l.b16 %v372
        %v999 = vunpack.c.h.b16 %v372
        %v1000 = vunpack.c.l.b16 %v373
        %v1001 = vunpack.c.h.b16 %v373
        %v1002 = vunpack.c.l.b16 %v374
        %v1003 = vunpack.c.h.b16 %v374
        %v1004 = vunpack.c.l.b16 %v375
        %v1005 = vunpack.c.h.b16 %v375
        %v1006 = vunpack.c.l.b16 %v376
        %v1007 = vunpack.c.h.b16 %v376
        %v1008 = vunpack.c.l.b16 %v377
        %v1009 = vunpack.c.h.b16 %v377
        %v1010 = vunpack.c.l.b16 %v378
        %v1011 = vunpack.c.h.b16 %v378
        %v1012 = vunpack.c.l.b16 %v379
        %v1013 = vunpack.c.h.b16 %v379
        %v1014 = vunpack.c.l.b16 %v380
        %v1015 = vunpack.c.h.b16 %v380
        %v1016 = vunpack.c.l.b16 %v381
        %v1017 = vunpack.c.h.b16 %v381
        %v1018 = vunpack.c.l.b16 %v382
        %v1019 = vunpack.c.h.b16 %v382
        %v1020 = vunpack.c.l.b16 %v383
        %v1021 = vunpack.c.h.b16 %v383
        %v1022 = vunpack.c.l.b16 %v384
        %v1023 = vunpack.c.h.b16 %v384
        %v1024 = vunpack.c.l.b16 %v385
        %v1025 = vunpack.c.h.b16 %v385
        %v1026 = vunpack.c.l.b16 %v386
        %v1027 = vunpack.c.h.b16 %v386
        %v1028 = vpack.c.b16 %v746, %v740
        %v1029 = vpack.c.b16 %v747, %v741
        %v1030 = vpack.c.b16 %v748, %v742
        %v1031 = vpack.c.b16 %v749, %v743
        %v1032 = vpack.c.b16 %v750, %v744
        %v1033 = vpack.c.b16 %v751, %v745
        %v1034 = vpack.c.b16 %v758, %v752
        %v1035 = vpack.c.b16 %v759, %v753
        %v1036 = vpack.c.b16 %v760, %v754
        %v1037 = vpack.c.b16 %v761, %v755
        %v1038 = vpack.c.b16 %v762, %v756
        %v1039 = vpack.c.b16 %v763, %v757
        %v1040 = vpack.c.b16 %v770, %v764
        %v1041 = vpack.c.b16 %v771, %v765
        %v1042 = vpack.c.b16 %v772, %v766
        %v1043 = vpack.c.b16 %v773, %v767
        %v1044 = vpack.c.b16 %v774, %v768
        %v1045 = vpack.c.b16 %v775, %v769
        %v1046 = vpack.c.b16 %v782, %v776
        %v1047 = vpack.c.b16 %v783, %v777
        %v1048 = vpack.c.b16 %v784, %v778
        %v1049 = vpack.c.b16 %v785, %v779
        %v1050 = vpack.c.b16 %v786, %v780
        %v1051 = vpack.c.b16 %v787, %v781
        %v1052 = vpack.c.b16 %v794, %v788
        %v1053 = vpack.c.b16 %v795, %v789
        %v1054 = vpack.c.b16 %v796, %v790
        %v1055 = vpack.c.b16 %v797, %v791
        %v1056 = vpack.c.b16 %v798, %v792
        %v1057 = vpack.c.b16 %v799, %v793
        %v1058 = vpack.c.b16 %v806, %v800
        %v1059 = vpack.c.b16 %v807, %v801
        %v1060 = vpack.c.b16 %v808, %v802
        %v1061 = vpack.c.b16 %v809, %v803
        %v1062 = vpack.c.b16 %v810, %v804
        %v1063 = vpack.c.b16 %v811, %v805
        %v1064 = vpack.c.b16 %v818, %v812
        %v1065 = vpack.c.b16 %v819, %v813
        %v1066 = vpack.c.b16 %v820, %v814
        %v1067 = vpack.c.b16 %v821, %v815
        %v1068 = vpack.c.b16 %v822, %v816
        %v1069 = vpack.c.b16 %v823, %v817
        %v1070 = vpack.c.b16 %v830, %v824
        %v1071 = vpack.c.b16 %v831, %v825
        %v1072 = vpack.c.b16 %v832, %v826
        %v1073 = vpack.c.b16 %v833, %v827
        %v1074 = vpack.c.b16 %v834, %v828
        %v1075 = vpack.c.b16 %v835, %v829
        %v1076 = vpack.c.b16 %v842, %v836
        %v1077 = vpack.c.b16 %v843, %v837
        %v1078 = vpack.c.b16 %v844, %v838
        %v1079 = vpack.c.b16 %v845, %v839
        %v1080 = vpack.c.b16 %v846, %v840
        %v1081 = vpack.c.b16 %v847, %v841
        %v1082 = vpack.c.b16 %v854, %v848
        %v1083 = vpack.c.b16 %v855, %v849
        %v1084 = vpack.c.b16 %v856, %v850
        %v1085 = vpack.c.b16 %v857, %v851
        %v1086 = vpack.c.b16 %v858, %v852
        %v1087 = vpack.c.b16 %v859, %v853
        %v1088 = vpack.c.b16 %v866, %v860
        %v1089 = vpack.c.b16 %v867, %v861
        %v1090 = vpack.c.b16 %v868, %v862
        %v1091 = vpack.c.b16 %v869, %v863
        %v1092 = vpack.c.b16 %v870, %v864
        %v1093 = vpack.c.b16 %v871, %v865
        %v1094 = vpack.c.b16 %v878, %v872
        %v1095 = vpack.c.b16 %v879, %v873
        %v1096 = vpack.c.b16 %v880, %v874
        %v1097 = vpack.c.b16 %v881, %v875
        %v1098 = vpack.c.b16 %v882, %v876
        %v1099 = vpack.c.b16 %v883, %v877
        %v1100 = vpack.c.b16 %v890, %v884
        %v1101 = vpack.c.b16 %v891, %v885
        %v1102 = vpack.c.b16 %v892, %v886
        %v1103 = vpack.c.b16 %v893, %v887
        %v1104 = vpack.c.b16 %v894, %v888
        %v1105 = vpack.c.b16 %v895, %v889
        %v1106 = vpack.c.b16 %v902, %v896
        %v1107 = vpack.c.b16 %v903, %v897
        %v1108 = vpack.c.b16 %v904, %v898
        %v1109 = vpack.c.b16 %v905, %v899
        %v1110 = vpack.c.b16 %v906, %v900
        %v1111 = vpack.c.b16 %v907, %v901
        %v1112 = vpack.c.b16 %v914, %v908
        %v1113 = vpack.c.b16 %v915, %v909
        %v1114 = vpack.c.b16 %v916, %v910
        %v1115 = vpack.c.b16 %v917, %v911
        %v1116 = vpack.c.b16 %v918, %v912
        %v1117 = vpack.c.b16 %v919, %v913
        %v1118 = vpack.c.b16 %v926, %v920
        %v1119 = vpack.c.b16 %v927, %v921
        %v1120 = vpack.c.b16 %v928, %v922
        %v1121 = vpack.c.b16 %v929, %v923
        %v1122 = vpack.c.b16 %v930, %v924
        %v1123 = vpack.c.b16 %v931, %v925
        %v1124 = vpack.c.b16 %v938, %v932
        %v1125 = vpack.c.b16 %v939, %v933
        %v1126 = vpack.c.b16 %v940, %v934
        %v1127 = vpack.c.b16 %v941, %v935
        %v1128 = vpack.c.b16 %v942, %v936
        %v1129 = vpack.c.b16 %v943, %v937
        %v1130 = vpack.c.b16 %v950, %v944
        %v1131 = vpack.c.b16 %v951, %v945
        %v1132 = vpack.c.b16 %v952, %v946
        %v1133 = vpack.c.b16 %v953, %v947
        %v1134 = vpack.c.b16 %v954, %v948
        %v1135 = vpack.c.b16 %v955, %v949
        %v1136 = vpack.c.b16 %v962, %v956
        %v1137 = vpack.c.b16 %v963, %v957
        %v1138 = vpack.c.b16 %v964, %v958
        %v1139 = vpack.c.b16 %v965, %v959
        %v1140 = vpack.c.b16 %v966, %v960
        %v1141 = vpack.c.b16 %v967, %v961
        %v1142 = vpack.c.b16 %v974, %v968
        %v1143 = vpack.c.b16 %v975, %v969
        %v1144 = vpack.c.b16 %v976, %v970
        %v1145 = vpack.c.b16 %v977, %v971
        %v1146 = vpack.c.b16 %v978, %v972
        %v1147 = vpack.c.b16 %v979, %v973
        %v1148 = vpack.c.b16 %v986, %v980
        %v1149 = vpack.c.b16 %v987, %v981
        %v1150 = vpack.c.b16 %v988, %v982
        %v1151 = vpack.c.b16 %v989, %v983
        %v1152 = vpack.c.b16 %v990, %v984
        %v1153 = vpack.c.b16 %v991, %v985
        %v1154 = vpack.c.b16 %v998, %v992
        %v1155 = vpack.c.b16 %v999, %v993
        %v1156 = vpack.c.b16 %v1000, %v994
        %v1157 = vpack.c.b16 %v1001, %v995
        %v1158 = vpack.c.b16 %v1002, %v996
        %v1159 = vpack.c.b16 %v1003, %v997
        %v1160 = vpack.c.b16 %v1010, %v1004
        %v1161 = vpack.c.b16 %v1011, %v1005
        %v1162 = vpack.c.b16 %v1012, %v1006
        %v1163 = vpack.c.b16 %v1013, %v1007
        %v1164 = vpack.c.b16 %v1014, %v1008
        %v1165 = vpack.c.b16 %v1015, %v1009
        %v1166 = vpack.c.b16 %v1022, %v1016
        %v1167 = vpack.c.b16 %v1023, %v1017
        %v1168 = vpack.c.b16 %v1024, %v1018
        %v1169 = vpack.c.b16 %v1025, %v1019
        %v1170 = vpack.c.b16 %v1026, %v1020
        %v1171 = vpack.c.b16 %v1027, %v1021
        %v1508 = vunpack.c.l.b16 %v387
        %v1509 = vunpack.c.h.b16 %v387
        %v1510 = vunpack.c.l.b16 %v388
        %v1511 = vunpack.c.l.b16 %v389
        %v1512 = vunpack.c.h.b16 %v389
        %v1513 = vunpack.c.l.b16 %v390
        %v1514 = vunpack.c.l.b16 %v391
        %v1515 = vunpack.c.h.b16 %v391
        %v1516 = vunpack.c.l.b16 %v392
        %v1517 = vunpack.c.l.b16 %v393
        %v1518 = vunpack.c.h.b16 %v393
        %v1519 = vunpack.c.l.b16 %v394
        %v1520 = vunpack.c.l.b16 %v395
        %v1521 = vunpack.c.h.b16 %v395
        %v1522 = vunpack.c.l.b16 %v396
        %v1523 = vunpack.c.l.b16 %v397
        %v1524 = vunpack.c.h.b16 %v397
        %v1525 = vunpack.c.l.b16 %v398
        %v1526 = vunpack.c.l.b16 %v399
        %v1527 = vunpack.c.h.b16 %v399
        %v1528 = vunpack.c.l.b16 %v400
        %v1529 = vunpack.c.l.b16 %v401
        %v1530 = vunpack.c.h.b16 %v401
        %v1531 = vunpack.c.l.b16 %v402
        %v1532 = vunpack.c.l.b16 %v403
        %v1533 = vunpack.c.h.b16 %v403
        %v1534 = vunpack.c.l.b16 %v404
        %v1535 = vunpack.c.l.b16 %v405
        %v1536 = vunpack.c.h.b16 %v405
        %v1537 = vunpack.c.l.b16 %v406
        %v1538 = vunpack.c.l.b16 %v407
        %v1539 = vunpack.c.h.b16 %v407
        %v1540 = vunpack.c.l.b16 %v408
        %v1541 = vunpack.c.l.b16 %v409
        %v1542 = vunpack.c.h.b16 %v409
        %v1543 = vunpack.c.l.b16 %v410
        %v1544 = vunpack.c.l.b16 %v411
        %v1545 = vunpack.c.h.b16 %v411
        %v1546 = vunpack.c.l.b16 %v412
        %v1547 = vunpack.c.l.b16 %v413
        %v1548 = vunpack.c.h.b16 %v413
        %v1549 = vunpack.c.l.b16 %v414
        %v1550 = vunpack.c.l.b16 %v415
        %v1551 = vunpack.c.h.b16 %v415
        %v1552 = vunpack.c.l.b16 %v416
        %v1553 = vunpack.c.l.b16 %v417
        %v1554 = vunpack.c.h.b16 %v417
        %v1555 = vunpack.c.l.b16 %v418
        %v1556 = vunpack.c.l.b16 %v419
        %v1557 = vunpack.c.h.b16 %v419
        %v1558 = vunpack.c.l.b16 %v420
        %v1559 = vunpack.c.l.b16 %v421
        %v1560 = vunpack.c.h.b16 %v421
        %v1561 = vunpack.c.l.b16 %v422
        %v1562 = vunpack.c.l.b16 %v423
        %v1563 = vunpack.c.h.b16 %v423
        %v1564 = vunpack.c.l.b16 %v424
        %v1565 = vunpack.c.l.b16 %v425
        %v1566 = vunpack.c.h.b16 %v425
        %v1567 = vunpack.c.l.b16 %v426
        %v1568 = vunpack.c.l.b16 %v427
        %v1569 = vunpack.c.h.b16 %v427
        %v1570 = vunpack.c.l.b16 %v428
        %v1571 = vunpack.c.l.b16 %v429
        %v1572 = vunpack.c.h.b16 %v429
        %v1573 = vunpack.c.l.b16 %v430
        %v1574 = vunpack.c.l.b16 %v431
        %v1575 = vunpack.c.h.b16 %v431
        %v1576 = vunpack.c.l.b16 %v432
        %v1577 = vunpack.c.l.b16 %v433
        %v1578 = vunpack.c.h.b16 %v433
        %v1579 = vunpack.c.l.b16 %v434
        %v1580 = vunpack.c.l.b16 %v435
        %v1581 = vunpack.c.h.b16 %v435
        %v1582 = vunpack.c.l.b16 %v436
        %v1583 = vunpack.c.l.b16 %v437
        %v1584 = vunpack.c.h.b16 %v437
        %v1585 = vunpack.c.l.b16 %v438
        %v1586 = vunpack.c.l.b16 %v439
        %v1587 = vunpack.c.h.b16 %v439
        %v1588 = vunpack.c.l.b16 %v440
        %v1589 = vunpack.c.l.b16 %v441
        %v1590 = vunpack.c.h.b16 %v441
        %v1591 = vunpack.c.l.b16 %v442
        %v1592 = vunpack.c.l.b16 %v443
        %v1593 = vunpack.c.h.b16 %v443
        %v1594 = vunpack.c.l.b16 %v444
        %v1595 = vunpack.c.l.b16 %v445
        %v1596 = vunpack.c.h.b16 %v445
        %v1597 = vunpack.c.l.b16 %v446
        %v1598 = vunpack.c.l.b16 %v447
        %v1599 = vunpack.c.h.b16 %v447
        %v1600 = vunpack.c.l.b16 %v448
        %v1601 = vunpack.c.l.b16 %v449
        %v1602 = vunpack.c.h.b16 %v449
        %v1603 = vunpack.c.l.b16 %v450
        %v1604 = vunpack.c.l.b16 %v451
        %v1605 = vunpack.c.h.b16 %v451
        %v1606 = vunpack.c.l.b16 %v452
        %v1607 = vunpack.c.l.b16 %v453
        %v1608 = vunpack.c.h.b16 %v453
        %v1609 = vunpack.c.l.b16 %v454
        %v1610 = vunpack.c.l.b16 %v455
        %v1611 = vunpack.c.h.b16 %v455
        %v1612 = vunpack.c.l.b16 %v456
        %v1613 = vunpack.c.l.b16 %v457
        %v1614 = vunpack.c.h.b16 %v457
        %v1615 = vunpack.c.l.b16 %v458
        %v1616 = vunpack.c.l.b16 %v459
        %v1617 = vunpack.c.h.b16 %v459
        %v1618 = vunpack.c.l.b16 %v460
        %v1619 = vunpack.c.l.b16 %v461
        %v1620 = vunpack.c.h.b16 %v461
        %v1621 = vunpack.c.l.b16 %v462
        %v1622 = vunpack.c.l.b16 %v463
        %v1623 = vunpack.c.h.b16 %v463
        %v1624 = vunpack.c.l.b16 %v464
        %v1625 = vunpack.c.l.b16 %v465
        %v1626 = vunpack.c.h.b16 %v465
        %v1627 = vunpack.c.l.b16 %v466
        %v1628 = vunpack.c.l.b16 %v467
        %v1629 = vunpack.c.h.b16 %v467
        %v1630 = vunpack.c.l.b16 %v468
        %v1631 = vunpack.c.l.b16 %v469
        %v1632 = vunpack.c.h.b16 %v469
        %v1633 = vunpack.c.l.b16 %v470
        %v1634 = vunpack.c.l.b16 %v471
        %v1635 = vunpack.c.h.b16 %v471
        %v1636 = vunpack.c.l.b16 %v472
        %v1637 = vunpack.c.l.b16 %v473
        %v1638 = vunpack.c.h.b16 %v473
        %v1639 = vunpack.c.l.b16 %v474
        %v1640 = vunpack.c.l.b16 %v475
        %v1641 = vunpack.c.h.b16 %v475
        %v1642 = vunpack.c.l.b16 %v476
        %v1643 = vunpack.c.l.b16 %v477
        %v1644 = vunpack.c.h.b16 %v477
        %v1645 = vunpack.c.l.b16 %v478
        %v1646 = vunpack.c.l.b16 %v479
        %v1647 = vunpack.c.h.b16 %v479
        %v1648 = vunpack.c.l.b16 %v480
        %v1649 = vunpack.c.l.b16 %v481
        %v1650 = vunpack.c.h.b16 %v481
        %v1651 = vunpack.c.l.b16 %v482
        %v1652 = vunpack.c.l.b16 %v483
        %v1653 = vunpack.c.h.b16 %v483
        %v1654 = vunpack.c.l.b16 %v484
        %v1655 = vunpack.c.l.b16 %v485
        %v1656 = vunpack.c.h.b16 %v485
        %v1657 = vunpack.c.l.b16 %v486
        %v1658 = vunpack.c.l.b16 %v487
        %v1659 = vunpack.c.h.b16 %v487
        %v1660 = vunpack.c.l.b16 %v488
        %v1661 = vunpack.c.l.b16 %v489
        %v1662 = vunpack.c.h.b16 %v489
        %v1663 = vunpack.c.l.b16 %v490
        %v1664 = vunpack.c.l.b16 %v491
        %v1665 = vunpack.c.h.b16 %v491
        %v1666 = vunpack.c.l.b16 %v492
        %v1667 = vunpack.c.l.b16 %v493
        %v1668 = vunpack.c.h.b16 %v493
        %v1669 = vunpack.c.l.b16 %v494
        %v1670 = vunpack.c.l.b16 %v495
        %v1671 = vunpack.c.h.b16 %v495
        %v1672 = vunpack.c.l.b16 %v496
        %v1673 = vunpack.c.l.b16 %v497
        %v1674 = vunpack.c.h.b16 %v497
        %v1675 = vunpack.c.l.b16 %v498
        %v1676 = vunpack.c.l.b16 %v499
        %v1677 = vunpack.c.h.b16 %v499
        %v1678 = vunpack.c.l.b16 %v500
        %v1679 = vunpack.c.l.b16 %v501
        %v1680 = vunpack.c.h.b16 %v501
        %v1681 = vunpack.c.l.b16 %v502
        %v1682 = vunpack.c.l.b16 %v503
        %v1683 = vunpack.c.h.b16 %v503
        %v1684 = vunpack.c.l.b16 %v504
        %v1685 = vunpack.c.l.b16 %v505
        %v1686 = vunpack.c.h.b16 %v505
        %v1687 = vunpack.c.l.b16 %v506
        %v1688 = vunpack.c.l.b16 %v507
        %v1689 = vunpack.c.h.b16 %v507
        %v1690 = vunpack.c.l.b16 %v508
        %v1691 = vunpack.c.l.b16 %v509
        %v1692 = vunpack.c.h.b16 %v509
        %v1693 = vunpack.c.l.b16 %v510
        %v1694 = vunpack.c.l.b16 %v511
        %v1695 = vunpack.c.h.b16 %v511
        %v1696 = vunpack.c.l.b16 %v512
        %v1697 = vunpack.c.l.b16 %v513
        %v1698 = vunpack.c.h.b16 %v513
        %v1699 = vunpack.c.l.b16 %v514
        %v1700 = vunpack.c.l.b16 %v515
        %v1701 = vunpack.c.h.b16 %v515
        %v1702 = vunpack.c.l.b16 %v516
        %v1703 = vunpack.c.l.b16 %v517
        %v1704 = vunpack.c.h.b16 %v517
        %v1705 = vunpack.c.l.b16 %v518
        %v1706 = vunpack.c.l.b16 %v519
        %v1707 = vunpack.c.h.b16 %v519
        %v1708 = vunpack.c.l.b16 %v520
        %v1709 = vunpack.c.l.b16 %v521
        %v1710 = vunpack.c.h.b16 %v521
        %v1711 = vunpack.c.l.b16 %v522
        %v1712 = vunpack.c.l.b16 %v523
        %v1713 = vunpack.c.h.b16 %v523
        %v1714 = vunpack.c.l.b16 %v524
        %v1715 = vunpack.c.l.b16 %v525
        %v1716 = vunpack.c.h.b16 %v525
        %v1717 = vunpack.c.l.b16 %v526
        %v1718 = vunpack.c.l.b16 %v527
        %v1719 = vunpack.c.h.b16 %v527
        %v1720 = vunpack.c.l.b16 %v528
        %v1721 = vunpack.c.l.b16 %v529
        %v1722 = vunpack.c.h.b16 %v529
        %v1723 = vunpack.c.l.b16 %v530
        %v1724 = vunpack.c.l.b16 %v531
        %v1725 = vunpack.c.h.b16 %v531
        %v1726 = vunpack.c.l.b16 %v532
        %v1727 = vunpack.c.l.b16 %v533
        %v1728 = vunpack.c.h.b16 %v533
        %v1729 = vunpack.c.l.b16 %v534
        %v1730 = vunpack.c.l.b16 %v535
        %v1731 = vunpack.c.h.b16 %v535
        %v1732 = vunpack.c.l.b16 %v536
        %v1733 = vunpack.c.l.b16 %v537
        %v1734 = vunpack.c.h.b16 %v537
        %v1735 = vunpack.c.l.b16 %v538
        %v1736 = vunpack.c.l.b16 %v539
        %v1737 = vunpack.c.h.b16 %v539
        %v1738 = vunpack.c.l.b16 %v540
        %v1739 = vunpack.c.l.b16 %v541
        %v1740 = vunpack.c.h.b16 %v541
        %v1741 = vunpack.c.l.b16 %v542
        %v1742 = vunpack.c.l.b16 %v543
        %v1743 = vunpack.c.h.b16 %v543
        %v1744 = vunpack.c.l.b16 %v544
        %v1745 = vunpack.c.l.b16 %v545
        %v1746 = vunpack.c.h.b16 %v545
        %v1747 = vunpack.c.l.b16 %v546
        %v1748 = vunpack.c.l.b16 %v547
        %v1749 = vunpack.c.h.b16 %v547
        %v1750 = vunpack.c.l.b16 %v548
        %v1751 = vunpack.c.l.b16 %v549
        %v1752 = vunpack.c.h.b16 %v549
        %v1753 = vunpack.c.l.b16 %v550
        %v1754 = vunpack.c.l.b16 %v551
        %v1755 = vunpack.c.h.b16 %v551
        %v1756 = vunpack.c.l.b16 %v552
        %v1757 = vunpack.c.l.b16 %v553
        %v1758 = vunpack.c.h.b16 %v553
        %v1759 = vunpack.c.l.b16 %v554
        %v1760 = vunpack.c.l.b16 %v555
        %v1761 = vunpack.c.h.b16 %v555
        %v1762 = vunpack.c.l.b16 %v556
        %v1763 = vunpack.c.l.b16 %v557
        %v1764 = vunpack.c.h.b16 %v557
        %v1765 = vunpack.c.l.b16 %v558
        %v1766 = vunpack.c.l.b16 %v559
        %v1767 = vunpack.c.h.b16 %v559
        %v1768 = vunpack.c.l.b16 %v560
        %v1769 = vunpack.c.l.b16 %v561
        %v1770 = vunpack.c.h.b16 %v561
        %v1771 = vunpack.c.l.b16 %v562
        %v1772 = vunpack.c.l.b16 %v563
        %v1773 = vunpack.c.h.b16 %v563
        %v1774 = vunpack.c.l.b16 %v564
        %v1775 = vunpack.c.l.b16 %v565
        %v1776 = vunpack.c.h.b16 %v565
        %v1777 = vunpack.c.l.b16 %v566
        %v1778 = vunpack.c.l.b16 %v567
        %v1779 = vunpack.c.h.b16 %v567
        %v1780 = vunpack.c.l.b16 %v568
        %v1781 = vunpack.c.l.b16 %v569
        %v1782 = vunpack.c.h.b16 %v569
        %v1783 = vunpack.c.l.b16 %v570
        %v1784 = vunpack.c.l.b16 %v571
        %v1785 = vunpack.c.h.b16 %v571
        %v1786 = vunpack.c.l.b16 %v572
        %v1787 = vunpack.c.l.b16 %v573
        %v1788 = vunpack.c.h.b16 %v573
        %v1789 = vunpack.c.l.b16 %v574
        %v1790 = vunpack.c.l.b16 %v575
        %v1791 = vunpack.c.h.b16 %v575
        %v1792 = vunpack.c.l.b16 %v576
        %v1793 = vunpack.c.l.b16 %v577
        %v1794 = vunpack.c.h.b16 %v577
        %v1795 = vunpack.c.l.b16 %v578
        %v1796 = vpack.c.b16 %v1511, %v1508
        %v1797 = vpack.c.b16 %v1512, %v1509
        %v1798 = vpack.c.b16 %v1513, %v1510
        %v1799 = vpack.c.b16 %v1517, %v1514
        %v1800 = vpack.c.b16 %v1518, %v1515
        %v1801 = vpack.c.b16 %v1519, %v1516
        %v1802 = vpack.c.b16 %v1523, %v1520
        %v1803 = vpack.c.b16 %v1524, %v1521
        %v1804 = vpack.c.b16 %v1525, %v1522
        %v1805 = vpack.c.b16 %v1529, %v1526
        %v1806 = vpack.c.b16 %v1530, %v1527
        %v1807 = vpack.c.b16 %v1531, %v1528
        %v1808 = vpack.c.b16 %v1535, %v1532
        %v1809 = vpack.c.b16 %v1536, %v1533
        %v1810 = vpack.c.b16 %v1537, %v1534
        %v1811 = vpack.c.b16 %v1541, %v1538
        %v1812 = vpack.c.b16 %v1542, %v1539
        %v1813 = vpack.c.b16 %v1543, %v1540
        %v1814 = vpack.c.b16 %v1547, %v1544
        %v1815 = vpack.c.b16 %v1548, %v1545
        %v1816 = vpack.c.b16 %v1549, %v1546
        %v1817 = vpack.c.b16 %v1553, %v1550
        %v1818 = vpack.c.b16 %v1554, %v1551
        %v1819 = vpack.c.b16 %v1555, %v1552
        %v1820 = vpack.c.b16 %v1559, %v1556
        %v1821 = vpack.c.b16 %v1560, %v1557
        %v1822 = vpack.c.b16 %v1561, %v1558
        %v1823 = vpack.c.b16 %v1565, %v1562
        %v1824 = vpack.c.b16 %v1566, %v1563
        %v1825 = vpack.c.b16 %v1567, %v1564
        %v1826 = vpack.c.b16 %v1571, %v1568
        %v1827 = vpack.c.b16 %v1572, %v1569
        %v1828 = vpack.c.b16 %v1573, %v1570
        %v1829 = vpack.c.b16 %v1577, %v1574
        %v1830 = vpack.c.b16 %v1578, %v1575
        %v1831 = vpack.c.b16 %v1579, %v1576
        %v1832 = vpack.c.b16 %v1583, %v1580
        %v1833 = vpack.c.b16 %v1584, %v1581
        %v1834 = vpack.c.b16 %v1585, %v1582
        %v1835 = vpack.c.b16 %v1589, %v1586
        %v1836 = vpack.c.b16 %v1590, %v1587
        %v1837 = vpack.c.b16 %v1591, %v1588
        %v1838 = vpack.c.b16 %v1595, %v1592
        %v1839 = vpack.c.b16 %v1596, %v1593
        %v1840 = vpack.c.b16 %v1597, %v1594
        %v1841 = vpack.c.b16 %v1601, %v1598
        %v1842 = vpack.c.b16 %v1602, %v1599
        %v1843 = vpack.c.b16 %v1603, %v1600
        %v1844 = vpack.c.b16 %v1607, %v1604
        %v1845 = vpack.c.b16 %v1608, %v1605
        %v1846 = vpack.c.b16 %v1609, %v1606
        %v1847 = vpack.c.b16 %v1613, %v1610
        %v1848 = vpack.c.b16 %v1614, %v1611
        %v1849 = vpack.c.b16 %v1615, %v1612
        %v1850 = vpack.c.b16 %v1619, %v1616
        %v1851 = vpack.c.b16 %v1620, %v1617
        %v1852 = vpack.c.b16 %v1621, %v1618
        %v1853 = vpack.c.b16 %v1625, %v1622
        %v1854 = vpack.c.b16 %v1626, %v1623
        %v1855 = vpack.c.b16 %v1627, %v1624
        %v1856 = vpack.c.b16 %v1631, %v1628
        %v1857 = vpack.c.b16 %v1632, %v1629
        %v1858 = vpack.c.b16 %v1633, %v1630
        %v1859 = vpack.c.b16 %v1637, %v1634
        %v1860 = vpack.c.b16 %v1638, %v1635
        %v1861 = vpack.c.b16 %v1639, %v1636
        %v1862 = vpack.c.b16 %v1643, %v1640
        %v1863 = vpack.c.b16 %v1644, %v1641
        %v1864 = vpack.c.b16 %v1645, %v1642
        %v1865 = vpack.c.b16 %v1649, %v1646
        %v1866 = vpack.c.b16 %v1650, %v1647
        %v1867 = vpack.c.b16 %v1651, %v1648
        %v1868 = vpack.c.b16 %v1655, %v1652
        %v1869 = vpack.c.b16 %v1656, %v1653
        %v1870 = vpack.c.b16 %v1657, %v1654
        %v1871 = vpack.c.b16 %v1661, %v1658
        %v1872 = vpack.c.b16 %v1662, %v1659
        %v1873 = vpack.c.b16 %v1663, %v1660
        %v1874 = vpack.c.b16 %v1667, %v1664
        %v1875 = vpack.c.b16 %v1668, %v1665
        %v1876 = vpack.c.b16 %v1669, %v1666
        %v1877 = vpack.c.b16 %v1673, %v1670
        %v1878 = vpack.c.b16 %v1674, %v1671
        %v1879 = vpack.c.b16 %v1675, %v1672
        %v1880 = vpack.c.b16 %v1679, %v1676
        %v1881 = vpack.c.b16 %v1680, %v1677
        %v1882 = vpack.c.b16 %v1681, %v1678
        %v1883 = vpack.c.b16 %v1685, %v1682
        %v1884 = vpack.c.b16 %v1686, %v1683
        %v1885 = vpack.c.b16 %v1687, %v1684
        %v1886 = vpack.c.b16 %v1691, %v1688
        %v1887 = vpack.c.b16 %v1692, %v1689
        %v1888 = vpack.c.b16 %v1693, %v1690
        %v1889 = vpack.c.b16 %v1697, %v1694
        %v1890 = vpack.c.b16 %v1698, %v1695
        %v1891 = vpack.c.b16 %v1699, %v1696
        %v1892 = vpack.c.b16 %v1703, %v1700
        %v1893 = vpack.c.b16 %v1704, %v1701
        %v1894 = vpack.c.b16 %v1705, %v1702
        %v1895 = vpack.c.b16 %v1709, %v1706
        %v1896 = vpack.c.b16 %v1710, %v1707
        %v1897 = vpack.c.b16 %v1711, %v1708
        %v1898 = vpack.c.b16 %v1715, %v1712
        %v1899 = vpack.c.b16 %v1716, %v1713
        %v1900 = vpack.c.b16 %v1717, %v1714
        %v1901 = vpack.c.b16 %v1721, %v1718
        %v1902 = vpack.c.b16 %v1722, %v1719
        %v1903 = vpack.c.b16 %v1723, %v1720
        %v1904 = vpack.c.b16 %v1727, %v1724
        %v1905 = vpack.c.b16 %v1728, %v1725
        %v1906 = vpack.c.b16 %v1729, %v1726
        %v1907 = vpack.c.b16 %v1733, %v1730
        %v1908 = vpack.c.b16 %v1734, %v1731
        %v1909 = vpack.c.b16 %v1735, %v1732
        %v1910 = vpack.c.b16 %v1739, %v1736
        %v1911 = vpack.c.b16 %v1740, %v1737
        %v1912 = vpack.c.b16 %v1741, %v1738
        %v1913 = vpack.c.b16 %v1745, %v1742
        %v1914 = vpack.c.b16 %v1746, %v1743
        %v1915 = vpack.c.b16 %v1747, %v1744
        %v1916 = vpack.c.b16 %v1751, %v1748
        %v1917 = vpack.c.b16 %v1752, %v1749
        %v1918 = vpack.c.b16 %v1753, %v1750
        %v1919 = vpack.c.b16 %v1757, %v1754
        %v1920 = vpack.c.b16 %v1758, %v1755
        %v1921 = vpack.c.b16 %v1759, %v1756
        %v1922 = vpack.c.b16 %v1763, %v1760
        %v1923 = vpack.c.b16 %v1764, %v1761
        %v1924 = vpack.c.b16 %v1765, %v1762
        %v1925 = vpack.c.b16 %v1769, %v1766
        %v1926 = vpack.c.b16 %v1770, %v1767
        %v1927 = vpack.c.b16 %v1771, %v1768
        %v1928 = vpack.c.b16 %v1775, %v1772
        %v1929 = vpack.c.b16 %v1776, %v1773
        %v1930 = vpack.c.b16 %v1777, %v1774
        %v1931 = vpack.c.b16 %v1781, %v1778
        %v1932 = vpack.c.b16 %v1782, %v1779
        %v1933 = vpack.c.b16 %v1783, %v1780
        %v1934 = vpack.c.b16 %v1787, %v1784
        %v1935 = vpack.c.b16 %v1788, %v1785
        %v1936 = vpack.c.b16 %v1789, %v1786
        %v1937 = vpack.c.b16 %v1793, %v1790
        %v1938 = vpack.c.b16 %v1794, %v1791
        %v1939 = vpack.c.b16 %v1795, %v1792
        %2084 = vmatprep.subr.bf16.mxu0 %v1797
        %2085 = vmatpush1.bf16.msra.mxu0 %v1796
        %2086 = vmatprep.subr.bf16.mxu0 %v1800
        %2087 = vmatpush1.bf16.msra.mxu0 %v1799
        %2088 = vmatprep.subr.bf16.mxu0 %v1803
        %2089 = vmatpush1.bf16.msra.mxu0 %v1802
        %2090 = vmatprep.subr.bf16.mxu0 %v1806
        %2091 = vmatpush1.bf16.msra.mxu0 %v1805
        %2092 = vmatprep.subr.bf16.mxu0 %v1809
        %2093 = vmatpush1.bf16.msra.mxu0 %v1808
        %2094 = vmatprep.subr.bf16.mxu0 %v1812
        %2095 = vmatpush1.bf16.msra.mxu0 %v1811
        %2096 = vmatprep.subr.bf16.mxu0 %v1815
        %2097 = vmatpush1.bf16.msra.mxu0 %v1814
        %2098 = vmatprep.subr.bf16.mxu0 %v1818
        %2099 = vmatpush1.bf16.msra.mxu0 %v1817
        %2100 = vmatprep.subr.bf16.mxu0 %v1821
        %2101 = vmatpush1.bf16.msra.mxu0 %v1820
        %2102 = vmatprep.subr.bf16.mxu0 %v1824
        %2103 = vmatpush1.bf16.msra.mxu0 %v1823
        %2104 = vmatprep.subr.bf16.mxu0 %v1827
        %2105 = vmatpush1.bf16.msra.mxu0 %v1826
        %2106 = vmatprep.subr.bf16.mxu0 %v1830
        %2107 = vmatpush1.bf16.msra.mxu0 %v1829
        %2108 = vmatprep.subr.bf16.mxu0 %v1833
        %2109 = vmatpush1.bf16.msra.mxu0 %v1832
        %2110 = vmatprep.subr.bf16.mxu0 %v1836
        %2111 = vmatpush1.bf16.msra.mxu0 %v1835
        %2112 = vmatprep.subr.bf16.mxu0 %v1839
        %2113 = vmatpush1.bf16.msra.mxu0 %v1838
        %2114 = vmatprep.subr.bf16.mxu0 %v1842
        %2115 = vmatpush1.bf16.msra.mxu0 %v1841
        %2116 = vmatprep.mubr.bf16.mxu0 %v1029
        %2117 = vmatmul.mubr.bf16.gmra.mrb[0].mxu0 %v1028
        %v2118 = vpop.f32.mrb[0].mxu0
        %v2119 = vadd.f32 %v584, %v2118
        %v2120 = vpop.f32.mrb[0].mxu0
        %v2121 = vadd.f32 %v588, %v2120
        %v2122 = vpop.f32.mrb[0].mxu0
        %v2123 = vadd.f32 %v584, %v2122
        %v2124 = vpop.f32.mrb[0].mxu0
        %v2125 = vadd.f32 %v588, %v2124
        %2126 = vmatprep.mubr.bf16.mxu0 %v1035
        %2127 = vmatmul.mubr.bf16.gmra.mrb[0].mxu0 %v1034
        %v2128 = vpop.f32.mrb[0].mxu0
        %v2129 = vadd.f32 %v584, %v2128
        %v2130 = vpop.f32.mrb[0].mxu0
        %v2131 = vadd.f32 %v588, %v2130
        %v2132 = vpop.f32.mrb[0].mxu0
        %v2133 = vadd.f32 %v584, %v2132
        %v2134 = vpop.f32.mrb[0].mxu0
        %v2135 = vadd.f32 %v588, %v2134
        %2136 = vmatprep.mubr.bf16.mxu0 %v1041
        %2137 = vmatmul.mubr.bf16.gmra.mrb[0].mxu0 %v1040
        %v2138 = vpop.f32.mrb[0].mxu0
        %v2139 = vadd.f32 %v584, %v2138
        %v2140 = vpop.f32.mrb[0].mxu0
        %v2141 = vadd.f32 %v588, %v2140
        %v2142 = vpop.f32.mrb[0].mxu0
        %v2143 = vadd.f32 %v584, %v2142
        %v2144 = vpop.f32.mrb[0].mxu0
        %v2145 = vadd.f32 %v588, %v2144
        %2146 = vmatprep.mubr.bf16.mxu0 %v1047
        %2147 = vmatmul.mubr.bf16.gmra.mrb[0].mxu0 %v1046
        %v2148 = vpop.f32.mrb[0].mxu0
        %v2149 = vadd.f32 %v584, %v2148
        %v2150 = vpop.f32.mrb[0].mxu0
        %v2151 = vadd.f32 %v588, %v2150
        %v2152 = vpop.f32.mrb[0].mxu0
        %v2153 = vadd.f32 %v584, %v2152
        %v2154 = vpop.f32.mrb[0].mxu0
        %v2155 = vadd.f32 %v588, %v2154
        %2156 = vmatprep.mubr.bf16.mxu0 %v1053
        %2157 = vmatmul.mubr.bf16.gmra.mrb[0].mxu0 %v1052
        %v2158 = vpop.f32.mrb[0].mxu0
        %v2159 = vadd.f32 %v584, %v2158
        %v2160 = vpop.f32.mrb[0].mxu0
        %v2161 = vadd.f32 %v588, %v2160
        %v2162 = vpop.f32.mrb[0].mxu0
        %v2163 = vadd.f32 %v584, %v2162
        %v2164 = vpop.f32.mrb[0].mxu0
        %v2165 = vadd.f32 %v588, %v2164
        %2166 = vmatprep.mubr.bf16.mxu0 %v1059
        %2167 = vmatmul.mubr.bf16.gmra.mrb[0].mxu0 %v1058
        %v2168 = vpop.f32.mrb[0].mxu0
        %v2169 = vadd.f32 %v584, %v2168
        %v2170 = vpop.f32.mrb[0].mxu0
        %v2171 = vadd.f32 %v588, %v2170
        %v2172 = vpop.f32.mrb[0].mxu0
        %v2173 = vadd.f32 %v584, %v2172
        %v2174 = vpop.f32.mrb[0].mxu0
        %v2175 = vadd.f32 %v588, %v2174
        %2176 = vmatprep.mubr.bf16.mxu0 %v1065
        %2177 = vmatmul.mubr.bf16.gmra.mrb[0].mxu0 %v1064
        %v2178 = vpop.f32.mrb[0].mxu0
        %v2179 = vadd.f32 %v584, %v2178
        %v2180 = vpop.f32.mrb[0].mxu0
        %v2181 = vadd.f32 %v588, %v2180
        %v2182 = vpop.f32.mrb[0].mxu0
        %v2183 = vadd.f32 %v584, %v2182
        %v2184 = vpop.f32.mrb[0].mxu0
        %v2185 = vadd.f32 %v588, %v2184
        %2186 = vmatprep.mubr.bf16.mxu0 %v1071
        %2187 = vmatmul.mubr.bf16.gmra.mrb[0].mxu0 %v1070
        %v2188 = vpop.f32.mrb[0].mxu0
        %v2189 = vadd.f32 %v584, %v2188
        %v2190 = vpop.f32.mrb[0].mxu0
        %v2191 = vadd.f32 %v588, %v2190
        %v2192 = vpop.f32.mrb[0].mxu0
        %v2193 = vadd.f32 %v584, %v2192
        %v2194 = vpop.f32.mrb[0].mxu0
        %v2195 = vadd.f32 %v588, %v2194
        %2196 = vmatprep.mubr.bf16.mxu0 %v1077
        %2197 = vmatmul.mubr.bf16.gmra.mrb[0].mxu0 %v1076
        %v2198 = vpop.f32.mrb[0].mxu0
        %v2199 = vadd.f32 %v584, %v2198
        %v2200 = vpop.f32.mrb[0].mxu0
        %v2201 = vadd.f32 %v588, %v2200
        %v2202 = vpop.f32.mrb[0].mxu0
        %v2203 = vadd.f32 %v584, %v2202
        %v2204 = vpop.f32.mrb[0].mxu0
        %v2205 = vadd.f32 %v588, %v2204
        %2206 = vmatprep.mubr.bf16.mxu0 %v1083
        %2207 = vmatmul.mubr.bf16.gmra.mrb[0].mxu0 %v1082
        %v2208 = vpop.f32.mrb[0].mxu0
        %v2209 = vadd.f32 %v584, %v2208
        %v2210 = vpop.f32.mrb[0].mxu0
        %v2211 = vadd.f32 %v588, %v2210
        %v2212 = vpop.f32.mrb[0].mxu0
        %v2213 = vadd.f32 %v584, %v2212
        %v2214 = vpop.f32.mrb[0].mxu0
        %v2215 = vadd.f32 %v588, %v2214
        %2216 = vmatprep.mubr.bf16.mxu0 %v1089
        %2217 = vmatmul.mubr.bf16.gmra.mrb[0].mxu0 %v1088
        %v2218 = vpop.f32.mrb[0].mxu0
        %v2219 = vadd.f32 %v584, %v2218
        %v2220 = vpop.f32.mrb[0].mxu0
        %v2221 = vadd.f32 %v588, %v2220
        %v2222 = vpop.f32.mrb[0].mxu0
        %v2223 = vadd.f32 %v584, %v2222
        %v2224 = vpop.f32.mrb[0].mxu0
        %v2225 = vadd.f32 %v588, %v2224
        %2226 = vmatprep.mubr.bf16.mxu0 %v1095
        %2227 = vmatmul.mubr.bf16.gmra.mrb[0].mxu0 %v1094
        %v2228 = vpop.f32.mrb[0].mxu0
        %v2229 = vadd.f32 %v584, %v2228
        %v2230 = vpop.f32.mrb[0].mxu0
        %v2231 = vadd.f32 %v588, %v2230
        %v2232 = vpop.f32.mrb[0].mxu0
        %v2233 = vadd.f32 %v584, %v2232
        %v2234 = vpop.f32.mrb[0].mxu0
        %v2235 = vadd.f32 %v588, %v2234
        %2236 = vmatprep.mubr.bf16.mxu0 %v1101
        %2237 = vmatmul.mubr.bf16.gmra.mrb[0].mxu0 %v1100
        %v2238 = vpop.f32.mrb[0].mxu0
        %v2239 = vadd.f32 %v584, %v2238
        %v2240 = vpop.f32.mrb[0].mxu0
        %v2241 = vadd.f32 %v588, %v2240
        %v2242 = vpop.f32.mrb[0].mxu0
        %v2243 = vadd.f32 %v584, %v2242
        %v2244 = vpop.f32.mrb[0].mxu0
        %v2245 = vadd.f32 %v588, %v2244
        %2246 = vmatprep.mubr.bf16.mxu0 %v1107
        %2247 = vmatmul.mubr.bf16.gmra.mrb[0].mxu0 %v1106
        %v2248 = vpop.f32.mrb[0].mxu0
        %v2249 = vadd.f32 %v584, %v2248
        %v2250 = vpop.f32.mrb[0].mxu0
        %v2251 = vadd.f32 %v588, %v2250
        %v2252 = vpop.f32.mrb[0].mxu0
        %v2253 = vadd.f32 %v584, %v2252
        %v2254 = vpop.f32.mrb[0].mxu0
        %v2255 = vadd.f32 %v588, %v2254
        %2256 = vmatprep.mubr.bf16.mxu0 %v1113
        %2257 = vmatmul.mubr.bf16.gmra.mrb[0].mxu0 %v1112
        %v2258 = vpop.f32.mrb[0].mxu0
        %v2259 = vadd.f32 %v584, %v2258
        %v2260 = vpop.f32.mrb[0].mxu0
        %v2261 = vadd.f32 %v588, %v2260
        %v2262 = vpop.f32.mrb[0].mxu0
        %v2263 = vadd.f32 %v584, %v2262
        %v2264 = vpop.f32.mrb[0].mxu0
        %v2265 = vadd.f32 %v588, %v2264
        %2266 = vmatprep.mubr.bf16.mxu0 %v1119
        %2267 = vmatmul.mubr.bf16.gmra.mrb[0].mxu0 %v1118
        %v2268 = vpop.f32.mrb[0].mxu0
        %v2269 = vadd.f32 %v584, %v2268
        %v2270 = vpop.f32.mrb[0].mxu0
        %v2271 = vadd.f32 %v588, %v2270
        %v2272 = vpop.f32.mrb[0].mxu0
        %v2273 = vadd.f32 %v584, %v2272
        %v2274 = vpop.f32.mrb[0].mxu0
        %v2275 = vadd.f32 %v588, %v2274
        %2276 = vmatprep.mubr.bf16.mxu0 %v1125
        %2277 = vmatmul.mubr.bf16.gmra.mrb[0].mxu0 %v1124
        %v2278 = vpop.f32.mrb[0].mxu0
        %v2279 = vadd.f32 %v584, %v2278
        %v2280 = vpop.f32.mrb[0].mxu0
        %v2281 = vadd.f32 %v588, %v2280
        %v2282 = vpop.f32.mrb[0].mxu0
        %v2283 = vadd.f32 %v584, %v2282
        %v2284 = vpop.f32.mrb[0].mxu0
        %v2285 = vadd.f32 %v588, %v2284
        %2286 = vmatprep.mubr.bf16.mxu0 %v1131
        %2287 = vmatmul.mubr.bf16.gmra.mrb[0].mxu0 %v1130
        %v2288 = vpop.f32.mrb[0].mxu0
        %v2289 = vadd.f32 %v584, %v2288
        %v2290 = vpop.f32.mrb[0].mxu0
        %v2291 = vadd.f32 %v588, %v2290
        %v2292 = vpop.f32.mrb[0].mxu0
        %v2293 = vadd.f32 %v584, %v2292
        %v2294 = vpop.f32.mrb[0].mxu0
        %v2295 = vadd.f32 %v588, %v2294
        %2296 = vmatprep.mubr.bf16.mxu0 %v1137
        %2297 = vmatmul.mubr.bf16.gmra.mrb[0].mxu0 %v1136
        %v2298 = vpop.f32.mrb[0].mxu0
        %v2299 = vadd.f32 %v584, %v2298
        %v2300 = vpop.f32.mrb[0].mxu0
        %v2301 = vadd.f32 %v588, %v2300
        %v2302 = vpop.f32.mrb[0].mxu0
        %v2303 = vadd.f32 %v584, %v2302
        %v2304 = vpop.f32.mrb[0].mxu0
        %v2305 = vadd.f32 %v588, %v2304
        %2306 = vmatprep.mubr.bf16.mxu0 %v1143
        %2307 = vmatmul.mubr.bf16.gmra.mrb[0].mxu0 %v1142
        %v2308 = vpop.f32.mrb[0].mxu0
        %v2309 = vadd.f32 %v584, %v2308
        %v2310 = vpop.f32.mrb[0].mxu0
        %v2311 = vadd.f32 %v588, %v2310
        %v2312 = vpop.f32.mrb[0].mxu0
        %v2313 = vadd.f32 %v584, %v2312
        %v2314 = vpop.f32.mrb[0].mxu0
        %v2315 = vadd.f32 %v588, %v2314
        %2316 = vmatprep.mubr.bf16.mxu0 %v1149
        %2317 = vmatmul.mubr.bf16.gmra.mrb[0].mxu0 %v1148
        %v2318 = vpop.f32.mrb[0].mxu0
        %v2319 = vadd.f32 %v584, %v2318
        %v2320 = vpop.f32.mrb[0].mxu0
        %v2321 = vadd.f32 %v588, %v2320
        %v2322 = vpop.f32.mrb[0].mxu0
        %v2323 = vadd.f32 %v584, %v2322
        %v2324 = vpop.f32.mrb[0].mxu0
        %v2325 = vadd.f32 %v588, %v2324
        %2326 = vmatprep.mubr.bf16.mxu0 %v1155
        %2327 = vmatmul.mubr.bf16.gmra.mrb[0].mxu0 %v1154
        %v2328 = vpop.f32.mrb[0].mxu0
        %v2329 = vadd.f32 %v584, %v2328
        %v2330 = vpop.f32.mrb[0].mxu0
        %v2331 = vadd.f32 %v588, %v2330
        %v2332 = vpop.f32.mrb[0].mxu0
        %v2333 = vadd.f32 %v584, %v2332
        %v2334 = vpop.f32.mrb[0].mxu0
        %v2335 = vadd.f32 %v588, %v2334
        %2336 = vmatprep.mubr.bf16.mxu0 %v1161
        %2337 = vmatmul.mubr.bf16.gmra.mrb[0].mxu0 %v1160
        %v2338 = vpop.f32.mrb[0].mxu0
        %v2339 = vadd.f32 %v584, %v2338
        %v2340 = vpop.f32.mrb[0].mxu0
        %v2341 = vadd.f32 %v588, %v2340
        %v2342 = vpop.f32.mrb[0].mxu0
        %v2343 = vadd.f32 %v584, %v2342
        %v2344 = vpop.f32.mrb[0].mxu0
        %v2345 = vadd.f32 %v588, %v2344
        %2346 = vmatprep.mubr.bf16.mxu0 %v1167
        %2347 = vmatmul.mubr.bf16.gmra.mrb[0].mxu0 %v1166
        %v2348 = vpop.f32.mrb[0].mxu0
        %v2349 = vadd.f32 %v584, %v2348
        %v2350 = vpop.f32.mrb[0].mxu0
        %v2351 = vadd.f32 %v588, %v2350
        %v2352 = vpop.f32.mrb[0].mxu0
        %v2353 = vadd.f32 %v584, %v2352
        %v2354 = vpop.f32.mrb[0].mxu0
        %v2355 = vadd.f32 %v588, %v2354
        %2356 = vdwg.mxu0
        %2357 = vmatprep.subr.bf16.mxu0 %v1845
        %2358 = vmatpush1.bf16.msra.mxu0 %v1844
        %2359 = vmatprep.subr.bf16.mxu0 %v1848
        %2360 = vmatpush1.bf16.msra.mxu0 %v1847
        %2361 = vmatprep.subr.bf16.mxu0 %v1851
        %2362 = vmatpush1.bf16.msra.mxu0 %v1850
        %2363 = vmatprep.subr.bf16.mxu0 %v1854
        %2364 = vmatpush1.bf16.msra.mxu0 %v1853
        %2365 = vmatprep.subr.bf16.mxu0 %v1857
        %2366 = vmatpush1.bf16.msra.mxu0 %v1856
        %2367 = vmatprep.subr.bf16.mxu0 %v1860
        %2368 = vmatpush1.bf16.msra.mxu0 %v1859
        %2369 = vmatprep.subr.bf16.mxu0 %v1863
        %2370 = vmatpush1.bf16.msra.mxu0 %v1862
        %2371 = vmatprep.subr.bf16.mxu0 %v1866
        %2372 = vmatpush1.bf16.msra.mxu0 %v1865
        %2373 = vmatprep.subr.bf16.mxu0 %v1869
        %2374 = vmatpush1.bf16.msra.mxu0 %v1868
        %2375 = vmatprep.subr.bf16.mxu0 %v1872
        %2376 = vmatpush1.bf16.msra.mxu0 %v1871
        %2377 = vmatprep.subr.bf16.mxu0 %v1875
        %2378 = vmatpush1.bf16.msra.mxu0 %v1874
        %2379 = vmatprep.subr.bf16.mxu0 %v1878
        %2380 = vmatpush1.bf16.msra.mxu0 %v1877
        %2381 = vmatprep.subr.bf16.mxu0 %v1881
        %2382 = vmatpush1.bf16.msra.mxu0 %v1880
        %2383 = vmatprep.subr.bf16.mxu0 %v1884
        %2384 = vmatpush1.bf16.msra.mxu0 %v1883
        %2385 = vmatprep.subr.bf16.mxu0 %v1887
        %2386 = vmatpush1.bf16.msra.mxu0 %v1886
        %2387 = vmatprep.subr.bf16.mxu0 %v1890
        %2388 = vmatpush1.bf16.msra.mxu0 %v1889
        %2389 = vmatprep.mubr.bf16.mxu0 %v1031
        %2390 = vmatmul.mubr.bf16.gmra.mrb[0].mxu0 %v1030
        %v2391 = vpop.f32.mrb[0].mxu0
        %v2392 = vadd.f32 %v2119, %v2391
        %v2393 = vpop.f32.mrb[0].mxu0
        %v2394 = vadd.f32 %v2121, %v2393
        %v2395 = vpop.f32.mrb[0].mxu0
        %v2396 = vadd.f32 %v2123, %v2395
        %v2397 = vpop.f32.mrb[0].mxu0
        %v2398 = vadd.f32 %v2125, %v2397
        %2399 = vmatprep.mubr.bf16.mxu0 %v1037
        %2400 = vmatmul.mubr.bf16.gmra.mrb[0].mxu0 %v1036
        %v2401 = vpop.f32.mrb[0].mxu0
        %v2402 = vadd.f32 %v2129, %v2401
        %v2403 = vpop.f32.mrb[0].mxu0
        %v2404 = vadd.f32 %v2131, %v2403
        %v2405 = vpop.f32.mrb[0].mxu0
        %v2406 = vadd.f32 %v2133, %v2405
        %v2407 = vpop.f32.mrb[0].mxu0
        %v2408 = vadd.f32 %v2135, %v2407
        %2409 = vmatprep.mubr.bf16.mxu0 %v1043
        %2410 = vmatmul.mubr.bf16.gmra.mrb[0].mxu0 %v1042
        %v2411 = vpop.f32.mrb[0].mxu0
        %v2412 = vadd.f32 %v2139, %v2411
        %v2413 = vpop.f32.mrb[0].mxu0
        %v2414 = vadd.f32 %v2141, %v2413
        %v2415 = vpop.f32.mrb[0].mxu0
        %v2416 = vadd.f32 %v2143, %v2415
        %v2417 = vpop.f32.mrb[0].mxu0
        %v2418 = vadd.f32 %v2145, %v2417
        %2419 = vmatprep.mubr.bf16.mxu0 %v1049
        %2420 = vmatmul.mubr.bf16.gmra.mrb[0].mxu0 %v1048
        %v2421 = vpop.f32.mrb[0].mxu0
        %v2422 = vadd.f32 %v2149, %v2421
        %v2423 = vpop.f32.mrb[0].mxu0
        %v2424 = vadd.f32 %v2151, %v2423
        %v2425 = vpop.f32.mrb[0].mxu0
        %v2426 = vadd.f32 %v2153, %v2425
        %v2427 = vpop.f32.mrb[0].mxu0
        %v2428 = vadd.f32 %v2155, %v2427
        %2429 = vmatprep.mubr.bf16.mxu0 %v1055
        %2430 = vmatmul.mubr.bf16.gmra.mrb[0].mxu0 %v1054
        %v2431 = vpop.f32.mrb[0].mxu0
        %v2432 = vadd.f32 %v2159, %v2431
        %v2433 = vpop.f32.mrb[0].mxu0
        %v2434 = vadd.f32 %v2161, %v2433
        %v2435 = vpop.f32.mrb[0].mxu0
        %v2436 = vadd.f32 %v2163, %v2435
        %v2437 = vpop.f32.mrb[0].mxu0
        %v2438 = vadd.f32 %v2165, %v2437
        %2439 = vmatprep.mubr.bf16.mxu0 %v1061
        %2440 = vmatmul.mubr.bf16.gmra.mrb[0].mxu0 %v1060
        %v2441 = vpop.f32.mrb[0].mxu0
        %v2442 = vadd.f32 %v2169, %v2441
        %v2443 = vpop.f32.mrb[0].mxu0
        %v2444 = vadd.f32 %v2171, %v2443
        %v2445 = vpop.f32.mrb[0].mxu0
        %v2446 = vadd.f32 %v2173, %v2445
        %v2447 = vpop.f32.mrb[0].mxu0
        %v2448 = vadd.f32 %v2175, %v2447
        %2449 = vmatprep.mubr.bf16.mxu0 %v1067
        %2450 = vmatmul.mubr.bf16.gmra.mrb[0].mxu0 %v1066
        %v2451 = vpop.f32.mrb[0].mxu0
        %v2452 = vadd.f32 %v2179, %v2451
        %v2453 = vpop.f32.mrb[0].mxu0
        %v2454 = vadd.f32 %v2181, %v2453
        %v2455 = vpop.f32.mrb[0].mxu0
        %v2456 = vadd.f32 %v2183, %v2455
        %v2457 = vpop.f32.mrb[0].mxu0
        %v2458 = vadd.f32 %v2185, %v2457
        %2459 = vmatprep.mubr.bf16.mxu0 %v1073
        %2460 = vmatmul.mubr.bf16.gmra.mrb[0].mxu0 %v1072
        %v2461 = vpop.f32.mrb[0].mxu0
        %v2462 = vadd.f32 %v2189, %v2461
        %v2463 = vpop.f32.mrb[0].mxu0
        %v2464 = vadd.f32 %v2191, %v2463
        %v2465 = vpop.f32.mrb[0].mxu0
        %v2466 = vadd.f32 %v2193, %v2465
        %v2467 = vpop.f32.mrb[0].mxu0
        %v2468 = vadd.f32 %v2195, %v2467
        %2469 = vmatprep.mubr.bf16.mxu0 %v1079
        %2470 = vmatmul.mubr.bf16.gmra.mrb[0].mxu0 %v1078
        %v2471 = vpop.f32.mrb[0].mxu0
        %v2472 = vadd.f32 %v2199, %v2471
        %v2473 = vpop.f32.mrb[0].mxu0
        %v2474 = vadd.f32 %v2201, %v2473
        %v2475 = vpop.f32.mrb[0].mxu0
        %v2476 = vadd.f32 %v2203, %v2475
        %v2477 = vpop.f32.mrb[0].mxu0
        %v2478 = vadd.f32 %v2205, %v2477
        %2479 = vmatprep.mubr.bf16.mxu0 %v1085
        %2480 = vmatmul.mubr.bf16.gmra.mrb[0].mxu0 %v1084
        %v2481 = vpop.f32.mrb[0].mxu0
        %v2482 = vadd.f32 %v2209, %v2481
        %v2483 = vpop.f32.mrb[0].mxu0
        %v2484 = vadd.f32 %v2211, %v2483
        %v2485 = vpop.f32.mrb[0].mxu0
        %v2486 = vadd.f32 %v2213, %v2485
        %v2487 = vpop.f32.mrb[0].mxu0
        %v2488 = vadd.f32 %v2215, %v2487
        %2489 = vmatprep.mubr.bf16.mxu0 %v1091
        %2490 = vmatmul.mubr.bf16.gmra.mrb[0].mxu0 %v1090
        %v2491 = vpop.f32.mrb[0].mxu0
        %v2492 = vadd.f32 %v2219, %v2491
        %v2493 = vpop.f32.mrb[0].mxu0
        %v2494 = vadd.f32 %v2221, %v2493
        %v2495 = vpop.f32.mrb[0].mxu0
        %v2496 = vadd.f32 %v2223, %v2495
        %v2497 = vpop.f32.mrb[0].mxu0
        %v2498 = vadd.f32 %v2225, %v2497
        %2499 = vmatprep.mubr.bf16.mxu0 %v1097
        %2500 = vmatmul.mubr.bf16.gmra.mrb[0].mxu0 %v1096
        %v2501 = vpop.f32.mrb[0].mxu0
        %v2502 = vadd.f32 %v2229, %v2501
        %v2503 = vpop.f32.mrb[0].mxu0
        %v2504 = vadd.f32 %v2231, %v2503
        %v2505 = vpop.f32.mrb[0].mxu0
        %v2506 = vadd.f32 %v2233, %v2505
        %v2507 = vpop.f32.mrb[0].mxu0
        %v2508 = vadd.f32 %v2235, %v2507
        %2509 = vmatprep.mubr.bf16.mxu0 %v1103
        %2510 = vmatmul.mubr.bf16.gmra.mrb[0].mxu0 %v1102
        %v2511 = vpop.f32.mrb[0].mxu0
        %v2512 = vadd.f32 %v2239, %v2511
        %v2513 = vpop.f32.mrb[0].mxu0
        %v2514 = vadd.f32 %v2241, %v2513
        %v2515 = vpop.f32.mrb[0].mxu0
        %v2516 = vadd.f32 %v2243, %v2515
        %v2517 = vpop.f32.mrb[0].mxu0
        %v2518 = vadd.f32 %v2245, %v2517
        %2519 = vmatprep.mubr.bf16.mxu0 %v1109
        %2520 = vmatmul.mubr.bf16.gmra.mrb[0].mxu0 %v1108
        %v2521 = vpop.f32.mrb[0].mxu0
        %v2522 = vadd.f32 %v2249, %v2521
        %v2523 = vpop.f32.mrb[0].mxu0
        %v2524 = vadd.f32 %v2251, %v2523
        %v2525 = vpop.f32.mrb[0].mxu0
        %v2526 = vadd.f32 %v2253, %v2525
        %v2527 = vpop.f32.mrb[0].mxu0
        %v2528 = vadd.f32 %v2255, %v2527
        %2529 = vmatprep.mubr.bf16.mxu0 %v1115
        %2530 = vmatmul.mubr.bf16.gmra.mrb[0].mxu0 %v1114
        %v2531 = vpop.f32.mrb[0].mxu0
        %v2532 = vadd.f32 %v2259, %v2531
        %v2533 = vpop.f32.mrb[0].mxu0
        %v2534 = vadd.f32 %v2261, %v2533
        %v2535 = vpop.f32.mrb[0].mxu0
        %v2536 = vadd.f32 %v2263, %v2535
        %v2537 = vpop.f32.mrb[0].mxu0
        %v2538 = vadd.f32 %v2265, %v2537
        %2539 = vmatprep.mubr.bf16.mxu0 %v1121
        %2540 = vmatmul.mubr.bf16.gmra.mrb[0].mxu0 %v1120
        %v2541 = vpop.f32.mrb[0].mxu0
        %v2542 = vadd.f32 %v2269, %v2541
        %v2543 = vpop.f32.mrb[0].mxu0
        %v2544 = vadd.f32 %v2271, %v2543
        %v2545 = vpop.f32.mrb[0].mxu0
        %v2546 = vadd.f32 %v2273, %v2545
        %v2547 = vpop.f32.mrb[0].mxu0
        %v2548 = vadd.f32 %v2275, %v2547
        %2549 = vmatprep.mubr.bf16.mxu0 %v1127
        %2550 = vmatmul.mubr.bf16.gmra.mrb[0].mxu0 %v1126
        %v2551 = vpop.f32.mrb[0].mxu0
        %v2552 = vadd.f32 %v2279, %v2551
        %v2553 = vpop.f32.mrb[0].mxu0
        %v2554 = vadd.f32 %v2281, %v2553
        %v2555 = vpop.f32.mrb[0].mxu0
        %v2556 = vadd.f32 %v2283, %v2555
        %v2557 = vpop.f32.mrb[0].mxu0
        %v2558 = vadd.f32 %v2285, %v2557
        %2559 = vmatprep.mubr.bf16.mxu0 %v1133
        %2560 = vmatmul.mubr.bf16.gmra.mrb[0].mxu0 %v1132
        %v2561 = vpop.f32.mrb[0].mxu0
        %v2562 = vadd.f32 %v2289, %v2561
        %v2563 = vpop.f32.mrb[0].mxu0
        %v2564 = vadd.f32 %v2291, %v2563
        %v2565 = vpop.f32.mrb[0].mxu0
        %v2566 = vadd.f32 %v2293, %v2565
        %v2567 = vpop.f32.mrb[0].mxu0
        %v2568 = vadd.f32 %v2295, %v2567
        %2569 = vmatprep.mubr.bf16.mxu0 %v1139
        %2570 = vmatmul.mubr.bf16.gmra.mrb[0].mxu0 %v1138
        %v2571 = vpop.f32.mrb[0].mxu0
        %v2572 = vadd.f32 %v2299, %v2571
        %v2573 = vpop.f32.mrb[0].mxu0
        %v2574 = vadd.f32 %v2301, %v2573
        %v2575 = vpop.f32.mrb[0].mxu0
        %v2576 = vadd.f32 %v2303, %v2575
        %v2577 = vpop.f32.mrb[0].mxu0
        %v2578 = vadd.f32 %v2305, %v2577
        %2579 = vmatprep.mubr.bf16.mxu0 %v1145
        %2580 = vmatmul.mubr.bf16.gmra.mrb[0].mxu0 %v1144
        %v2581 = vpop.f32.mrb[0].mxu0
        %v2582 = vadd.f32 %v2309, %v2581
        %v2583 = vpop.f32.mrb[0].mxu0
        %v2584 = vadd.f32 %v2311, %v2583
        %v2585 = vpop.f32.mrb[0].mxu0
        %v2586 = vadd.f32 %v2313, %v2585
        %v2587 = vpop.f32.mrb[0].mxu0
        %v2588 = vadd.f32 %v2315, %v2587
        %2589 = vmatprep.mubr.bf16.mxu0 %v1151
        %2590 = vmatmul.mubr.bf16.gmra.mrb[0].mxu0 %v1150
        %v2591 = vpop.f32.mrb[0].mxu0
        %v2592 = vadd.f32 %v2319, %v2591
        %v2593 = vpop.f32.mrb[0].mxu0
        %v2594 = vadd.f32 %v2321, %v2593
        %v2595 = vpop.f32.mrb[0].mxu0
        %v2596 = vadd.f32 %v2323, %v2595
        %v2597 = vpop.f32.mrb[0].mxu0
        %v2598 = vadd.f32 %v2325, %v2597
        %2599 = vmatprep.mubr.bf16.mxu0 %v1157
        %2600 = vmatmul.mubr.bf16.gmra.mrb[0].mxu0 %v1156
        %v2601 = vpop.f32.mrb[0].mxu0
        %v2602 = vadd.f32 %v2329, %v2601
        %v2603 = vpop.f32.mrb[0].mxu0
        %v2604 = vadd.f32 %v2331, %v2603
        %v2605 = vpop.f32.mrb[0].mxu0
        %v2606 = vadd.f32 %v2333, %v2605
        %v2607 = vpop.f32.mrb[0].mxu0
        %v2608 = vadd.f32 %v2335, %v2607
        %2609 = vmatprep.mubr.bf16.mxu0 %v1163
        %2610 = vmatmul.mubr.bf16.gmra.mrb[0].mxu0 %v1162
        %v2611 = vpop.f32.mrb[0].mxu0
        %v2612 = vadd.f32 %v2339, %v2611
        %v2613 = vpop.f32.mrb[0].mxu0
        %v2614 = vadd.f32 %v2341, %v2613
        %v2615 = vpop.f32.mrb[0].mxu0
        %v2616 = vadd.f32 %v2343, %v2615
        %v2617 = vpop.f32.mrb[0].mxu0
        %v2618 = vadd.f32 %v2345, %v2617
        %2619 = vmatprep.mubr.bf16.mxu0 %v1169
        %2620 = vmatmul.mubr.bf16.gmra.mrb[0].mxu0 %v1168
        %v2621 = vpop.f32.mrb[0].mxu0
        %v2622 = vadd.f32 %v2349, %v2621
        %v2623 = vpop.f32.mrb[0].mxu0
        %v2624 = vadd.f32 %v2351, %v2623
        %v2625 = vpop.f32.mrb[0].mxu0
        %v2626 = vadd.f32 %v2353, %v2625
        %v2627 = vpop.f32.mrb[0].mxu0
        %v2628 = vadd.f32 %v2355, %v2627
        %2629 = vdwg.mxu0
        %2630 = vmatprep.subr.bf16.mxu0 %v1893
        %2631 = vmatpush1.bf16.msra.mxu0 %v1892
        %2632 = vmatprep.subr.bf16.mxu0 %v1896
        %2633 = vmatpush1.bf16.msra.mxu0 %v1895
        %2634 = vmatprep.subr.bf16.mxu0 %v1899
        %2635 = vmatpush1.bf16.msra.mxu0 %v1898
        %2636 = vmatprep.subr.bf16.mxu0 %v1902
        %2637 = vmatpush1.bf16.msra.mxu0 %v1901
        %2638 = vmatprep.subr.bf16.mxu0 %v1905
        %2639 = vmatpush1.bf16.msra.mxu0 %v1904
        %2640 = vmatprep.subr.bf16.mxu0 %v1908
        %2641 = vmatpush1.bf16.msra.mxu0 %v1907
        %2642 = vmatprep.subr.bf16.mxu0 %v1911
        %2643 = vmatpush1.bf16.msra.mxu0 %v1910
        %2644 = vmatprep.subr.bf16.mxu0 %v1914
        %2645 = vmatpush1.bf16.msra.mxu0 %v1913
        %2646 = vmatprep.subr.bf16.mxu0 %v1917
        %2647 = vmatpush1.bf16.msra.mxu0 %v1916
        %2648 = vmatprep.subr.bf16.mxu0 %v1920
        %2649 = vmatpush1.bf16.msra.mxu0 %v1919
        %2650 = vmatprep.subr.bf16.mxu0 %v1923
        %2651 = vmatpush1.bf16.msra.mxu0 %v1922
        %2652 = vmatprep.subr.bf16.mxu0 %v1926
        %2653 = vmatpush1.bf16.msra.mxu0 %v1925
        %2654 = vmatprep.subr.bf16.mxu0 %v1929
        %2655 = vmatpush1.bf16.msra.mxu0 %v1928
        %2656 = vmatprep.subr.bf16.mxu0 %v1932
        %2657 = vmatpush1.bf16.msra.mxu0 %v1931
        %2658 = vmatprep.subr.bf16.mxu0 %v1935
        %2659 = vmatpush1.bf16.msra.mxu0 %v1934
        %2660 = vmatprep.subr.bf16.mxu0 %v1938
        %2661 = vmatpush1.bf16.msra.mxu0 %v1937
        %2662 = vmatprep.mubr.bf16.mxu0 %v1033
        %2663 = vmatmul.mubr.bf16.gmra.mrb[0].mxu0 %v1032
        %v2664 = vpop.f32.mrb[0].mxu0
        %v2665 = vadd.f32 %v2392, %v2664
        %v2666 = vpop.f32.mrb[0].mxu0
        %v2667 = vadd.f32 %v2394, %v2666
        %v2668 = vpop.f32.mrb[0].mxu0
        %v2669 = vadd.f32 %v2396, %v2668
        %v2670 = vpop.f32.mrb[0].mxu0
        %v2671 = vadd.f32 %v2398, %v2670
        %2672 = vmatprep.mubr.bf16.mxu0 %v1039
        %2673 = vmatmul.mubr.bf16.gmra.mrb[0].mxu0 %v1038
        %v2674 = vpop.f32.mrb[0].mxu0
        %v2675 = vadd.f32 %v2402, %v2674
        %v2676 = vpop.f32.mrb[0].mxu0
        %v2677 = vadd.f32 %v2404, %v2676
        %v2678 = vpop.f32.mrb[0].mxu0
        %v2679 = vadd.f32 %v2406, %v2678
        %v2680 = vpop.f32.mrb[0].mxu0
        %v2681 = vadd.f32 %v2408, %v2680
        %2682 = vmatprep.mubr.bf16.mxu0 %v1045
        %2683 = vmatmul.mubr.bf16.gmra.mrb[0].mxu0 %v1044
        %v2684 = vpop.f32.mrb[0].mxu0
        %v2685 = vadd.f32 %v2412, %v2684
        %v2686 = vpop.f32.mrb[0].mxu0
        %v2687 = vadd.f32 %v2414, %v2686
        %v2688 = vpop.f32.mrb[0].mxu0
        %v2689 = vadd.f32 %v2416, %v2688
        %v2690 = vpop.f32.mrb[0].mxu0
        %v2691 = vadd.f32 %v2418, %v2690
        %2692 = vmatprep.mubr.bf16.mxu0 %v1051
        %2693 = vmatmul.mubr.bf16.gmra.mrb[0].mxu0 %v1050
        %v2694 = vpop.f32.mrb[0].mxu0
        %v2695 = vadd.f32 %v2422, %v2694
        %v2696 = vpop.f32.mrb[0].mxu0
        %v2697 = vadd.f32 %v2424, %v2696
        %v2698 = vpop.f32.mrb[0].mxu0
        %v2699 = vadd.f32 %v2426, %v2698
        %v2700 = vpop.f32.mrb[0].mxu0
        %v2701 = vadd.f32 %v2428, %v2700
        %2702 = vmatprep.mubr.bf16.mxu0 %v1057
        %2703 = vmatmul.mubr.bf16.gmra.mrb[0].mxu0 %v1056
        %v2704 = vpop.f32.mrb[0].mxu0
        %v2705 = vadd.f32 %v2432, %v2704
        %v2706 = vpop.f32.mrb[0].mxu0
        %v2707 = vadd.f32 %v2434, %v2706
        %v2708 = vpop.f32.mrb[0].mxu0
        %v2709 = vadd.f32 %v2436, %v2708
        %v2710 = vpop.f32.mrb[0].mxu0
        %v2711 = vadd.f32 %v2438, %v2710
        %2712 = vmatprep.mubr.bf16.mxu0 %v1063
        %2713 = vmatmul.mubr.bf16.gmra.mrb[0].mxu0 %v1062
        %v2714 = vpop.f32.mrb[0].mxu0
        %v2715 = vadd.f32 %v2442, %v2714
        %v2716 = vpop.f32.mrb[0].mxu0
        %v2717 = vadd.f32 %v2444, %v2716
        %v2718 = vpop.f32.mrb[0].mxu0
        %v2719 = vadd.f32 %v2446, %v2718
        %v2720 = vpop.f32.mrb[0].mxu0
        %v2721 = vadd.f32 %v2448, %v2720
        %2722 = vmatprep.mubr.bf16.mxu0 %v1069
        %2723 = vmatmul.mubr.bf16.gmra.mrb[0].mxu0 %v1068
        %v2724 = vpop.f32.mrb[0].mxu0
        %v2725 = vadd.f32 %v2452, %v2724
        %v2726 = vpop.f32.mrb[0].mxu0
        %v2727 = vadd.f32 %v2454, %v2726
        %v2728 = vpop.f32.mrb[0].mxu0
        %v2729 = vadd.f32 %v2456, %v2728
        %v2730 = vpop.f32.mrb[0].mxu0
        %v2731 = vadd.f32 %v2458, %v2730
        %2732 = vmatprep.mubr.bf16.mxu0 %v1075
        %2733 = vmatmul.mubr.bf16.gmra.mrb[0].mxu0 %v1074
        %v2734 = vpop.f32.mrb[0].mxu0
        %v2735 = vadd.f32 %v2462, %v2734
        %v2736 = vpop.f32.mrb[0].mxu0
        %v2737 = vadd.f32 %v2464, %v2736
        %v2738 = vpop.f32.mrb[0].mxu0
        %v2739 = vadd.f32 %v2466, %v2738
        %v2740 = vpop.f32.mrb[0].mxu0
        %v2741 = vadd.f32 %v2468, %v2740
        %2742 = vmatprep.mubr.bf16.mxu0 %v1081
        %2743 = vmatmul.mubr.bf16.gmra.mrb[0].mxu0 %v1080
        %v2744 = vpop.f32.mrb[0].mxu0
        %v2745 = vadd.f32 %v2472, %v2744
        %v2746 = vpop.f32.mrb[0].mxu0
        %v2747 = vadd.f32 %v2474, %v2746
        %v2748 = vpop.f32.mrb[0].mxu0
        %v2749 = vadd.f32 %v2476, %v2748
        %v2750 = vpop.f32.mrb[0].mxu0
        %v2751 = vadd.f32 %v2478, %v2750
        %2752 = vmatprep.mubr.bf16.mxu0 %v1087
        %2753 = vmatmul.mubr.bf16.gmra.mrb[0].mxu0 %v1086
        %v2754 = vpop.f32.mrb[0].mxu0
        %v2755 = vadd.f32 %v2482, %v2754
        %v2756 = vpop.f32.mrb[0].mxu0
        %v2757 = vadd.f32 %v2484, %v2756
        %v2758 = vpop.f32.mrb[0].mxu0
        %v2759 = vadd.f32 %v2486, %v2758
        %v2760 = vpop.f32.mrb[0].mxu0
        %v2761 = vadd.f32 %v2488, %v2760
        %2762 = vmatprep.mubr.bf16.mxu0 %v1093
        %2763 = vmatmul.mubr.bf16.gmra.mrb[0].mxu0 %v1092
        %v2764 = vpop.f32.mrb[0].mxu0
        %v2765 = vadd.f32 %v2492, %v2764
        %v2766 = vpop.f32.mrb[0].mxu0
        %v2767 = vadd.f32 %v2494, %v2766
        %v2768 = vpop.f32.mrb[0].mxu0
        %v2769 = vadd.f32 %v2496, %v2768
        %v2770 = vpop.f32.mrb[0].mxu0
        %v2771 = vadd.f32 %v2498, %v2770
        %2772 = vmatprep.mubr.bf16.mxu0 %v1099
        %2773 = vmatmul.mubr.bf16.gmra.mrb[0].mxu0 %v1098
        %v2774 = vpop.f32.mrb[0].mxu0
        %v2775 = vadd.f32 %v2502, %v2774
        %v2776 = vpop.f32.mrb[0].mxu0
        %v2777 = vadd.f32 %v2504, %v2776
        %v2778 = vpop.f32.mrb[0].mxu0
        %v2779 = vadd.f32 %v2506, %v2778
        %v2780 = vpop.f32.mrb[0].mxu0
        %v2781 = vadd.f32 %v2508, %v2780
        %2782 = vmatprep.mubr.bf16.mxu0 %v1105
        %2783 = vmatmul.mubr.bf16.gmra.mrb[0].mxu0 %v1104
        %v2784 = vpop.f32.mrb[0].mxu0
        %v2785 = vadd.f32 %v2512, %v2784
        %v2786 = vpop.f32.mrb[0].mxu0
        %v2787 = vadd.f32 %v2514, %v2786
        %v2788 = vpop.f32.mrb[0].mxu0
        %v2789 = vadd.f32 %v2516, %v2788
        %v2790 = vpop.f32.mrb[0].mxu0
        %v2791 = vadd.f32 %v2518, %v2790
        %2792 = vmatprep.mubr.bf16.mxu0 %v1111
        %2793 = vmatmul.mubr.bf16.gmra.mrb[0].mxu0 %v1110
        %v2794 = vpop.f32.mrb[0].mxu0
        %v2795 = vadd.f32 %v2522, %v2794
        %v2796 = vpop.f32.mrb[0].mxu0
        %v2797 = vadd.f32 %v2524, %v2796
        %v2798 = vpop.f32.mrb[0].mxu0
        %v2799 = vadd.f32 %v2526, %v2798
        %v2800 = vpop.f32.mrb[0].mxu0
        %v2801 = vadd.f32 %v2528, %v2800
        %2802 = vmatprep.mubr.bf16.mxu0 %v1117
        %2803 = vmatmul.mubr.bf16.gmra.mrb[0].mxu0 %v1116
        %v2804 = vpop.f32.mrb[0].mxu0
        %v2805 = vadd.f32 %v2532, %v2804
        %v2806 = vpop.f32.mrb[0].mxu0
        %v2807 = vadd.f32 %v2534, %v2806
        %v2808 = vpop.f32.mrb[0].mxu0
        %v2809 = vadd.f32 %v2536, %v2808
        %v2810 = vpop.f32.mrb[0].mxu0
        %v2811 = vadd.f32 %v2538, %v2810
        %2812 = vmatprep.mubr.bf16.mxu0 %v1123
        %2813 = vmatmul.mubr.bf16.gmra.mrb[0].mxu0 %v1122
        %v2814 = vpop.f32.mrb[0].mxu0
        %v2815 = vadd.f32 %v2542, %v2814
        %v2816 = vpop.f32.mrb[0].mxu0
        %v2817 = vadd.f32 %v2544, %v2816
        %v2818 = vpop.f32.mrb[0].mxu0
        %v2819 = vadd.f32 %v2546, %v2818
        %v2820 = vpop.f32.mrb[0].mxu0
        %v2821 = vadd.f32 %v2548, %v2820
        %2822 = vmatprep.mubr.bf16.mxu0 %v1129
        %2823 = vmatmul.mubr.bf16.gmra.mrb[0].mxu0 %v1128
        %v2824 = vpop.f32.mrb[0].mxu0
        %v2825 = vadd.f32 %v2552, %v2824
        %v2826 = vpop.f32.mrb[0].mxu0
        %v2827 = vadd.f32 %v2554, %v2826
        %v2828 = vpop.f32.mrb[0].mxu0
        %v2829 = vadd.f32 %v2556, %v2828
        %v2830 = vpop.f32.mrb[0].mxu0
        %v2831 = vadd.f32 %v2558, %v2830
        %2832 = vmatprep.mubr.bf16.mxu0 %v1135
        %2833 = vmatmul.mubr.bf16.gmra.mrb[0].mxu0 %v1134
        %v2834 = vpop.f32.mrb[0].mxu0
        %v2835 = vadd.f32 %v2562, %v2834
        %v2836 = vpop.f32.mrb[0].mxu0
        %v2837 = vadd.f32 %v2564, %v2836
        %v2838 = vpop.f32.mrb[0].mxu0
        %v2839 = vadd.f32 %v2566, %v2838
        %v2840 = vpop.f32.mrb[0].mxu0
        %v2841 = vadd.f32 %v2568, %v2840
        %2842 = vmatprep.mubr.bf16.mxu0 %v1141
        %2843 = vmatmul.mubr.bf16.gmra.mrb[0].mxu0 %v1140
        %v2844 = vpop.f32.mrb[0].mxu0
        %v2845 = vadd.f32 %v2572, %v2844
        %v2846 = vpop.f32.mrb[0].mxu0
        %v2847 = vadd.f32 %v2574, %v2846
        %v2848 = vpop.f32.mrb[0].mxu0
        %v2849 = vadd.f32 %v2576, %v2848
        %v2850 = vpop.f32.mrb[0].mxu0
        %v2851 = vadd.f32 %v2578, %v2850
        %2852 = vmatprep.mubr.bf16.mxu0 %v1147
        %2853 = vmatmul.mubr.bf16.gmra.mrb[0].mxu0 %v1146
        %v2854 = vpop.f32.mrb[0].mxu0
        %v2855 = vadd.f32 %v2582, %v2854
        %v2856 = vpop.f32.mrb[0].mxu0
        %v2857 = vadd.f32 %v2584, %v2856
        %v2858 = vpop.f32.mrb[0].mxu0
        %v2859 = vadd.f32 %v2586, %v2858
        %v2860 = vpop.f32.mrb[0].mxu0
        %v2861 = vadd.f32 %v2588, %v2860
        %2862 = vmatprep.mubr.bf16.mxu0 %v1153
        %2863 = vmatmul.mubr.bf16.gmra.mrb[0].mxu0 %v1152
        %v2864 = vpop.f32.mrb[0].mxu0
        %v2865 = vadd.f32 %v2592, %v2864
        %v2866 = vpop.f32.mrb[0].mxu0
        %v2867 = vadd.f32 %v2594, %v2866
        %v2868 = vpop.f32.mrb[0].mxu0
        %v2869 = vadd.f32 %v2596, %v2868
        %v2870 = vpop.f32.mrb[0].mxu0
        %v2871 = vadd.f32 %v2598, %v2870
        %2872 = vmatprep.mubr.bf16.mxu0 %v1159
        %2873 = vmatmul.mubr.bf16.gmra.mrb[0].mxu0 %v1158
        %v2874 = vpop.f32.mrb[0].mxu0
        %v2875 = vadd.f32 %v2602, %v2874
        %v2876 = vpop.f32.mrb[0].mxu0
        %v2877 = vadd.f32 %v2604, %v2876
        %v2878 = vpop.f32.mrb[0].mxu0
        %v2879 = vadd.f32 %v2606, %v2878
        %v2880 = vpop.f32.mrb[0].mxu0
        %v2881 = vadd.f32 %v2608, %v2880
        %2882 = vmatprep.mubr.bf16.mxu0 %v1165
        %2883 = vmatmul.mubr.bf16.gmra.mrb[0].mxu0 %v1164
        %v2884 = vpop.f32.mrb[0].mxu0
        %v2885 = vadd.f32 %v2612, %v2884
        %v2886 = vpop.f32.mrb[0].mxu0
        %v2887 = vadd.f32 %v2614, %v2886
        %v2888 = vpop.f32.mrb[0].mxu0
        %v2889 = vadd.f32 %v2616, %v2888
        %v2890 = vpop.f32.mrb[0].mxu0
        %v2891 = vadd.f32 %v2618, %v2890
        %2892 = vmatprep.mubr.bf16.mxu0 %v1171
        %2893 = vmatmul.mubr.bf16.gmra.mrb[0].mxu0 %v1170
        %v2894 = vpop.f32.mrb[0].mxu0
        %v2895 = vadd.f32 %v2622, %v2894
        %v2896 = vpop.f32.mrb[0].mxu0
        %v2897 = vadd.f32 %v2624, %v2896
        %v2898 = vpop.f32.mrb[0].mxu0
        %v2899 = vadd.f32 %v2626, %v2898
        %v2900 = vpop.f32.mrb[0].mxu0
        %v2901 = vadd.f32 %v2628, %v2900
        %2902 = vdwg.mxu0
        %2903 = vmatprep.subr.bf16.mxu0 0
        %2904 = vmatpush1.bf16.msra.mxu0 %v1798
        %2905 = vmatprep.subr.bf16.mxu0 0
        %2906 = vmatpush1.bf16.msra.mxu0 %v1801
        %2907 = vmatprep.subr.bf16.mxu0 0
        %2908 = vmatpush1.bf16.msra.mxu0 %v1804
        %2909 = vmatprep.subr.bf16.mxu0 0
        %2910 = vmatpush1.bf16.msra.mxu0 %v1807
        %2911 = vmatprep.subr.bf16.mxu0 0
        %2912 = vmatpush1.bf16.msra.mxu0 %v1810
        %2913 = vmatprep.subr.bf16.mxu0 0
        %2914 = vmatpush1.bf16.msra.mxu0 %v1813
        %2915 = vmatprep.subr.bf16.mxu0 0
        %2916 = vmatpush1.bf16.msra.mxu0 %v1816
        %2917 = vmatprep.subr.bf16.mxu0 0
        %2918 = vmatpush1.bf16.msra.mxu0 %v1819
        %2919 = vmatprep.subr.bf16.mxu0 0
        %2920 = vmatpush1.bf16.msra.mxu0 %v1822
        %2921 = vmatprep.subr.bf16.mxu0 0
        %2922 = vmatpush1.bf16.msra.mxu0 %v1825
        %2923 = vmatprep.subr.bf16.mxu0 0
        %2924 = vmatpush1.bf16.msra.mxu0 %v1828
        %2925 = vmatprep.subr.bf16.mxu0 0
        %2926 = vmatpush1.bf16.msra.mxu0 %v1831
        %2927 = vmatprep.subr.bf16.mxu0 0
        %2928 = vmatpush1.bf16.msra.mxu0 %v1834
        %2929 = vmatprep.subr.bf16.mxu0 0
        %2930 = vmatpush1.bf16.msra.mxu0 %v1837
        %2931 = vmatprep.subr.bf16.mxu0 0
        %2932 = vmatpush1.bf16.msra.mxu0 %v1840
        %2933 = vmatprep.subr.bf16.mxu0 0
        %2934 = vmatpush1.bf16.msra.mxu0 %v1843
        %2935 = vmatprep.mubr.bf16.mxu0 %v1029
        %2936 = vmatmul.mubr.bf16.gmra.mrb[0].mxu0 %v1028
        %v2937 = vpop.f32.mrb[0].mxu0
        %v2938 = vadd.f32 %v592, %v2937
        %v2939 = vpop.f32.mrb[0].mxu0
        %v2940 = vpop.f32.mrb[0].mxu0
        %v2941 = vadd.f32 %v592, %v2940
        %v2942 = vpop.f32.mrb[0].mxu0
        %2943 = vmatprep.mubr.bf16.mxu0 %v1035
        %2944 = vmatmul.mubr.bf16.gmra.mrb[0].mxu0 %v1034
        %v2945 = vpop.f32.mrb[0].mxu0
        %v2946 = vadd.f32 %v592, %v2945
        %v2947 = vpop.f32.mrb[0].mxu0
        %v2948 = vpop.f32.mrb[0].mxu0
        %v2949 = vadd.f32 %v592, %v2948
        %v2950 = vpop.f32.mrb[0].mxu0
        %2951 = vmatprep.mubr.bf16.mxu0 %v1041
        %2952 = vmatmul.mubr.bf16.gmra.mrb[0].mxu0 %v1040
        %v2953 = vpop.f32.mrb[0].mxu0
        %v2954 = vadd.f32 %v592, %v2953
        %v2955 = vpop.f32.mrb[0].mxu0
        %v2956 = vpop.f32.mrb[0].mxu0
        %v2957 = vadd.f32 %v592, %v2956
        %v2958 = vpop.f32.mrb[0].mxu0
        %2959 = vmatprep.mubr.bf16.mxu0 %v1047
        %2960 = vmatmul.mubr.bf16.gmra.mrb[0].mxu0 %v1046
        %v2961 = vpop.f32.mrb[0].mxu0
        %v2962 = vadd.f32 %v592, %v2961
        %v2963 = vpop.f32.mrb[0].mxu0
        %v2964 = vpop.f32.mrb[0].mxu0
        %v2965 = vadd.f32 %v592, %v2964
        %v2966 = vpop.f32.mrb[0].mxu0
        %2967 = vmatprep.mubr.bf16.mxu0 %v1053
        %2968 = vmatmul.mubr.bf16.gmra.mrb[0].mxu0 %v1052
        %v2969 = vpop.f32.mrb[0].mxu0
        %v2970 = vadd.f32 %v592, %v2969
        %v2971 = vpop.f32.mrb[0].mxu0
        %v2972 = vpop.f32.mrb[0].mxu0
        %v2973 = vadd.f32 %v592, %v2972
        %v2974 = vpop.f32.mrb[0].mxu0
        %2975 = vmatprep.mubr.bf16.mxu0 %v1059
        %2976 = vmatmul.mubr.bf16.gmra.mrb[0].mxu0 %v1058
        %v2977 = vpop.f32.mrb[0].mxu0
        %v2978 = vadd.f32 %v592, %v2977
        %v2979 = vpop.f32.mrb[0].mxu0
        %v2980 = vpop.f32.mrb[0].mxu0
        %v2981 = vadd.f32 %v592, %v2980
        %v2982 = vpop.f32.mrb[0].mxu0
        %2983 = vmatprep.mubr.bf16.mxu0 %v1065
        %2984 = vmatmul.mubr.bf16.gmra.mrb[0].mxu0 %v1064
        %v2985 = vpop.f32.mrb[0].mxu0
        %v2986 = vadd.f32 %v592, %v2985
        %v2987 = vpop.f32.mrb[0].mxu0
        %v2988 = vpop.f32.mrb[0].mxu0
        %v2989 = vadd.f32 %v592, %v2988
        %v2990 = vpop.f32.mrb[0].mxu0
        %2991 = vmatprep.mubr.bf16.mxu0 %v1071
        %2992 = vmatmul.mubr.bf16.gmra.mrb[0].mxu0 %v1070
        %v2993 = vpop.f32.mrb[0].mxu0
        %v2994 = vadd.f32 %v592, %v2993
        %v2995 = vpop.f32.mrb[0].mxu0
        %v2996 = vpop.f32.mrb[0].mxu0
        %v2997 = vadd.f32 %v592, %v2996
        %v2998 = vpop.f32.mrb[0].mxu0
        %2999 = vmatprep.mubr.bf16.mxu0 %v1077
        %3000 = vmatmul.mubr.bf16.gmra.mrb[0].mxu0 %v1076
        %v3001 = vpop.f32.mrb[0].mxu0
        %v3002 = vadd.f32 %v592, %v3001
        %v3003 = vpop.f32.mrb[0].mxu0
        %v3004 = vpop.f32.mrb[0].mxu0
        %v3005 = vadd.f32 %v592, %v3004
        %v3006 = vpop.f32.mrb[0].mxu0
        %3007 = vmatprep.mubr.bf16.mxu0 %v1083
        %3008 = vmatmul.mubr.bf16.gmra.mrb[0].mxu0 %v1082
        %v3009 = vpop.f32.mrb[0].mxu0
        %v3010 = vadd.f32 %v592, %v3009
        %v3011 = vpop.f32.mrb[0].mxu0
        %v3012 = vpop.f32.mrb[0].mxu0
        %v3013 = vadd.f32 %v592, %v3012
        %v3014 = vpop.f32.mrb[0].mxu0
        %3015 = vmatprep.mubr.bf16.mxu0 %v1089
        %3016 = vmatmul.mubr.bf16.gmra.mrb[0].mxu0 %v1088
        %v3017 = vpop.f32.mrb[0].mxu0
        %v3018 = vadd.f32 %v592, %v3017
        %v3019 = vpop.f32.mrb[0].mxu0
        %v3020 = vpop.f32.mrb[0].mxu0
        %v3021 = vadd.f32 %v592, %v3020
        %v3022 = vpop.f32.mrb[0].mxu0
        %3023 = vmatprep.mubr.bf16.mxu0 %v1095
        %3024 = vmatmul.mubr.bf16.gmra.mrb[0].mxu0 %v1094
        %v3025 = vpop.f32.mrb[0].mxu0
        %v3026 = vadd.f32 %v592, %v3025
        %v3027 = vpop.f32.mrb[0].mxu0
        %v3028 = vpop.f32.mrb[0].mxu0
        %v3029 = vadd.f32 %v592, %v3028
        %v3030 = vpop.f32.mrb[0].mxu0
        %3031 = vmatprep.mubr.bf16.mxu0 %v1101
        %3032 = vmatmul.mubr.bf16.gmra.mrb[0].mxu0 %v1100
        %v3033 = vpop.f32.mrb[0].mxu0
        %v3034 = vadd.f32 %v592, %v3033
        %v3035 = vpop.f32.mrb[0].mxu0
        %v3036 = vpop.f32.mrb[0].mxu0
        %v3037 = vadd.f32 %v592, %v3036
        %v3038 = vpop.f32.mrb[0].mxu0
        %3039 = vmatprep.mubr.bf16.mxu0 %v1107
        %3040 = vmatmul.mubr.bf16.gmra.mrb[0].mxu0 %v1106
        %v3041 = vpop.f32.mrb[0].mxu0
        %v3042 = vadd.f32 %v592, %v3041
        %v3043 = vpop.f32.mrb[0].mxu0
        %v3044 = vpop.f32.mrb[0].mxu0
        %v3045 = vadd.f32 %v592, %v3044
        %v3046 = vpop.f32.mrb[0].mxu0
        %3047 = vmatprep.mubr.bf16.mxu0 %v1113
        %3048 = vmatmul.mubr.bf16.gmra.mrb[0].mxu0 %v1112
        %v3049 = vpop.f32.mrb[0].mxu0
        %v3050 = vadd.f32 %v592, %v3049
        %v3051 = vpop.f32.mrb[0].mxu0
        %v3052 = vpop.f32.mrb[0].mxu0
        %v3053 = vadd.f32 %v592, %v3052
        %v3054 = vpop.f32.mrb[0].mxu0
        %3055 = vmatprep.mubr.bf16.mxu0 %v1119
        %3056 = vmatmul.mubr.bf16.gmra.mrb[0].mxu0 %v1118
        %v3057 = vpop.f32.mrb[0].mxu0
        %v3058 = vadd.f32 %v592, %v3057
        %v3059 = vpop.f32.mrb[0].mxu0
        %v3060 = vpop.f32.mrb[0].mxu0
        %v3061 = vadd.f32 %v592, %v3060
        %v3062 = vpop.f32.mrb[0].mxu0
        %3063 = vmatprep.mubr.bf16.mxu0 %v1125
        %3064 = vmatmul.mubr.bf16.gmra.mrb[0].mxu0 %v1124
        %v3065 = vpop.f32.mrb[0].mxu0
        %v3066 = vadd.f32 %v592, %v3065
        %v3067 = vpop.f32.mrb[0].mxu0
        %v3068 = vpop.f32.mrb[0].mxu0
        %v3069 = vadd.f32 %v592, %v3068
        %v3070 = vpop.f32.mrb[0].mxu0
        %3071 = vmatprep.mubr.bf16.mxu0 %v1131
        %3072 = vmatmul.mubr.bf16.gmra.mrb[0].mxu0 %v1130
        %v3073 = vpop.f32.mrb[0].mxu0
        %v3074 = vadd.f32 %v592, %v3073
        %v3075 = vpop.f32.mrb[0].mxu0
        %v3076 = vpop.f32.mrb[0].mxu0
        %v3077 = vadd.f32 %v592, %v3076
        %v3078 = vpop.f32.mrb[0].mxu0
        %3079 = vmatprep.mubr.bf16.mxu0 %v1137
        %3080 = vmatmul.mubr.bf16.gmra.mrb[0].mxu0 %v1136
        %v3081 = vpop.f32.mrb[0].mxu0
        %v3082 = vadd.f32 %v592, %v3081
        %v3083 = vpop.f32.mrb[0].mxu0
        %v3084 = vpop.f32.mrb[0].mxu0
        %v3085 = vadd.f32 %v592, %v3084
        %v3086 = vpop.f32.mrb[0].mxu0
        %3087 = vmatprep.mubr.bf16.mxu0 %v1143
        %3088 = vmatmul.mubr.bf16.gmra.mrb[0].mxu0 %v1142
        %v3089 = vpop.f32.mrb[0].mxu0
        %v3090 = vadd.f32 %v592, %v3089
        %v3091 = vpop.f32.mrb[0].mxu0
        %v3092 = vpop.f32.mrb[0].mxu0
        %v3093 = vadd.f32 %v592, %v3092
        %v3094 = vpop.f32.mrb[0].mxu0
        %3095 = vmatprep.mubr.bf16.mxu0 %v1149
        %3096 = vmatmul.mubr.bf16.gmra.mrb[0].mxu0 %v1148
        %v3097 = vpop.f32.mrb[0].mxu0
        %v3098 = vadd.f32 %v592, %v3097
        %v3099 = vpop.f32.mrb[0].mxu0
        %v3100 = vpop.f32.mrb[0].mxu0
        %v3101 = vadd.f32 %v592, %v3100
        %v3102 = vpop.f32.mrb[0].mxu0
        %3103 = vmatprep.mubr.bf16.mxu0 %v1155
        %3104 = vmatmul.mubr.bf16.gmra.mrb[0].mxu0 %v1154
        %v3105 = vpop.f32.mrb[0].mxu0
        %v3106 = vadd.f32 %v592, %v3105
        %v3107 = vpop.f32.mrb[0].mxu0
        %v3108 = vpop.f32.mrb[0].mxu0
        %v3109 = vadd.f32 %v592, %v3108
        %v3110 = vpop.f32.mrb[0].mxu0
        %3111 = vmatprep.mubr.bf16.mxu0 %v1161
        %3112 = vmatmul.mubr.bf16.gmra.mrb[0].mxu0 %v1160
        %v3113 = vpop.f32.mrb[0].mxu0
        %v3114 = vadd.f32 %v592, %v3113
        %v3115 = vpop.f32.mrb[0].mxu0
        %v3116 = vpop.f32.mrb[0].mxu0
        %v3117 = vadd.f32 %v592, %v3116
        %v3118 = vpop.f32.mrb[0].mxu0
        %3119 = vmatprep.mubr.bf16.mxu0 %v1167
        %3120 = vmatmul.mubr.bf16.gmra.mrb[0].mxu0 %v1166
        %v3121 = vpop.f32.mrb[0].mxu0
        %v3122 = vadd.f32 %v592, %v3121
        %v3123 = vpop.f32.mrb[0].mxu0
        %v3124 = vpop.f32.mrb[0].mxu0
        %v3125 = vadd.f32 %v592, %v3124
        %v3126 = vpop.f32.mrb[0].mxu0
        %3127 = vdwg.mxu0
        %3128 = vmatprep.subr.bf16.mxu0 0
        %3129 = vmatpush1.bf16.msra.mxu0 %v1846
        %3130 = vmatprep.subr.bf16.mxu0 0
        %3131 = vmatpush1.bf16.msra.mxu0 %v1849
        %3132 = vmatprep.subr.bf16.mxu0 0
        %3133 = vmatpush1.bf16.msra.mxu0 %v1852
        %3134 = vmatprep.subr.bf16.mxu0 0
        %3135 = vmatpush1.bf16.msra.mxu0 %v1855
        %3136 = vmatprep.subr.bf16.mxu0 0
        %3137 = vmatpush1.bf16.msra.mxu0 %v1858
        %3138 = vmatprep.subr.bf16.mxu0 0
        %3139 = vmatpush1.bf16.msra.mxu0 %v1861
        %3140 = vmatprep.subr.bf16.mxu0 0
        %3141 = vmatpush1.bf16.msra.mxu0 %v1864
        %3142 = vmatprep.subr.bf16.mxu0 0
        %3143 = vmatpush1.bf16.msra.mxu0 %v1867
        %3144 = vmatprep.subr.bf16.mxu0 0
        %3145 = vmatpush1.bf16.msra.mxu0 %v1870
        %3146 = vmatprep.subr.bf16.mxu0 0
        %3147 = vmatpush1.bf16.msra.mxu0 %v1873
        %3148 = vmatprep.subr.bf16.mxu0 0
        %3149 = vmatpush1.bf16.msra.mxu0 %v1876
        %3150 = vmatprep.subr.bf16.mxu0 0
        %3151 = vmatpush1.bf16.msra.mxu0 %v1879
        %3152 = vmatprep.subr.bf16.mxu0 0
        %3153 = vmatpush1.bf16.msra.mxu0 %v1882
        %3154 = vmatprep.subr.bf16.mxu0 0
        %3155 = vmatpush1.bf16.msra.mxu0 %v1885
        %3156 = vmatprep.subr.bf16.mxu0 0
        %3157 = vmatpush1.bf16.msra.mxu0 %v1888
        %3158 = vmatprep.subr.bf16.mxu0 0
        %3159 = vmatpush1.bf16.msra.mxu0 %v1891
        %3160 = vmatprep.mubr.bf16.mxu0 %v1031
        %3161 = vmatmul.mubr.bf16.gmra.mrb[0].mxu0 %v1030
        %v3162 = vpop.f32.mrb[0].mxu0
        %v3163 = vadd.f32 %v2938, %v3162
        %v3164 = vpop.f32.mrb[0].mxu0
        %v3165 = vpop.f32.mrb[0].mxu0
        %v3166 = vadd.f32 %v2941, %v3165
        %v3167 = vpop.f32.mrb[0].mxu0
        %3168 = vmatprep.mubr.bf16.mxu0 %v1037
        %3169 = vmatmul.mubr.bf16.gmra.mrb[0].mxu0 %v1036
        %v3170 = vpop.f32.mrb[0].mxu0
        %v3171 = vadd.f32 %v2946, %v3170
        %v3172 = vpop.f32.mrb[0].mxu0
        %v3173 = vpop.f32.mrb[0].mxu0
        %v3174 = vadd.f32 %v2949, %v3173
        %v3175 = vpop.f32.mrb[0].mxu0
        %3176 = vmatprep.mubr.bf16.mxu0 %v1043
        %3177 = vmatmul.mubr.bf16.gmra.mrb[0].mxu0 %v1042
        %v3178 = vpop.f32.mrb[0].mxu0
        %v3179 = vadd.f32 %v2954, %v3178
        %v3180 = vpop.f32.mrb[0].mxu0
        %v3181 = vpop.f32.mrb[0].mxu0
        %v3182 = vadd.f32 %v2957, %v3181
        %v3183 = vpop.f32.mrb[0].mxu0
        %3184 = vmatprep.mubr.bf16.mxu0 %v1049
        %3185 = vmatmul.mubr.bf16.gmra.mrb[0].mxu0 %v1048
        %v3186 = vpop.f32.mrb[0].mxu0
        %v3187 = vadd.f32 %v2962, %v3186
        %v3188 = vpop.f32.mrb[0].mxu0
        %v3189 = vpop.f32.mrb[0].mxu0
        %v3190 = vadd.f32 %v2965, %v3189
        %v3191 = vpop.f32.mrb[0].mxu0
        %3192 = vmatprep.mubr.bf16.mxu0 %v1055
        %3193 = vmatmul.mubr.bf16.gmra.mrb[0].mxu0 %v1054
        %v3194 = vpop.f32.mrb[0].mxu0
        %v3195 = vadd.f32 %v2970, %v3194
        %v3196 = vpop.f32.mrb[0].mxu0
        %v3197 = vpop.f32.mrb[0].mxu0
        %v3198 = vadd.f32 %v2973, %v3197
        %v3199 = vpop.f32.mrb[0].mxu0
        %3200 = vmatprep.mubr.bf16.mxu0 %v1061
        %3201 = vmatmul.mubr.bf16.gmra.mrb[0].mxu0 %v1060
        %v3202 = vpop.f32.mrb[0].mxu0
        %v3203 = vadd.f32 %v2978, %v3202
        %v3204 = vpop.f32.mrb[0].mxu0
        %v3205 = vpop.f32.mrb[0].mxu0
        %v3206 = vadd.f32 %v2981, %v3205
        %v3207 = vpop.f32.mrb[0].mxu0
        %3208 = vmatprep.mubr.bf16.mxu0 %v1067
        %3209 = vmatmul.mubr.bf16.gmra.mrb[0].mxu0 %v1066
        %v3210 = vpop.f32.mrb[0].mxu0
        %v3211 = vadd.f32 %v2986, %v3210
        %v3212 = vpop.f32.mrb[0].mxu0
        %v3213 = vpop.f32.mrb[0].mxu0
        %v3214 = vadd.f32 %v2989, %v3213
        %v3215 = vpop.f32.mrb[0].mxu0
        %3216 = vmatprep.mubr.bf16.mxu0 %v1073
        %3217 = vmatmul.mubr.bf16.gmra.mrb[0].mxu0 %v1072
        %v3218 = vpop.f32.mrb[0].mxu0
        %v3219 = vadd.f32 %v2994, %v3218
        %v3220 = vpop.f32.mrb[0].mxu0
        %v3221 = vpop.f32.mrb[0].mxu0
        %v3222 = vadd.f32 %v2997, %v3221
        %v3223 = vpop.f32.mrb[0].mxu0
        %3224 = vmatprep.mubr.bf16.mxu0 %v1079
        %3225 = vmatmul.mubr.bf16.gmra.mrb[0].mxu0 %v1078
        %v3226 = vpop.f32.mrb[0].mxu0
        %v3227 = vadd.f32 %v3002, %v3226
        %v3228 = vpop.f32.mrb[0].mxu0
        %v3229 = vpop.f32.mrb[0].mxu0
        %v3230 = vadd.f32 %v3005, %v3229
        %v3231 = vpop.f32.mrb[0].mxu0
        %3232 = vmatprep.mubr.bf16.mxu0 %v1085
        %3233 = vmatmul.mubr.bf16.gmra.mrb[0].mxu0 %v1084
        %v3234 = vpop.f32.mrb[0].mxu0
        %v3235 = vadd.f32 %v3010, %v3234
        %v3236 = vpop.f32.mrb[0].mxu0
        %v3237 = vpop.f32.mrb[0].mxu0
        %v3238 = vadd.f32 %v3013, %v3237
        %v3239 = vpop.f32.mrb[0].mxu0
        %3240 = vmatprep.mubr.bf16.mxu0 %v1091
        %3241 = vmatmul.mubr.bf16.gmra.mrb[0].mxu0 %v1090
        %v3242 = vpop.f32.mrb[0].mxu0
        %v3243 = vadd.f32 %v3018, %v3242
        %v3244 = vpop.f32.mrb[0].mxu0
        %v3245 = vpop.f32.mrb[0].mxu0
        %v3246 = vadd.f32 %v3021, %v3245
        %v3247 = vpop.f32.mrb[0].mxu0
        %3248 = vmatprep.mubr.bf16.mxu0 %v1097
        %3249 = vmatmul.mubr.bf16.gmra.mrb[0].mxu0 %v1096
        %v3250 = vpop.f32.mrb[0].mxu0
        %v3251 = vadd.f32 %v3026, %v3250
        %v3252 = vpop.f32.mrb[0].mxu0
        %v3253 = vpop.f32.mrb[0].mxu0
        %v3254 = vadd.f32 %v3029, %v3253
        %v3255 = vpop.f32.mrb[0].mxu0
        %3256 = vmatprep.mubr.bf16.mxu0 %v1103
        %3257 = vmatmul.mubr.bf16.gmra.mrb[0].mxu0 %v1102
        %v3258 = vpop.f32.mrb[0].mxu0
        %v3259 = vadd.f32 %v3034, %v3258
        %v3260 = vpop.f32.mrb[0].mxu0
        %v3261 = vpop.f32.mrb[0].mxu0
        %v3262 = vadd.f32 %v3037, %v3261
        %v3263 = vpop.f32.mrb[0].mxu0
        %3264 = vmatprep.mubr.bf16.mxu0 %v1109
        %3265 = vmatmul.mubr.bf16.gmra.mrb[0].mxu0 %v1108
        %v3266 = vpop.f32.mrb[0].mxu0
        %v3267 = vadd.f32 %v3042, %v3266
        %v3268 = vpop.f32.mrb[0].mxu0
        %v3269 = vpop.f32.mrb[0].mxu0
        %v3270 = vadd.f32 %v3045, %v3269
        %v3271 = vpop.f32.mrb[0].mxu0
        %3272 = vmatprep.mubr.bf16.mxu0 %v1115
        %3273 = vmatmul.mubr.bf16.gmra.mrb[0].mxu0 %v1114
        %v3274 = vpop.f32.mrb[0].mxu0
        %v3275 = vadd.f32 %v3050, %v3274
        %v3276 = vpop.f32.mrb[0].mxu0
        %v3277 = vpop.f32.mrb[0].mxu0
        %v3278 = vadd.f32 %v3053, %v3277
        %v3279 = vpop.f32.mrb[0].mxu0
        %3280 = vmatprep.mubr.bf16.mxu0 %v1121
        %3281 = vmatmul.mubr.bf16.gmra.mrb[0].mxu0 %v1120
        %v3282 = vpop.f32.mrb[0].mxu0
        %v3283 = vadd.f32 %v3058, %v3282
        %v3284 = vpop.f32.mrb[0].mxu0
        %v3285 = vpop.f32.mrb[0].mxu0
        %v3286 = vadd.f32 %v3061, %v3285
        %v3287 = vpop.f32.mrb[0].mxu0
        %3288 = vmatprep.mubr.bf16.mxu0 %v1127
        %3289 = vmatmul.mubr.bf16.gmra.mrb[0].mxu0 %v1126
        %v3290 = vpop.f32.mrb[0].mxu0
        %v3291 = vadd.f32 %v3066, %v3290
        %v3292 = vpop.f32.mrb[0].mxu0
        %v3293 = vpop.f32.mrb[0].mxu0
        %v3294 = vadd.f32 %v3069, %v3293
        %v3295 = vpop.f32.mrb[0].mxu0
        %3296 = vmatprep.mubr.bf16.mxu0 %v1133
        %3297 = vmatmul.mubr.bf16.gmra.mrb[0].mxu0 %v1132
        %v3298 = vpop.f32.mrb[0].mxu0
        %v3299 = vadd.f32 %v3074, %v3298
        %v3300 = vpop.f32.mrb[0].mxu0
        %v3301 = vpop.f32.mrb[0].mxu0
        %v3302 = vadd.f32 %v3077, %v3301
        %v3303 = vpop.f32.mrb[0].mxu0
        %3304 = vmatprep.mubr.bf16.mxu0 %v1139
        %3305 = vmatmul.mubr.bf16.gmra.mrb[0].mxu0 %v1138
        %v3306 = vpop.f32.mrb[0].mxu0
        %v3307 = vadd.f32 %v3082, %v3306
        %v3308 = vpop.f32.mrb[0].mxu0
        %v3309 = vpop.f32.mrb[0].mxu0
        %v3310 = vadd.f32 %v3085, %v3309
        %v3311 = vpop.f32.mrb[0].mxu0
        %3312 = vmatprep.mubr.bf16.mxu0 %v1145
        %3313 = vmatmul.mubr.bf16.gmra.mrb[0].mxu0 %v1144
        %v3314 = vpop.f32.mrb[0].mxu0
        %v3315 = vadd.f32 %v3090, %v3314
        %v3316 = vpop.f32.mrb[0].mxu0
        %v3317 = vpop.f32.mrb[0].mxu0
        %v3318 = vadd.f32 %v3093, %v3317
        %v3319 = vpop.f32.mrb[0].mxu0
        %3320 = vmatprep.mubr.bf16.mxu0 %v1151
        %3321 = vmatmul.mubr.bf16.gmra.mrb[0].mxu0 %v1150
        %v3322 = vpop.f32.mrb[0].mxu0
        %v3323 = vadd.f32 %v3098, %v3322
        %v3324 = vpop.f32.mrb[0].mxu0
        %v3325 = vpop.f32.mrb[0].mxu0
        %v3326 = vadd.f32 %v3101, %v3325
        %v3327 = vpop.f32.mrb[0].mxu0
        %3328 = vmatprep.mubr.bf16.mxu0 %v1157
        %3329 = vmatmul.mubr.bf16.gmra.mrb[0].mxu0 %v1156
        %v3330 = vpop.f32.mrb[0].mxu0
        %v3331 = vadd.f32 %v3106, %v3330
        %v3332 = vpop.f32.mrb[0].mxu0
        %v3333 = vpop.f32.mrb[0].mxu0
        %v3334 = vadd.f32 %v3109, %v3333
        %v3335 = vpop.f32.mrb[0].mxu0
        %3336 = vmatprep.mubr.bf16.mxu0 %v1163
        %3337 = vmatmul.mubr.bf16.gmra.mrb[0].mxu0 %v1162
        %v3338 = vpop.f32.mrb[0].mxu0
        %v3339 = vadd.f32 %v3114, %v3338
        %v3340 = vpop.f32.mrb[0].mxu0
        %v3341 = vpop.f32.mrb[0].mxu0
        %v3342 = vadd.f32 %v3117, %v3341
        %v3343 = vpop.f32.mrb[0].mxu0
        %3344 = vmatprep.mubr.bf16.mxu0 %v1169
        %3345 = vmatmul.mubr.bf16.gmra.mrb[0].mxu0 %v1168
        %v3346 = vpop.f32.mrb[0].mxu0
        %v3347 = vadd.f32 %v3122, %v3346
        %v3348 = vpop.f32.mrb[0].mxu0
        %v3349 = vpop.f32.mrb[0].mxu0
        %v3350 = vadd.f32 %v3125, %v3349
        %v3351 = vpop.f32.mrb[0].mxu0
        %3352 = vdwg.mxu0
        %3353 = vmatprep.subr.bf16.mxu0 0
        %3354 = vmatpush1.bf16.msra.mxu0 %v1894
        %3355 = vmatprep.subr.bf16.mxu0 0
        %3356 = vmatpush1.bf16.msra.mxu0 %v1897
        %3357 = vmatprep.subr.bf16.mxu0 0
        %3358 = vmatpush1.bf16.msra.mxu0 %v1900
        %3359 = vmatprep.subr.bf16.mxu0 0
        %3360 = vmatpush1.bf16.msra.mxu0 %v1903
        %3361 = vmatprep.subr.bf16.mxu0 0
        %3362 = vmatpush1.bf16.msra.mxu0 %v1906
        %3363 = vmatprep.subr.bf16.mxu0 0
        %3364 = vmatpush1.bf16.msra.mxu0 %v1909
        %3365 = vmatprep.subr.bf16.mxu0 0
        %3366 = vmatpush1.bf16.msra.mxu0 %v1912
        %3367 = vmatprep.subr.bf16.mxu0 0
        %3368 = vmatpush1.bf16.msra.mxu0 %v1915
        %3369 = vmatprep.subr.bf16.mxu0 0
        %3370 = vmatpush1.bf16.msra.mxu0 %v1918
        %3371 = vmatprep.subr.bf16.mxu0 0
        %3372 = vmatpush1.bf16.msra.mxu0 %v1921
        %3373 = vmatprep.subr.bf16.mxu0 0
        %3374 = vmatpush1.bf16.msra.mxu0 %v1924
        %3375 = vmatprep.subr.bf16.mxu0 0
        %3376 = vmatpush1.bf16.msra.mxu0 %v1927
        %3377 = vmatprep.subr.bf16.mxu0 0
        %3378 = vmatpush1.bf16.msra.mxu0 %v1930
        %3379 = vmatprep.subr.bf16.mxu0 0
        %3380 = vmatpush1.bf16.msra.mxu0 %v1933
        %3381 = vmatprep.subr.bf16.mxu0 0
        %3382 = vmatpush1.bf16.msra.mxu0 %v1936
        %3383 = vmatprep.subr.bf16.mxu0 0
        %3384 = vmatpush1.bf16.msra.mxu0 %v1939
        %3385 = vmatprep.mubr.bf16.mxu0 %v1033
        %3386 = vmatmul.mubr.bf16.gmra.mrb[0].mxu0 %v1032
        %v3387 = vpop.f32.mrb[0].mxu0
        %v3388 = vadd.f32 %v3163, %v3387
        %v3389 = vpop.f32.mrb[0].mxu0
        %v3390 = vpop.f32.mrb[0].mxu0
        %v3391 = vadd.f32 %v3166, %v3390
        %v3392 = vpop.f32.mrb[0].mxu0
        %3393 = vmatprep.mubr.bf16.mxu0 %v1039
        %3394 = vmatmul.mubr.bf16.gmra.mrb[0].mxu0 %v1038
        %v3395 = vpop.f32.mrb[0].mxu0
        %v3396 = vadd.f32 %v3171, %v3395
        %v3397 = vpop.f32.mrb[0].mxu0
        %v3398 = vpop.f32.mrb[0].mxu0
        %v3399 = vadd.f32 %v3174, %v3398
        %v3400 = vpop.f32.mrb[0].mxu0
        %3401 = vmatprep.mubr.bf16.mxu0 %v1045
        %3402 = vmatmul.mubr.bf16.gmra.mrb[0].mxu0 %v1044
        %v3403 = vpop.f32.mrb[0].mxu0
        %v3404 = vadd.f32 %v3179, %v3403
        %v3405 = vpop.f32.mrb[0].mxu0
        %v3406 = vpop.f32.mrb[0].mxu0
        %v3407 = vadd.f32 %v3182, %v3406
        %v3408 = vpop.f32.mrb[0].mxu0
        %3409 = vmatprep.mubr.bf16.mxu0 %v1051
        %3410 = vmatmul.mubr.bf16.gmra.mrb[0].mxu0 %v1050
        %v3411 = vpop.f32.mrb[0].mxu0
        %v3412 = vadd.f32 %v3187, %v3411
        %v3413 = vpop.f32.mrb[0].mxu0
        %v3414 = vpop.f32.mrb[0].mxu0
        %v3415 = vadd.f32 %v3190, %v3414
        %v3416 = vpop.f32.mrb[0].mxu0
        %3417 = vmatprep.mubr.bf16.mxu0 %v1057
        %3418 = vmatmul.mubr.bf16.gmra.mrb[0].mxu0 %v1056
        %v3419 = vpop.f32.mrb[0].mxu0
        %v3420 = vadd.f32 %v3195, %v3419
        %v3421 = vpop.f32.mrb[0].mxu0
        %v3422 = vpop.f32.mrb[0].mxu0
        %v3423 = vadd.f32 %v3198, %v3422
        %v3424 = vpop.f32.mrb[0].mxu0
        %3425 = vmatprep.mubr.bf16.mxu0 %v1063
        %3426 = vmatmul.mubr.bf16.gmra.mrb[0].mxu0 %v1062
        %v3427 = vpop.f32.mrb[0].mxu0
        %v3428 = vadd.f32 %v3203, %v3427
        %v3429 = vpop.f32.mrb[0].mxu0
        %v3430 = vpop.f32.mrb[0].mxu0
        %v3431 = vadd.f32 %v3206, %v3430
        %v3432 = vpop.f32.mrb[0].mxu0
        %3433 = vmatprep.mubr.bf16.mxu0 %v1069
        %3434 = vmatmul.mubr.bf16.gmra.mrb[0].mxu0 %v1068
        %v3435 = vpop.f32.mrb[0].mxu0
        %v3436 = vadd.f32 %v3211, %v3435
        %v3437 = vpop.f32.mrb[0].mxu0
        %v3438 = vpop.f32.mrb[0].mxu0
        %v3439 = vadd.f32 %v3214, %v3438
        %v3440 = vpop.f32.mrb[0].mxu0
        %3441 = vmatprep.mubr.bf16.mxu0 %v1075
        %3442 = vmatmul.mubr.bf16.gmra.mrb[0].mxu0 %v1074
        %v3443 = vpop.f32.mrb[0].mxu0
        %v3444 = vadd.f32 %v3219, %v3443
        %v3445 = vpop.f32.mrb[0].mxu0
        %v3446 = vpop.f32.mrb[0].mxu0
        %v3447 = vadd.f32 %v3222, %v3446
        %v3448 = vpop.f32.mrb[0].mxu0
        %3449 = vmatprep.mubr.bf16.mxu0 %v1081
        %3450 = vmatmul.mubr.bf16.gmra.mrb[0].mxu0 %v1080
        %v3451 = vpop.f32.mrb[0].mxu0
        %v3452 = vadd.f32 %v3227, %v3451
        %v3453 = vpop.f32.mrb[0].mxu0
        %v3454 = vpop.f32.mrb[0].mxu0
        %v3455 = vadd.f32 %v3230, %v3454
        %v3456 = vpop.f32.mrb[0].mxu0
        %3457 = vmatprep.mubr.bf16.mxu0 %v1087
        %3458 = vmatmul.mubr.bf16.gmra.mrb[0].mxu0 %v1086
        %v3459 = vpop.f32.mrb[0].mxu0
        %v3460 = vadd.f32 %v3235, %v3459
        %v3461 = vpop.f32.mrb[0].mxu0
        %v3462 = vpop.f32.mrb[0].mxu0
        %v3463 = vadd.f32 %v3238, %v3462
        %v3464 = vpop.f32.mrb[0].mxu0
        %3465 = vmatprep.mubr.bf16.mxu0 %v1093
        %3466 = vmatmul.mubr.bf16.gmra.mrb[0].mxu0 %v1092
        %v3467 = vpop.f32.mrb[0].mxu0
        %v3468 = vadd.f32 %v3243, %v3467
        %v3469 = vpop.f32.mrb[0].mxu0
        %v3470 = vpop.f32.mrb[0].mxu0
        %v3471 = vadd.f32 %v3246, %v3470
        %v3472 = vpop.f32.mrb[0].mxu0
        %3473 = vmatprep.mubr.bf16.mxu0 %v1099
        %3474 = vmatmul.mubr.bf16.gmra.mrb[0].mxu0 %v1098
        %v3475 = vpop.f32.mrb[0].mxu0
        %v3476 = vadd.f32 %v3251, %v3475
        %v3477 = vpop.f32.mrb[0].mxu0
        %v3478 = vpop.f32.mrb[0].mxu0
        %v3479 = vadd.f32 %v3254, %v3478
        %v3480 = vpop.f32.mrb[0].mxu0
        %3481 = vmatprep.mubr.bf16.mxu0 %v1105
        %3482 = vmatmul.mubr.bf16.gmra.mrb[0].mxu0 %v1104
        %v3483 = vpop.f32.mrb[0].mxu0
        %v3484 = vadd.f32 %v3259, %v3483
        %v3485 = vpop.f32.mrb[0].mxu0
        %v3486 = vpop.f32.mrb[0].mxu0
        %v3487 = vadd.f32 %v3262, %v3486
        %v3488 = vpop.f32.mrb[0].mxu0
        %3489 = vmatprep.mubr.bf16.mxu0 %v1111
        %3490 = vmatmul.mubr.bf16.gmra.mrb[0].mxu0 %v1110
        %v3491 = vpop.f32.mrb[0].mxu0
        %v3492 = vadd.f32 %v3267, %v3491
        %v3493 = vpop.f32.mrb[0].mxu0
        %v3494 = vpop.f32.mrb[0].mxu0
        %v3495 = vadd.f32 %v3270, %v3494
        %v3496 = vpop.f32.mrb[0].mxu0
        %3497 = vmatprep.mubr.bf16.mxu0 %v1117
        %3498 = vmatmul.mubr.bf16.gmra.mrb[0].mxu0 %v1116
        %v3499 = vpop.f32.mrb[0].mxu0
        %v3500 = vadd.f32 %v3275, %v3499
        %v3501 = vpop.f32.mrb[0].mxu0
        %v3502 = vpop.f32.mrb[0].mxu0
        %v3503 = vadd.f32 %v3278, %v3502
        %v3504 = vpop.f32.mrb[0].mxu0
        %3505 = vmatprep.mubr.bf16.mxu0 %v1123
        %3506 = vmatmul.mubr.bf16.gmra.mrb[0].mxu0 %v1122
        %v3507 = vpop.f32.mrb[0].mxu0
        %v3508 = vadd.f32 %v3283, %v3507
        %v3509 = vpop.f32.mrb[0].mxu0
        %v3510 = vpop.f32.mrb[0].mxu0
        %v3511 = vadd.f32 %v3286, %v3510
        %v3512 = vpop.f32.mrb[0].mxu0
        %3513 = vmatprep.mubr.bf16.mxu0 %v1129
        %3514 = vmatmul.mubr.bf16.gmra.mrb[0].mxu0 %v1128
        %v3515 = vpop.f32.mrb[0].mxu0
        %v3516 = vadd.f32 %v3291, %v3515
        %v3517 = vpop.f32.mrb[0].mxu0
        %v3518 = vpop.f32.mrb[0].mxu0
        %v3519 = vadd.f32 %v3294, %v3518
        %v3520 = vpop.f32.mrb[0].mxu0
        %3521 = vmatprep.mubr.bf16.mxu0 %v1135
        %3522 = vmatmul.mubr.bf16.gmra.mrb[0].mxu0 %v1134
        %v3523 = vpop.f32.mrb[0].mxu0
        %v3524 = vadd.f32 %v3299, %v3523
        %v3525 = vpop.f32.mrb[0].mxu0
        %v3526 = vpop.f32.mrb[0].mxu0
        %v3527 = vadd.f32 %v3302, %v3526
        %v3528 = vpop.f32.mrb[0].mxu0
        %3529 = vmatprep.mubr.bf16.mxu0 %v1141
        %3530 = vmatmul.mubr.bf16.gmra.mrb[0].mxu0 %v1140
        %v3531 = vpop.f32.mrb[0].mxu0
        %v3532 = vadd.f32 %v3307, %v3531
        %v3533 = vpop.f32.mrb[0].mxu0
        %v3534 = vpop.f32.mrb[0].mxu0
        %v3535 = vadd.f32 %v3310, %v3534
        %v3536 = vpop.f32.mrb[0].mxu0
        %3537 = vmatprep.mubr.bf16.mxu0 %v1147
        %3538 = vmatmul.mubr.bf16.gmra.mrb[0].mxu0 %v1146
        %v3539 = vpop.f32.mrb[0].mxu0
        %v3540 = vadd.f32 %v3315, %v3539
        %v3541 = vpop.f32.mrb[0].mxu0
        %v3542 = vpop.f32.mrb[0].mxu0
        %v3543 = vadd.f32 %v3318, %v3542
        %v3544 = vpop.f32.mrb[0].mxu0
        %3545 = vmatprep.mubr.bf16.mxu0 %v1153
        %3546 = vmatmul.mubr.bf16.gmra.mrb[0].mxu0 %v1152
        %v3547 = vpop.f32.mrb[0].mxu0
        %v3548 = vadd.f32 %v3323, %v3547
        %v3549 = vpop.f32.mrb[0].mxu0
        %v3550 = vpop.f32.mrb[0].mxu0
        %v3551 = vadd.f32 %v3326, %v3550
        %v3552 = vpop.f32.mrb[0].mxu0
        %3553 = vmatprep.mubr.bf16.mxu0 %v1159
        %3554 = vmatmul.mubr.bf16.gmra.mrb[0].mxu0 %v1158
        %v3555 = vpop.f32.mrb[0].mxu0
        %v3556 = vadd.f32 %v3331, %v3555
        %v3557 = vpop.f32.mrb[0].mxu0
        %v3558 = vpop.f32.mrb[0].mxu0
        %v3559 = vadd.f32 %v3334, %v3558
        %v3560 = vpop.f32.mrb[0].mxu0
        %3561 = vmatprep.mubr.bf16.mxu0 %v1165
        %3562 = vmatmul.mubr.bf16.gmra.mrb[0].mxu0 %v1164
        %v3563 = vpop.f32.mrb[0].mxu0
        %v3564 = vadd.f32 %v3339, %v3563
        %v3565 = vpop.f32.mrb[0].mxu0
        %v3566 = vpop.f32.mrb[0].mxu0
        %v3567 = vadd.f32 %v3342, %v3566
        %v3568 = vpop.f32.mrb[0].mxu0
        %3569 = vmatprep.mubr.bf16.mxu0 %v1171
        %3570 = vmatmul.mubr.bf16.gmra.mrb[0].mxu0 %v1170
        %v3571 = vpop.f32.mrb[0].mxu0
        %v3572 = vadd.f32 %v3347, %v3571
        %v3573 = vpop.f32.mrb[0].mxu0
        %v3574 = vpop.f32.mrb[0].mxu0
        %v3575 = vadd.f32 %v3350, %v3574
        %v3576 = vpop.f32.mrb[0].mxu0
        %3577 = vdwg.mxu0
        %3578 = vst [vmem:[%s238] sm:$0xff] %v2665
        %3579 = vst [vmem:[%s238 + $0x8] sm:$0xff] %v2667
        %3580 = vst [vmem:[%s238 + $0x10] sm:$0xff] %v3388
        %3581 = vst [vmem:[%s238 + $0x18] sm:$0xff] %v2669
        %3582 = vst [vmem:[%s238 + $0x20] sm:$0xff] %v2671
        %3583 = vst [vmem:[%s238 + $0x28] sm:$0xff] %v3391
        %3584 = vst [vmem:[%s238 + $0x30] sm:$0xff] %v2675
        %3585 = vst [vmem:[%s238 + $0x38] sm:$0xff] %v2677
        %3586 = vst [vmem:[%s238 + $0x40] sm:$0xff] %v3396
        %3587 = vst [vmem:[%s238 + $0x48] sm:$0xff] %v2679
        %3588 = vst [vmem:[%s238 + $0x50] sm:$0xff] %v2681
        %3589 = vst [vmem:[%s238 + $0x58] sm:$0xff] %v3399
        %3590 = vst [vmem:[%s238 + $0x60] sm:$0xff] %v2685
        %3591 = vst [vmem:[%s238 + $0x68] sm:$0xff] %v2687
        %3592 = vst [vmem:[%s238 + $0x70] sm:$0xff] %v3404
        %3593 = vst [vmem:[%s238 + $0x78] sm:$0xff] %v2689
        %3594 = vst [vmem:[%s238 + $0x80] sm:$0xff] %v2691
        %3595 = vst [vmem:[%s238 + $0x88] sm:$0xff] %v3407
        %3596 = vst [vmem:[%s238 + $0x90] sm:$0xff] %v2695
        %3597 = vst [vmem:[%s238 + $0x98] sm:$0xff] %v2697
        %3598 = vst [vmem:[%s238 + $0xa0] sm:$0xff] %v3412
        %3599 = vst [vmem:[%s238 + $0xa8] sm:$0xff] %v2699
        %3600 = vst [vmem:[%s238 + $0xb0] sm:$0xff] %v2701
        %3601 = vst [vmem:[%s238 + $0xb8] sm:$0xff] %v3415
        %3602 = vst [vmem:[%s238 + $0xc0] sm:$0xff] %v2705
        %3603 = vst [vmem:[%s238 + $0xc8] sm:$0xff] %v2707
        %3604 = vst [vmem:[%s238 + $0xd0] sm:$0xff] %v3420
        %3605 = vst [vmem:[%s238 + $0xd8] sm:$0xff] %v2709
        %3606 = vst [vmem:[%s238 + $0xe0] sm:$0xff] %v2711
        %3607 = vst [vmem:[%s238 + $0xe8] sm:$0xff] %v3423
        %3608 = vst [vmem:[%s238 + $0xf0] sm:$0xff] %v2715
        %3609 = vst [vmem:[%s238 + $0xf8] sm:$0xff] %v2717
        %3610 = vst [vmem:[%s238 + $0x100] sm:$0xff] %v3428
        %3611 = vst [vmem:[%s238 + $0x108] sm:$0xff] %v2719
        %3612 = vst [vmem:[%s238 + $0x110] sm:$0xff] %v2721
        %3613 = vst [vmem:[%s238 + $0x118] sm:$0xff] %v3431
        %3614 = vst [vmem:[%s238 + $0x120] sm:$0xff] %v2725
        %3615 = vst [vmem:[%s238 + $0x128] sm:$0xff] %v2727
        %3616 = vst [vmem:[%s238 + $0x130] sm:$0xff] %v3436
        %3617 = vst [vmem:[%s238 + $0x138] sm:$0xff] %v2729
        %3618 = vst [vmem:[%s238 + $0x140] sm:$0xff] %v2731
        %3619 = vst [vmem:[%s238 + $0x148] sm:$0xff] %v3439
        %3620 = vst [vmem:[%s238 + $0x150] sm:$0xff] %v2735
        %3621 = vst [vmem:[%s238 + $0x158] sm:$0xff] %v2737
        %3622 = vst [vmem:[%s238 + $0x160] sm:$0xff] %v3444
        %3623 = vst [vmem:[%s238 + $0x168] sm:$0xff] %v2739
        %3624 = vst [vmem:[%s238 + $0x170] sm:$0xff] %v2741
        %3625 = vst [vmem:[%s238 + $0x178] sm:$0xff] %v3447
        %3626 = vst [vmem:[%s238 + $0x180] sm:$0xff] %v2745
        %3627 = vst [vmem:[%s238 + $0x188] sm:$0xff] %v2747
        %3628 = vst [vmem:[%s238 + $0x190] sm:$0xff] %v3452
        %3629 = vst [vmem:[%s238 + $0x198] sm:$0xff] %v2749
        %3630 = vst [vmem:[%s238 + $0x1a0] sm:$0xff] %v2751
        %3631 = vst [vmem:[%s238 + $0x1a8] sm:$0xff] %v3455
        %3632 = vst [vmem:[%s238 + $0x1b0] sm:$0xff] %v2755
        %3633 = vst [vmem:[%s238 + $0x1b8] sm:$0xff] %v2757
        %3634 = vst [vmem:[%s238 + $0x1c0] sm:$0xff] %v3460
        %3635 = vst [vmem:[%s238 + $0x1c8] sm:$0xff] %v2759
        %3636 = vst [vmem:[%s238 + $0x1d0] sm:$0xff] %v2761
        %3637 = vst [vmem:[%s238 + $0x1d8] sm:$0xff] %v3463
        %3638 = vst [vmem:[%s238 + $0x1e0] sm:$0xff] %v2765
        %3639 = vst [vmem:[%s238 + $0x1e8] sm:$0xff] %v2767
        %3640 = vst [vmem:[%s238 + $0x1f0] sm:$0xff] %v3468
        %3641 = vst [vmem:[%s238 + $0x1f8] sm:$0xff] %v2769
        %3642 = vst [vmem:[%s238 + $0x200] sm:$0xff] %v2771
        %3643 = vst [vmem:[%s238 + $0x208] sm:$0xff] %v3471
        %3644 = vst [vmem:[%s238 + $0x210] sm:$0xff] %v2775
        %3645 = vst [vmem:[%s238 + $0x218] sm:$0xff] %v2777
        %3646 = vst [vmem:[%s238 + $0x220] sm:$0xff] %v3476
        %3647 = vst [vmem:[%s238 + $0x228] sm:$0xff] %v2779
        %3648 = vst [vmem:[%s238 + $0x230] sm:$0xff] %v2781
        %3649 = vst [vmem:[%s238 + $0x238] sm:$0xff] %v3479
        %3650 = vst [vmem:[%s238 + $0x240] sm:$0xff] %v2785
        %3651 = vst [vmem:[%s238 + $0x248] sm:$0xff] %v2787
        %3652 = vst [vmem:[%s238 + $0x250] sm:$0xff] %v3484
        %3653 = vst [vmem:[%s238 + $0x258] sm:$0xff] %v2789
        %3654 = vst [vmem:[%s238 + $0x260] sm:$0xff] %v2791
        %3655 = vst [vmem:[%s238 + $0x268] sm:$0xff] %v3487
        %3656 = vst [vmem:[%s238 + $0x270] sm:$0xff] %v2795
        %3657 = vst [vmem:[%s238 + $0x278] sm:$0xff] %v2797
        %3658 = vst [vmem:[%s238 + $0x280] sm:$0xff] %v3492
        %3659 = vst [vmem:[%s238 + $0x288] sm:$0xff] %v2799
        %3660 = vst [vmem:[%s238 + $0x290] sm:$0xff] %v2801
        %3661 = vst [vmem:[%s238 + $0x298] sm:$0xff] %v3495
        %3662 = vst [vmem:[%s238 + $0x2a0] sm:$0xff] %v2805
        %3663 = vst [vmem:[%s238 + $0x2a8] sm:$0xff] %v2807
        %3664 = vst [vmem:[%s238 + $0x2b0] sm:$0xff] %v3500
        %3665 = vst [vmem:[%s238 + $0x2b8] sm:$0xff] %v2809
        %3666 = vst [vmem:[%s238 + $0x2c0] sm:$0xff] %v2811
        %3667 = vst [vmem:[%s238 + $0x2c8] sm:$0xff] %v3503
        %3668 = vst [vmem:[%s238 + $0x2d0] sm:$0xff] %v2815
        %3669 = vst [vmem:[%s238 + $0x2d8] sm:$0xff] %v2817
        %3670 = vst [vmem:[%s238 + $0x2e0] sm:$0xff] %v3508
        %3671 = vst [vmem:[%s238 + $0x2e8] sm:$0xff] %v2819
        %3672 = vst [vmem:[%s238 + $0x2f0] sm:$0xff] %v2821
        %3673 = vst [vmem:[%s238 + $0x2f8] sm:$0xff] %v3511
        %3674 = vst [vmem:[%s238 + $0x300] sm:$0xff] %v2825
        %3675 = vst [vmem:[%s238 + $0x308] sm:$0xff] %v2827
        %3676 = vst [vmem:[%s238 + $0x310] sm:$0xff] %v3516
        %3677 = vst [vmem:[%s238 + $0x318] sm:$0xff] %v2829
        %3678 = vst [vmem:[%s238 + $0x320] sm:$0xff] %v2831
        %3679 = vst [vmem:[%s238 + $0x328] sm:$0xff] %v3519
        %3680 = vst [vmem:[%s238 + $0x330] sm:$0xff] %v2835
        %3681 = vst [vmem:[%s238 + $0x338] sm:$0xff] %v2837
        %3682 = vst [vmem:[%s238 + $0x340] sm:$0xff] %v3524
        %3683 = vst [vmem:[%s238 + $0x348] sm:$0xff] %v2839
        %3684 = vst [vmem:[%s238 + $0x350] sm:$0xff] %v2841
        %3685 = vst [vmem:[%s238 + $0x358] sm:$0xff] %v3527
        %3686 = vst [vmem:[%s238 + $0x360] sm:$0xff] %v2845
        %3687 = vst [vmem:[%s238 + $0x368] sm:$0xff] %v2847
        %3688 = vst [vmem:[%s238 + $0x370] sm:$0xff] %v3532
        %3689 = vst [vmem:[%s238 + $0x378] sm:$0xff] %v2849
        %3690 = vst [vmem:[%s238 + $0x380] sm:$0xff] %v2851
        %3691 = vst [vmem:[%s238 + $0x388] sm:$0xff] %v3535
        %3692 = vst [vmem:[%s238 + $0x390] sm:$0xff] %v2855
        %3693 = vst [vmem:[%s238 + $0x398] sm:$0xff] %v2857
        %3694 = vst [vmem:[%s238 + $0x3a0] sm:$0xff] %v3540
        %3695 = vst [vmem:[%s238 + $0x3a8] sm:$0xff] %v2859
        %3696 = vst [vmem:[%s238 + $0x3b0] sm:$0xff] %v2861
        %3697 = vst [vmem:[%s238 + $0x3b8] sm:$0xff] %v3543
        %3698 = vst [vmem:[%s238 + $0x3c0] sm:$0xff] %v2865
        %3699 = vst [vmem:[%s238 + $0x3c8] sm:$0xff] %v2867
        %3700 = vst [vmem:[%s238 + $0x3d0] sm:$0xff] %v3548
        %3701 = vst [vmem:[%s238 + $0x3d8] sm:$0xff] %v2869
        %3702 = vst [vmem:[%s238 + $0x3e0] sm:$0xff] %v2871
        %3703 = vst [vmem:[%s238 + $0x3e8] sm:$0xff] %v3551
        %3704 = vst [vmem:[%s238 + $0x3f0] sm:$0xff] %v2875
        %3705 = vst [vmem:[%s238 + $0x3f8] sm:$0xff] %v2877
        %3706 = vst [vmem:[%s238 + $0x400] sm:$0xff] %v3556
        %3707 = vst [vmem:[%s238 + $0x408] sm:$0xff] %v2879
        %3708 = vst [vmem:[%s238 + $0x410] sm:$0xff] %v2881
        %3709 = vst [vmem:[%s238 + $0x418] sm:$0xff] %v3559
        %3710 = vst [vmem:[%s238 + $0x420] sm:$0xff] %v2885
        %3711 = vst [vmem:[%s238 + $0x428] sm:$0xff] %v2887
        %3712 = vst [vmem:[%s238 + $0x430] sm:$0xff] %v3564
        %3713 = vst [vmem:[%s238 + $0x438] sm:$0xff] %v2889
        %3714 = vst [vmem:[%s238 + $0x440] sm:$0xff] %v2891
        %3715 = vst [vmem:[%s238 + $0x448] sm:$0xff] %v3567
        %3716 = vst [vmem:[%s238 + $0x450] sm:$0xff] %v2895
        %3717 = vst [vmem:[%s238 + $0x458] sm:$0xff] %v2897
        %3718 = vst [vmem:[%s238 + $0x460] sm:$0xff] %v3572
        %3719 = vst [vmem:[%s238 + $0x468] sm:$0xff] %v2899
        %3720 = vst [vmem:[%s238 + $0x470] sm:$0xff] %v2901
        %3721 = vst [vmem:[%s238 + $0x478] sm:$0xff] %v3575
        %s3722 = sand.u32 %s102, 1
        %s3723 = scalar_lea.sflag [#allocation4], %s3722
        %s3724 = sand.u32 %s102, 1
        %s3725 = smul.addr %s3724, 1152
        %s3726 = scalar_lea.vmem [#allocation8], %s3725
        // Predicated region
        $region45: #{tpu_custom_call.1} parent=31 // pred_check
          %p3727 = pneg %p112
        $region46: #{tpu_custom_call.1} parent=31 // pred_check_branch
          %3729 = sbr.rel (%p3727) target = $region48
        $region47: #{tpu_custom_call.1} parent=31 // pred_region
          %s3730 = smul.u32 3, %s21
          %s3732 = ssub.s32 18432, 18432
          %3733 = vsyncadd %s3723, %s3732
          %s3734 = smul.addr %s3730, 128
          %s3735 = scalar_lea.hbm %s3, %s3734
          %s3736 = sshll.u32 %s3726, 4
          %s3737 = int_to_ptr.vmem [resolvable:$true] %s3736
          %3742 = dma.vmem_to_hbm [thread:$0]  %s3737, 18432, %s3735, %s3723, 384, 768, 24
        $region48: #{tpu_custom_call.1} parent=31 // pred_fallthru
          _
      $region32: #{tpu_custom_call.1} parent=5 // pred_fallthru
        _
      %p3743 = scmp.le.s32.totalorder 2, %s16
      // Predicated region
      $region49: #{tpu_custom_call.1} parent=5 // pred_check
        %p3744 = pneg %p3743
      $region50: #{tpu_custom_call.1} parent=5 // pred_check_branch
        %3746 = sbr.rel (%p3744) target = $region52
      $region51: #{tpu_custom_call.1} parent=5 // pred_region
        %s3747 = ssub.s32 %s16, 2
        // Predicated region
        $region53: #{tpu_custom_call.1} parent=51 // pred_check
          %p3748 = pneg %p118
        $region54: #{tpu_custom_call.1} parent=51 // pred_check_branch
          %3750 = sbr.rel (%p3748) target = $region56
        $region55: #{tpu_custom_call.1} parent=51 // pred_region
          %s3751 = sand.u32 %s103, 1
          %s3752 = scalar_lea.sflag [#allocation4], %s3751
          %s3753 = sand.u32 %s103, 1
          %s3754 = smul.addr %s3753, 1152
          %s3755 = scalar_lea.vmem [#allocation8], %s3754
          %3756 = dma.done %s3752, 18432
        $region56: #{tpu_custom_call.1} parent=51 // pred_fallthru
          _
      $region52: #{tpu_custom_call.1} parent=5 // pred_fallthru
        _
    $region6: #{tpu_custom_call.1} parent=1 // loop_footer
      %s20 = sadd.s32 1, %s16
    $region7: #{tpu_custom_call.1} parent=1 // loop_footer_branch
      %15 = sbr.rel target = $region3
    $region8: #{tpu_custom_call.1} parent=1 // loop_exit
      _
    %3757 = vsyncpa [#allocation3], 1
    %s3758 = scalar_lea.sflag [#allocation3], 1
    %3759 = vsyncpa %s3758, 1
    %3760 = vsyncpa [#allocation6], 1
    %s3761 = scalar_lea.sflag [#allocation6], 1
    %3762 = vsyncpa %s3761, 1
    %3763 = vsyncpa [#allocation4], 1
    %s3764 = scalar_lea.sflag [#allocation4], 1
    %3765 = vsyncpa %s3764, 1

</llo_original>
